<compile_context>
chip_gen: v7x
topology: tpu7x:2x2x1
jax: 0.10.0
libtpu: 0.0.40
codegen_flags: <defaults>
</compile_context>

<pallas_src>
import functools

import jax
import jax.numpy as jnp
from jax.experimental import pallas as pl
from jax.experimental.pallas import tpu as pltpu


# ----------------------------------------------------------------------------
# Kernel: the full T-step rollout in one invocation (no grid)
# ----------------------------------------------------------------------------
def actor_rnn_rollout_kernel(
    x_ref,            # (T, B, D)   full input sequence, VMEM resident
    h0_ref,           # (B, H)      initial hidden state
    w1_ref, b1_ref,   # (D, H), (1, H)          fc1
    wi_ref, bi_ref,   # (H, 3H), (1, 3H)        GRU input->gates  [r | z | n]
    wh_ref, bh_ref,   # (H, 3H), (1, 3H)        GRU hidden->gates [r | z | n]
    w2_ref, b2_ref,   # (H, A_pad), (1, A_pad)  fc2 (lane-padded)
    prob_ref,         # (T, B, A_pad) output, VMEM resident
    hT_ref,           # (B, H)        final hidden state
):
    T = x_ref.shape[0]
    H = h0_ref.shape[1]

    # Hoist all weights/biases out of the recurrent loop (one vreg load each).
    w1 = w1_ref[...]
    b1 = b1_ref[...]
    wi = wi_ref[...]
    bi = bi_ref[...]
    wh = wh_ref[...]
    bh = bh_ref[...]
    w2 = w2_ref[...]
    b2 = b2_ref[...]

    def step(t, h):
        x = x_ref[t]                                               # (B, D)

        # ---- fc1 + ReLU ------------------------------------------------
        a1 = jnp.maximum(
            jnp.dot(x, w1, preferred_element_type=jnp.float32) + b1, 0.0)

        # ---- GRU cell: two small MXU passes, no concat / scratch --------
        gi = jnp.dot(a1, wi, preferred_element_type=jnp.float32) + bi  # (B,3H)
        gh = jnp.dot(h, wh, preferred_element_type=jnp.float32) + bh   # (B,3H)

        rz = jax.nn.sigmoid(gi[:, :2 * H] + gh[:, :2 * H])  # one sigmoid: [r|z]
        r = rz[:, :H]
        z = rz[:, H:]
        n = jnp.tanh(gi[:, 2 * H:] + r * gh[:, 2 * H:])
        h_new = (1.0 - z) * n + z * h

        # ---- fc2 + softmax (pad columns -> prob exactly 0) --------------
        logits = jnp.dot(h_new, w2, preferred_element_type=jnp.float32) + b2
        m = jnp.max(logits, axis=-1, keepdims=True)
        e = jnp.exp(logits - m)
        inv = pl.reciprocal(jnp.sum(e, axis=-1, keepdims=True), approx=False)
        prob_ref[t] = e * inv

        return h_new

    hT = jax.lax.fori_loop(0, T, step, h0_ref[...].astype(jnp.float32),
                           unroll=True)
    hT_ref[...] = hT                                  # written exactly once


# ----------------------------------------------------------------------------
# Wrapper: single pallas_call, everything VMEM-resident (<100 KiB total)
# ----------------------------------------------------------------------------
@functools.partial(jax.jit, static_argnames=("action_dim",))
def actor_rnn_forward_seq(x_seq, h0, params, action_dim):
    T, B, D = x_seq.shape
    H = h0.shape[1]
    A_pad = params["w2"].shape[1]

    vmem = pl.BlockSpec(memory_space=pltpu.MemorySpace.VMEM)

    prob_pad, h_T = pl.pallas_call(
        actor_rnn_rollout_kernel,
        out_shape=(
            jax.ShapeDtypeStruct((T, B, A_pad), jnp.float32),
            jax.ShapeDtypeStruct((B, H), jnp.float32),
        ),
        in_specs=[vmem] * 10,
        out_specs=(vmem, vmem),
    )(x_seq, h0,
      params["w1"], params["b1"],
      params["w_ih"], params["b_ih"],
      params["w_hh"], params["b_hh"],
      params["w2"], params["b2"])

    return prob_pad[:, :, :action_dim], h_T


# ----------------------------------------------------------------------------
# Parameter init (mirrors orthogonal_init of the torch module)
# ----------------------------------------------------------------------------
def init_params(key, input_dim, hidden_dim, action_dim):
    ortho = jax.nn.initializers.orthogonal
    k1, k2, k3, k4 = jax.random.split(key, 4)
    H = hidden_dim

    w1_t = ortho(scale=1.0)(k1, (H, input_dim), jnp.float32)      # fc1.weight (H, D)
    wih_t = ortho(scale=1.0)(k2, (3 * H, H), jnp.float32)         # GRU weight_ih (3H, H)
    whh_t = ortho(scale=1.0)(k3, (3 * H, H), jnp.float32)         # GRU weight_hh (3H, H)
    w2_t = ortho(scale=0.01)(k4, (action_dim, H), jnp.float32)    # fc2.weight (A, H)

    # torch biases are zero-init
    zH = jnp.zeros((H,), jnp.float32)
    b_ir = b_iz = b_in = b_hr = b_hz = b_hn = zH
    b1 = zH
    b2 = jnp.zeros((action_dim,), jnp.float32)

    # Per-gate (in, out) weights, PyTorch gate order [r | z | n]
    w_ir, w_iz, w_in = wih_t[0:H].T, wih_t[H:2 * H].T, wih_t[2 * H:3 * H].T
    w_hr, w_hz, w_hn = whh_t[0:H].T, whh_t[H:2 * H].T, whh_t[2 * H:3 * H].T

    w_ih = jnp.concatenate([w_ir, w_iz, w_in], axis=1)            # (H, 3H)
    w_hh = jnp.concatenate([w_hr, w_hz, w_hn], axis=1)            # (H, 3H)
    b_ih = jnp.concatenate([b_ir, b_iz, b_in])[None, :]           # (1, 3H)
    b_hh = jnp.concatenate([b_hr, b_hz, b_hn])[None, :]           # (1, 3H)

    # fc2 padded to a lane-dense width; pad columns get -1e30 bias -> softmax == 0.
    A_pad = ((action_dim + 127) // 128) * 128
    w2_pad = jnp.zeros((H, A_pad), jnp.float32).at[:, :action_dim].set(w2_t.T)
    b2_pad = jnp.full((1, A_pad), -1e30, jnp.float32).at[0, :action_dim].set(b2)

    kernel_params = {
        "w1": w1_t.T, "b1": b1[None, :],
        "w_ih": w_ih, "b_ih": b_ih,
        "w_hh": w_hh, "b_hh": b_hh,
        "w2": w2_pad, "b2": b2_pad,
    }
    ref_params = {
        "w1": w1_t.T, "b1": b1,
        "w_ir": w_ir, "w_iz": w_iz, "w_in": w_in,
        "w_hr": w_hr, "w_hz": w_hz, "w_hn": w_hn,
        "b_ir": b_ir, "b_iz": b_iz, "b_in": b_in,
        "b_hr": b_hr, "b_hz": b_hz, "b_hn": b_hn,
        "w2": w2_t.T, "b2": b2,
    }
    return kernel_params, ref_params


# ----------------------------------------------------------------------------
# Pure-JAX reference (exact PyTorch GRUCell semantics)
# ----------------------------------------------------------------------------
def reference_rollout(x_seq, h0, p):
    def step(h, x):
        a1 = jnp.maximum(x @ p["w1"] + p["b1"], 0.0)
        r = jax.nn.sigmoid(a1 @ p["w_ir"] + p["b_ir"] + h @ p["w_hr"] + p["b_hr"])
        z = jax.nn.sigmoid(a1 @ p["w_iz"] + p["b_iz"] + h @ p["w_hz"] + p["b_hz"])
        n = jnp.tanh(a1 @ p["w_in"] + p["b_in"] + r * (h @ p["w_hn"] + p["b_hn"]))
        h_new = (1.0 - z) * n + z * h
        prob = jax.nn.softmax(h_new @ p["w2"] + p["b2"], axis=-1)
        return h_new, prob

    h_T, probs = jax.lax.scan(step, h0, x_seq)
    return probs, h_T


if __name__ == "__main__":
    # T timesteps, batch padded to 8 (sublane width), input 16, hidden 32, 8 actions.
    T, B, D_IN, H, A = 8, 8, 16, 32, 8

    key = jax.random.PRNGKey(0)
    k_x, k_p = jax.random.split(key, 2)

    x_seq = jax.random.normal(k_x, (T, B, D_IN), jnp.float32)
    h0 = jnp.zeros((B, H), jnp.float32)   # torch starts with rnn_hidden = None -> zeros
    kparams, rparams = init_params(k_p, D_IN, H, A)

    prob, h_T = actor_rnn_forward_seq(x_seq, h0, kparams, action_dim=A)
    jax.block_until_ready((prob, h_T))

    prob_ref, h_ref = reference_rollout(x_seq, h0, rparams)

    assert jnp.allclose(prob, prob_ref, atol=1e-4, rtol=1e-3), "prob mismatch"
    assert jnp.allclose(h_T, h_ref, atol=1e-4, rtol=1e-3), "hidden mismatch"
    assert jnp.allclose(jnp.sum(prob, axis=-1), 1.0, atol=1e-5), "softmax not normalized"

    print("KERNEL_OK")
</pallas_src>

<mosaic_0001>
module attributes {stable_mosaic.version = 11 : i64} {
  func.func @actor_rnn_rollout_kernel(%arg0: memref<8x8x16xf32, #tpu.memory_space<vmem>>, %arg1: memref<8x32xf32, #tpu.memory_space<vmem>>, %arg2: memref<16x32xf32, #tpu.memory_space<vmem>>, %arg3: memref<1x32xf32, #tpu.memory_space<vmem>>, %arg4: memref<32x96xf32, #tpu.memory_space<vmem>>, %arg5: memref<1x96xf32, #tpu.memory_space<vmem>>, %arg6: memref<32x96xf32, #tpu.memory_space<vmem>>, %arg7: memref<1x96xf32, #tpu.memory_space<vmem>>, %arg8: memref<32x128xf32, #tpu.memory_space<vmem>>, %arg9: memref<1x128xf32, #tpu.memory_space<vmem>>, %arg10: memref<8x8x128xf32, #tpu.memory_space<vmem>>, %arg11: memref<8x32xf32, #tpu.memory_space<vmem>>) attributes {dimension_semantics = [], scalar_prefetch = 0 : i64, scratch_operands = 0 : i64, tpu.core_type = #tpu.core_type<tc>} {
    %c0 = arith.constant 0 : index
    %c0_0 = arith.constant 0 : index
    %0 = vector.load %arg2[%c0, %c0_0] : memref<16x32xf32, #tpu.memory_space<vmem>>, vector<16x32xf32>
    %c0_1 = arith.constant 0 : index
    %c0_2 = arith.constant 0 : index
    %1 = vector.load %arg3[%c0_1, %c0_2] : memref<1x32xf32, #tpu.memory_space<vmem>>, vector<1x32xf32>
    %c0_3 = arith.constant 0 : index
    %c0_4 = arith.constant 0 : index
    %2 = vector.load %arg4[%c0_3, %c0_4] : memref<32x96xf32, #tpu.memory_space<vmem>>, vector<32x96xf32>
    %c0_5 = arith.constant 0 : index
    %c0_6 = arith.constant 0 : index
    %3 = vector.load %arg5[%c0_5, %c0_6] : memref<1x96xf32, #tpu.memory_space<vmem>>, vector<1x96xf32>
    %c0_7 = arith.constant 0 : index
    %c0_8 = arith.constant 0 : index
    %4 = vector.load %arg6[%c0_7, %c0_8] : memref<32x96xf32, #tpu.memory_space<vmem>>, vector<32x96xf32>
    %c0_9 = arith.constant 0 : index
    %c0_10 = arith.constant 0 : index
    %5 = vector.load %arg7[%c0_9, %c0_10] : memref<1x96xf32, #tpu.memory_space<vmem>>, vector<1x96xf32>
    %c0_11 = arith.constant 0 : index
    %c0_12 = arith.constant 0 : index
    %6 = vector.load %arg8[%c0_11, %c0_12] : memref<32x128xf32, #tpu.memory_space<vmem>>, vector<32x128xf32>
    %c0_13 = arith.constant 0 : index
    %c0_14 = arith.constant 0 : index
    %7 = vector.load %arg9[%c0_13, %c0_14] : memref<1x128xf32, #tpu.memory_space<vmem>>, vector<1x128xf32>
    %c0_15 = arith.constant 0 : index
    %c0_16 = arith.constant 0 : index
    %8 = vector.load %arg1[%c0_15, %c0_16] : memref<8x32xf32, #tpu.memory_space<vmem>>, vector<8x32xf32>
    %c0_i32 = arith.constant 0 : i32
    %9 = arith.index_cast %c0_i32 : i32 to index
    %c0_17 = arith.constant 0 : index
    %c0_18 = arith.constant 0 : index
    %10 = vector.load %arg0[%9, %c0_17, %c0_18] : memref<8x8x16xf32, #tpu.memory_space<vmem>>, vector<1x8x16xf32>
    %11 = vector.shape_cast %10 : vector<1x8x16xf32> to vector<8x16xf32>
    %cst = arith.constant dense<0.000000e+00> : vector<8x32xf32>
    %12 = tpu.matmul %11, %0, %cst {dimension_numbers = #tpu.dot_dimension_numbers<[1], [0], [0], [1], [0, 0, 1, 1], [], []>} : vector<8x16xf32>, vector<16x32xf32>, vector<8x32xf32> -> vector<8x32xf32>
    %13 = vector.broadcast %1 : vector<1x32xf32> to vector<8x32xf32>
    %14 = arith.addf %12, %13 : vector<8x32xf32>
    %cst_19 = arith.constant 0.000000e+00 : f32
    %15 = vector.broadcast %cst_19 : f32 to vector<8x32xf32>
    %16 = arith.maximumf %14, %15 : vector<8x32xf32>
    %cst_20 = arith.constant dense<0.000000e+00> : vector<8x96xf32>
    %17 = tpu.matmul %16, %2, %cst_20 {dimension_numbers = #tpu.dot_dimension_numbers<[1], [0], [0], [1], [0, 0, 1, 1], [], []>} : vector<8x32xf32>, vector<32x96xf32>, vector<8x96xf32> -> vector<8x96xf32>
    %18 = vector.broadcast %3 : vector<1x96xf32> to vector<8x96xf32>
    %19 = arith.addf %17, %18 : vector<8x96xf32>
    %cst_21 = arith.constant dense<0.000000e+00> : vector<8x96xf32>
    %20 = tpu.matmul %8, %4, %cst_21 {dimension_numbers = #tpu.dot_dimension_numbers<[1], [0], [0], [1], [0, 0, 1, 1], [], []>} : vector<8x32xf32>, vector<32x96xf32>, vector<8x96xf32> -> vector<8x96xf32>
    %21 = vector.broadcast %5 : vector<1x96xf32> to vector<8x96xf32>
    %22 = arith.addf %20, %21 : vector<8x96xf32>
    %23 = vector.extract_strided_slice %19 {offsets = [0, 0], sizes = [8, 64], strides = [1, 1]} : vector<8x96xf32> to vector<8x64xf32>
    %24 = vector.extract_strided_slice %22 {offsets = [0, 0], sizes = [8, 64], strides = [1, 1]} : vector<8x96xf32> to vector<8x64xf32>
    %25 = arith.addf %23, %24 : vector<8x64xf32>
    %26 = arith.negf %25 : vector<8x64xf32>
    %27 = math.exp %26 : vector<8x64xf32>
    %cst_22 = arith.constant 1.000000e+00 : f32
    %28 = vector.broadcast %cst_22 : f32 to vector<8x64xf32>
    %29 = arith.addf %28, %27 : vector<8x64xf32>
    %30 = arith.divf %28, %29 : vector<8x64xf32>
    %31 = vector.extract_strided_slice %30 {offsets = [0, 0], sizes = [8, 32], strides = [1, 1]} : vector<8x64xf32> to vector<8x32xf32>
    %32 = vector.extract_strided_slice %30 {offsets = [0, 32], sizes = [8, 32], strides = [1, 1]} : vector<8x64xf32> to vector<8x32xf32>
    %33 = vector.extract_strided_slice %19 {offsets = [0, 64], sizes = [8, 32], strides = [1, 1]} : vector<8x96xf32> to vector<8x32xf32>
    %34 = vector.extract_strided_slice %22 {offsets = [0, 64], sizes = [8, 32], strides = [1, 1]} : vector<8x96xf32> to vector<8x32xf32>
    %35 = arith.mulf %31, %34 : vector<8x32xf32>
    %36 = arith.addf %33, %35 : vector<8x32xf32>
    %37 = math.tanh %36 : vector<8x32xf32>
    %cst_23 = arith.constant 1.000000e+00 : f32
    %38 = vector.broadcast %cst_23 : f32 to vector<8x32xf32>
    %39 = arith.subf %38, %32 : vector<8x32xf32>
    %40 = arith.mulf %39, %37 : vector<8x32xf32>
    %41 = arith.mulf %32, %8 : vector<8x32xf32>
    %42 = arith.addf %40, %41 : vector<8x32xf32>
    %cst_24 = arith.constant dense<0.000000e+00> : vector<8x128xf32>
    %43 = tpu.matmul %42, %6, %cst_24 {dimension_numbers = #tpu.dot_dimension_numbers<[1], [0], [0], [1], [0, 0, 1, 1], [], []>} : vector<8x32xf32>, vector<32x128xf32>, vector<8x128xf32> -> vector<8x128xf32>
    %44 = vector.broadcast %7 : vector<1x128xf32> to vector<8x128xf32>
    %45 = arith.addf %43, %44 : vector<8x128xf32>
    %cst_25 = arith.constant dense<0xFF800000> : vector<8xf32>
    %46 = vector.multi_reduction <maximumf>, %45, %cst_25 [1] : vector<8x128xf32> to vector<8xf32>
    %47 = vector.shape_cast %46 : vector<8xf32> to vector<8x1xf32>
    %48 = vector.broadcast %47 : vector<8x1xf32> to vector<8x128xf32>
    %49 = arith.subf %45, %48 : vector<8x128xf32>
    %50 = math.exp %49 : vector<8x128xf32>
    %cst_26 = arith.constant dense<0.000000e+00> : vector<8xf32>
    %51 = vector.multi_reduction <add>, %50, %cst_26 [1] : vector<8x128xf32> to vector<8xf32>
    %52 = vector.shape_cast %51 : vector<8xf32> to vector<8x1xf32>
    %53 = tpu.reciprocal %52 : vector<8x1xf32> -> vector<8x1xf32>
    %54 = vector.broadcast %53 : vector<8x1xf32> to vector<8x128xf32>
    %55 = arith.mulf %50, %54 : vector<8x128xf32>
    %56 = arith.index_cast %c0_i32 : i32 to index
    %c0_27 = arith.constant 0 : index
    %c0_28 = arith.constant 0 : index
    %57 = vector.load %arg10[%56, %c0_27, %c0_28] : memref<8x8x128xf32, #tpu.memory_space<vmem>>, vector<1x8x128xf32>
    %58 = vector.shape_cast %57 : vector<1x8x128xf32> to vector<8x128xf32>
    %59 = vector.shape_cast %55 : vector<8x128xf32> to vector<1x8x128xf32>
    tpu.vector_store %arg10[%56, %c0_27, %c0_28], %59 {strides = array<i32>} : memref<8x8x128xf32, #tpu.memory_space<vmem>>, vector<1x8x128xf32>,
    %c1_i32 = arith.constant 1 : i32
    %60 = arith.index_cast %c1_i32 : i32 to index
    %c0_29 = arith.constant 0 : index
    %c0_30 = arith.constant 0 : index
    %61 = vector.load %arg0[%60, %c0_29, %c0_30] : memref<8x8x16xf32, #tpu.memory_space<vmem>>, vector<1x8x16xf32>
    %62 = vector.shape_cast %61 : vector<1x8x16xf32> to vector<8x16xf32>
    %cst_31 = arith.constant dense<0.000000e+00> : vector<8x32xf32>
    %63 = tpu.matmul %62, %0, %cst_31 {dimension_numbers = #tpu.dot_dimension_numbers<[1], [0], [0], [1], [0, 0, 1, 1], [], []>} : vector<8x16xf32>, vector<16x32xf32>, vector<8x32xf32> -> vector<8x32xf32>
    %64 = vector.broadcast %1 : vector<1x32xf32> to vector<8x32xf32>
    %65 = arith.addf %63, %64 : vector<8x32xf32>
    %cst_32 = arith.constant 0.000000e+00 : f32
    %66 = vector.broadcast %cst_32 : f32 to vector<8x32xf32>
    %67 = arith.maximumf %65, %66 : vector<8x32xf32>
    %cst_33 = arith.constant dense<0.000000e+00> : vector<8x96xf32>
    %68 = tpu.matmul %67, %2, %cst_33 {dimension_numbers = #tpu.dot_dimension_numbers<[1], [0], [0], [1], [0, 0, 1, 1], [], []>} : vector<8x32xf32>, vector<32x96xf32>, vector<8x96xf32> -> vector<8x96xf32>
    %69 = vector.broadcast %3 : vector<1x96xf32> to vector<8x96xf32>
    %70 = arith.addf %68, %69 : vector<8x96xf32>
    %cst_34 = arith.constant dense<0.000000e+00> : vector<8x96xf32>
    %71 = tpu.matmul %42, %4, %cst_34 {dimension_numbers = #tpu.dot_dimension_numbers<[1], [0], [0], [1], [0, 0, 1, 1], [], []>} : vector<8x32xf32>, vector<32x96xf32>, vector<8x96xf32> -> vector<8x96xf32>
    %72 = vector.broadcast %5 : vector<1x96xf32> to vector<8x96xf32>
    %73 = arith.addf %71, %72 : vector<8x96xf32>
    %74 = vector.extract_strided_slice %70 {offsets = [0, 0], sizes = [8, 64], strides = [1, 1]} : vector<8x96xf32> to vector<8x64xf32>
    %75 = vector.extract_strided_slice %73 {offsets = [0, 0], sizes = [8, 64], strides = [1, 1]} : vector<8x96xf32> to vector<8x64xf32>
    %76 = arith.addf %74, %75 : vector<8x64xf32>
    %77 = arith.negf %76 : vector<8x64xf32>
    %78 = math.exp %77 : vector<8x64xf32>
    %cst_35 = arith.constant 1.000000e+00 : f32
    %79 = vector.broadcast %cst_35 : f32 to vector<8x64xf32>
    %80 = arith.addf %79, %78 : vector<8x64xf32>
    %81 = arith.divf %79, %80 : vector<8x64xf32>
    %82 = vector.extract_strided_slice %81 {offsets = [0, 0], sizes = [8, 32], strides = [1, 1]} : vector<8x64xf32> to vector<8x32xf32>
    %83 = vector.extract_strided_slice %81 {offsets = [0, 32], sizes = [8, 32], strides = [1, 1]} : vector<8x64xf32> to vector<8x32xf32>
    %84 = vector.extract_strided_slice %70 {offsets = [0, 64], sizes = [8, 32], strides = [1, 1]} : vector<8x96xf32> to vector<8x32xf32>
    %85 = vector.extract_strided_slice %73 {offsets = [0, 64], sizes = [8, 32], strides = [1, 1]} : vector<8x96xf32> to vector<8x32xf32>
    %86 = arith.mulf %82, %85 : vector<8x32xf32>
    %87 = arith.addf %84, %86 : vector<8x32xf32>
    %88 = math.tanh %87 : vector<8x32xf32>
    %cst_36 = arith.constant 1.000000e+00 : f32
    %89 = vector.broadcast %cst_36 : f32 to vector<8x32xf32>
    %90 = arith.subf %89, %83 : vector<8x32xf32>
    %91 = arith.mulf %90, %88 : vector<8x32xf32>
    %92 = arith.mulf %83, %42 : vector<8x32xf32>
    %93 = arith.addf %91, %92 : vector<8x32xf32>
    %cst_37 = arith.constant dense<0.000000e+00> : vector<8x128xf32>
    %94 = tpu.matmul %93, %6, %cst_37 {dimension_numbers = #tpu.dot_dimension_numbers<[1], [0], [0], [1], [0, 0, 1, 1], [], []>} : vector<8x32xf32>, vector<32x128xf32>, vector<8x128xf32> -> vector<8x128xf32>
    %95 = vector.broadcast %7 : vector<1x128xf32> to vector<8x128xf32>
    %96 = arith.addf %94, %95 : vector<8x128xf32>
    %cst_38 = arith.constant dense<0xFF800000> : vector<8xf32>
    %97 = vector.multi_reduction <maximumf>, %96, %cst_38 [1] : vector<8x128xf32> to vector<8xf32>
    %98 = vector.shape_cast %97 : vector<8xf32> to vector<8x1xf32>
    %99 = vector.broadcast %98 : vector<8x1xf32> to vector<8x128xf32>
    %100 = arith.subf %96, %99 : vector<8x128xf32>
    %101 = math.exp %100 : vector<8x128xf32>
    %cst_39 = arith.constant dense<0.000000e+00> : vector<8xf32>
    %102 = vector.multi_reduction <add>, %101, %cst_39 [1] : vector<8x128xf32> to vector<8xf32>
    %103 = vector.shape_cast %102 : vector<8xf32> to vector<8x1xf32>
    %104 = tpu.reciprocal %103 : vector<8x1xf32> -> vector<8x1xf32>
    %105 = vector.broadcast %104 : vector<8x1xf32> to vector<8x128xf32>
    %106 = arith.mulf %101, %105 : vector<8x128xf32>
    %107 = arith.index_cast %c1_i32 : i32 to index
    %c0_40 = arith.constant 0 : index
    %c0_41 = arith.constant 0 : index
    %108 = vector.load %arg10[%107, %c0_40, %c0_41] : memref<8x8x128xf32, #tpu.memory_space<vmem>>, vector<1x8x128xf32>
    %109 = vector.shape_cast %108 : vector<1x8x128xf32> to vector<8x128xf32>
    %110 = vector.shape_cast %106 : vector<8x128xf32> to vector<1x8x128xf32>
    tpu.vector_store %arg10[%107, %c0_40, %c0_41], %110 {strides = array<i32>} : memref<8x8x128xf32, #tpu.memory_space<vmem>>, vector<1x8x128xf32>,
    %c2_i32 = arith.constant 2 : i32
    %111 = arith.index_cast %c2_i32 : i32 to index
    %c0_42 = arith.constant 0 : index
    %c0_43 = arith.constant 0 : index
    %112 = vector.load %arg0[%111, %c0_42, %c0_43] : memref<8x8x16xf32, #tpu.memory_space<vmem>>, vector<1x8x16xf32>
    %113 = vector.shape_cast %112 : vector<1x8x16xf32> to vector<8x16xf32>
    %cst_44 = arith.constant dense<0.000000e+00> : vector<8x32xf32>
    %114 = tpu.matmul %113, %0, %cst_44 {dimension_numbers = #tpu.dot_dimension_numbers<[1], [0], [0], [1], [0, 0, 1, 1], [], []>} : vector<8x16xf32>, vector<16x32xf32>, vector<8x32xf32> -> vector<8x32xf32>
    %115 = vector.broadcast %1 : vector<1x32xf32> to vector<8x32xf32>
    %116 = arith.addf %114, %115 : vector<8x32xf32>
    %cst_45 = arith.constant 0.000000e+00 : f32
    %117 = vector.broadcast %cst_45 : f32 to vector<8x32xf32>
    %118 = arith.maximumf %116, %117 : vector<8x32xf32>
    %cst_46 = arith.constant dense<0.000000e+00> : vector<8x96xf32>
    %119 = tpu.matmul %118, %2, %cst_46 {dimension_numbers = #tpu.dot_dimension_numbers<[1], [0], [0], [1], [0, 0, 1, 1], [], []>} : vector<8x32xf32>, vector<32x96xf32>, vector<8x96xf32> -> vector<8x96xf32>
    %120 = vector.broadcast %3 : vector<1x96xf32> to vector<8x96xf32>
    %121 = arith.addf %119, %120 : vector<8x96xf32>
    %cst_47 = arith.constant dense<0.000000e+00> : vector<8x96xf32>
    %122 = tpu.matmul %93, %4, %cst_47 {dimension_numbers = #tpu.dot_dimension_numbers<[1], [0], [0], [1], [0, 0, 1, 1], [], []>} : vector<8x32xf32>, vector<32x96xf32>, vector<8x96xf32> -> vector<8x96xf32>
    %123 = vector.broadcast %5 : vector<1x96xf32> to vector<8x96xf32>
    %124 = arith.addf %122, %123 : vector<8x96xf32>
    %125 = vector.extract_strided_slice %121 {offsets = [0, 0], sizes = [8, 64], strides = [1, 1]} : vector<8x96xf32> to vector<8x64xf32>
    %126 = vector.extract_strided_slice %124 {offsets = [0, 0], sizes = [8, 64], strides = [1, 1]} : vector<8x96xf32> to vector<8x64xf32>
    %127 = arith.addf %125, %126 : vector<8x64xf32>
    %128 = arith.negf %127 : vector<8x64xf32>
    %129 = math.exp %128 : vector<8x64xf32>
    %cst_48 = arith.constant 1.000000e+00 : f32
    %130 = vector.broadcast %cst_48 : f32 to vector<8x64xf32>
    %131 = arith.addf %130, %129 : vector<8x64xf32>
    %132 = arith.divf %130, %131 : vector<8x64xf32>
    %133 = vector.extract_strided_slice %132 {offsets = [0, 0], sizes = [8, 32], strides = [1, 1]} : vector<8x64xf32> to vector<8x32xf32>
    %134 = vector.extract_strided_slice %132 {offsets = [0, 32], sizes = [8, 32], strides = [1, 1]} : vector<8x64xf32> to vector<8x32xf32>
    %135 = vector.extract_strided_slice %121 {offsets = [0, 64], sizes = [8, 32], strides = [1, 1]} : vector<8x96xf32> to vector<8x32xf32>
    %136 = vector.extract_strided_slice %124 {offsets = [0, 64], sizes = [8, 32], strides = [1, 1]} : vector<8x96xf32> to vector<8x32xf32>
    %137 = arith.mulf %133, %136 : vector<8x32xf32>
    %138 = arith.addf %135, %137 : vector<8x32xf32>
    %139 = math.tanh %138 : vector<8x32xf32>
    %cst_49 = arith.constant 1.000000e+00 : f32
    %140 = vector.broadcast %cst_49 : f32 to vector<8x32xf32>
    %141 = arith.subf %140, %134 : vector<8x32xf32>
    %142 = arith.mulf %141, %139 : vector<8x32xf32>
    %143 = arith.mulf %134, %93 : vector<8x32xf32>
    %144 = arith.addf %142, %143 : vector<8x32xf32>
    %cst_50 = arith.constant dense<0.000000e+00> : vector<8x128xf32>
    %145 = tpu.matmul %144, %6, %cst_50 {dimension_numbers = #tpu.dot_dimension_numbers<[1], [0], [0], [1], [0, 0, 1, 1], [], []>} : vector<8x32xf32>, vector<32x128xf32>, vector<8x128xf32> -> vector<8x128xf32>
    %146 = vector.broadcast %7 : vector<1x128xf32> to vector<8x128xf32>
    %147 = arith.addf %145, %146 : vector<8x128xf32>
    %cst_51 = arith.constant dense<0xFF800000> : vector<8xf32>
    %148 = vector.multi_reduction <maximumf>, %147, %cst_51 [1] : vector<8x128xf32> to vector<8xf32>
    %149 = vector.shape_cast %148 : vector<8xf32> to vector<8x1xf32>
    %150 = vector.broadcast %149 : vector<8x1xf32> to vector<8x128xf32>
    %151 = arith.subf %147, %150 : vector<8x128xf32>
    %152 = math.exp %151 : vector<8x128xf32>
    %cst_52 = arith.constant dense<0.000000e+00> : vector<8xf32>
    %153 = vector.multi_reduction <add>, %152, %cst_52 [1] : vector<8x128xf32> to vector<8xf32>
    %154 = vector.shape_cast %153 : vector<8xf32> to vector<8x1xf32>
    %155 = tpu.reciprocal %154 : vector<8x1xf32> -> vector<8x1xf32>
    %156 = vector.broadcast %155 : vector<8x1xf32> to vector<8x128xf32>
    %157 = arith.mulf %152, %156 : vector<8x128xf32>
    %158 = arith.index_cast %c2_i32 : i32 to index
    %c0_53 = arith.constant 0 : index
    %c0_54 = arith.constant 0 : index
    %159 = vector.load %arg10[%158, %c0_53, %c0_54] : memref<8x8x128xf32, #tpu.memory_space<vmem>>, vector<1x8x128xf32>
    %160 = vector.shape_cast %159 : vector<1x8x128xf32> to vector<8x128xf32>
    %161 = vector.shape_cast %157 : vector<8x128xf32> to vector<1x8x128xf32>
    tpu.vector_store %arg10[%158, %c0_53, %c0_54], %161 {strides = array<i32>} : memref<8x8x128xf32, #tpu.memory_space<vmem>>, vector<1x8x128xf32>,
    %c3_i32 = arith.constant 3 : i32
    %162 = arith.index_cast %c3_i32 : i32 to index
    %c0_55 = arith.constant 0 : index
    %c0_56 = arith.constant 0 : index
    %163 = vector.load %arg0[%162, %c0_55, %c0_56] : memref<8x8x16xf32, #tpu.memory_space<vmem>>, vector<1x8x16xf32>
    %164 = vector.shape_cast %163 : vector<1x8x16xf32> to vector<8x16xf32>
    %cst_57 = arith.constant dense<0.000000e+00> : vector<8x32xf32>
    %165 = tpu.matmul %164, %0, %cst_57 {dimension_numbers = #tpu.dot_dimension_numbers<[1], [0], [0], [1], [0, 0, 1, 1], [], []>} : vector<8x16xf32>, vector<16x32xf32>, vector<8x32xf32> -> vector<8x32xf32>
    %166 = vector.broadcast %1 : vector<1x32xf32> to vector<8x32xf32>
    %167 = arith.addf %165, %166 : vector<8x32xf32>
    %cst_58 = arith.constant 0.000000e+00 : f32
    %168 = vector.broadcast %cst_58 : f32 to vector<8x32xf32>
    %169 = arith.maximumf %167, %168 : vector<8x32xf32>
    %cst_59 = arith.constant dense<0.000000e+00> : vector<8x96xf32>
    %170 = tpu.matmul %169, %2, %cst_59 {dimension_numbers = #tpu.dot_dimension_numbers<[1], [0], [0], [1], [0, 0, 1, 1], [], []>} : vector<8x32xf32>, vector<32x96xf32>, vector<8x96xf32> -> vector<8x96xf32>
    %171 = vector.broadcast %3 : vector<1x96xf32> to vector<8x96xf32>
    %172 = arith.addf %170, %171 : vector<8x96xf32>
    %cst_60 = arith.constant dense<0.000000e+00> : vector<8x96xf32>
    %173 = tpu.matmul %144, %4, %cst_60 {dimension_numbers = #tpu.dot_dimension_numbers<[1], [0], [0], [1], [0, 0, 1, 1], [], []>} : vector<8x32xf32>, vector<32x96xf32>, vector<8x96xf32> -> vector<8x96xf32>
    %174 = vector.broadcast %5 : vector<1x96xf32> to vector<8x96xf32>
    %175 = arith.addf %173, %174 : vector<8x96xf32>
    %176 = vector.extract_strided_slice %172 {offsets = [0, 0], sizes = [8, 64], strides = [1, 1]} : vector<8x96xf32> to vector<8x64xf32>
    %177 = vector.extract_strided_slice %175 {offsets = [0, 0], sizes = [8, 64], strides = [1, 1]} : vector<8x96xf32> to vector<8x64xf32>
    %178 = arith.addf %176, %177 : vector<8x64xf32>
    %179 = arith.negf %178 : vector<8x64xf32>
    %180 = math.exp %179 : vector<8x64xf32>
    %cst_61 = arith.constant 1.000000e+00 : f32
    %181 = vector.broadcast %cst_61 : f32 to vector<8x64xf32>
    %182 = arith.addf %181, %180 : vector<8x64xf32>
    %183 = arith.divf %181, %182 : vector<8x64xf32>
    %184 = vector.extract_strided_slice %183 {offsets = [0, 0], sizes = [8, 32], strides = [1, 1]} : vector<8x64xf32> to vector<8x32xf32>
    %185 = vector.extract_strided_slice %183 {offsets = [0, 32], sizes = [8, 32], strides = [1, 1]} : vector<8x64xf32> to vector<8x32xf32>
    %186 = vector.extract_strided_slice %172 {offsets = [0, 64], sizes = [8, 32], strides = [1, 1]} : vector<8x96xf32> to vector<8x32xf32>
    %187 = vector.extract_strided_slice %175 {offsets = [0, 64], sizes = [8, 32], strides = [1, 1]} : vector<8x96xf32> to vector<8x32xf32>
    %188 = arith.mulf %184, %187 : vector<8x32xf32>
    %189 = arith.addf %186, %188 : vector<8x32xf32>
    %190 = math.tanh %189 : vector<8x32xf32>
    %cst_62 = arith.constant 1.000000e+00 : f32
    %191 = vector.broadcast %cst_62 : f32 to vector<8x32xf32>
    %192 = arith.subf %191, %185 : vector<8x32xf32>
    %193 = arith.mulf %192, %190 : vector<8x32xf32>
    %194 = arith.mulf %185, %144 : vector<8x32xf32>
    %195 = arith.addf %193, %194 : vector<8x32xf32>
    %cst_63 = arith.constant dense<0.000000e+00> : vector<8x128xf32>
    %196 = tpu.matmul %195, %6, %cst_63 {dimension_numbers = #tpu.dot_dimension_numbers<[1], [0], [0], [1], [0, 0, 1, 1], [], []>} : vector<8x32xf32>, vector<32x128xf32>, vector<8x128xf32> -> vector<8x128xf32>
    %197 = vector.broadcast %7 : vector<1x128xf32> to vector<8x128xf32>
    %198 = arith.addf %196, %197 : vector<8x128xf32>
    %cst_64 = arith.constant dense<0xFF800000> : vector<8xf32>
    %199 = vector.multi_reduction <maximumf>, %198, %cst_64 [1] : vector<8x128xf32> to vector<8xf32>
    %200 = vector.shape_cast %199 : vector<8xf32> to vector<8x1xf32>
    %201 = vector.broadcast %200 : vector<8x1xf32> to vector<8x128xf32>
    %202 = arith.subf %198, %201 : vector<8x128xf32>
    %203 = math.exp %202 : vector<8x128xf32>
    %cst_65 = arith.constant dense<0.000000e+00> : vector<8xf32>
    %204 = vector.multi_reduction <add>, %203, %cst_65 [1] : vector<8x128xf32> to vector<8xf32>
    %205 = vector.shape_cast %204 : vector<8xf32> to vector<8x1xf32>
    %206 = tpu.reciprocal %205 : vector<8x1xf32> -> vector<8x1xf32>
    %207 = vector.broadcast %206 : vector<8x1xf32> to vector<8x128xf32>
    %208 = arith.mulf %203, %207 : vector<8x128xf32>
    %209 = arith.index_cast %c3_i32 : i32 to index
    %c0_66 = arith.constant 0 : index
    %c0_67 = arith.constant 0 : index
    %210 = vector.load %arg10[%209, %c0_66, %c0_67] : memref<8x8x128xf32, #tpu.memory_space<vmem>>, vector<1x8x128xf32>
    %211 = vector.shape_cast %210 : vector<1x8x128xf32> to vector<8x128xf32>
    %212 = vector.shape_cast %208 : vector<8x128xf32> to vector<1x8x128xf32>
    tpu.vector_store %arg10[%209, %c0_66, %c0_67], %212 {strides = array<i32>} : memref<8x8x128xf32, #tpu.memory_space<vmem>>, vector<1x8x128xf32>,
    %c4_i32 = arith.constant 4 : i32
    %213 = arith.index_cast %c4_i32 : i32 to index
    %c0_68 = arith.constant 0 : index
    %c0_69 = arith.constant 0 : index
    %214 = vector.load %arg0[%213, %c0_68, %c0_69] : memref<8x8x16xf32, #tpu.memory_space<vmem>>, vector<1x8x16xf32>
    %215 = vector.shape_cast %214 : vector<1x8x16xf32> to vector<8x16xf32>
    %cst_70 = arith.constant dense<0.000000e+00> : vector<8x32xf32>
    %216 = tpu.matmul %215, %0, %cst_70 {dimension_numbers = #tpu.dot_dimension_numbers<[1], [0], [0], [1], [0, 0, 1, 1], [], []>} : vector<8x16xf32>, vector<16x32xf32>, vector<8x32xf32> -> vector<8x32xf32>
    %217 = vector.broadcast %1 : vector<1x32xf32> to vector<8x32xf32>
    %218 = arith.addf %216, %217 : vector<8x32xf32>
    %cst_71 = arith.constant 0.000000e+00 : f32
    %219 = vector.broadcast %cst_71 : f32 to vector<8x32xf32>
    %220 = arith.maximumf %218, %219 : vector<8x32xf32>
    %cst_72 = arith.constant dense<0.000000e+00> : vector<8x96xf32>
    %221 = tpu.matmul %220, %2, %cst_72 {dimension_numbers = #tpu.dot_dimension_numbers<[1], [0], [0], [1], [0, 0, 1, 1], [], []>} : vector<8x32xf32>, vector<32x96xf32>, vector<8x96xf32> -> vector<8x96xf32>
    %222 = vector.broadcast %3 : vector<1x96xf32> to vector<8x96xf32>
    %223 = arith.addf %221, %222 : vector<8x96xf32>
    %cst_73 = arith.constant dense<0.000000e+00> : vector<8x96xf32>
    %224 = tpu.matmul %195, %4, %cst_73 {dimension_numbers = #tpu.dot_dimension_numbers<[1], [0], [0], [1], [0, 0, 1, 1], [], []>} : vector<8x32xf32>, vector<32x96xf32>, vector<8x96xf32> -> vector<8x96xf32>
    %225 = vector.broadcast %5 : vector<1x96xf32> to vector<8x96xf32>
    %226 = arith.addf %224, %225 : vector<8x96xf32>
    %227 = vector.extract_strided_slice %223 {offsets = [0, 0], sizes = [8, 64], strides = [1, 1]} : vector<8x96xf32> to vector<8x64xf32>
    %228 = vector.extract_strided_slice %226 {offsets = [0, 0], sizes = [8, 64], strides = [1, 1]} : vector<8x96xf32> to vector<8x64xf32>
    %229 = arith.addf %227, %228 : vector<8x64xf32>
    %230 = arith.negf %229 : vector<8x64xf32>
    %231 = math.exp %230 : vector<8x64xf32>
    %cst_74 = arith.constant 1.000000e+00 : f32
    %232 = vector.broadcast %cst_74 : f32 to vector<8x64xf32>
    %233 = arith.addf %232, %231 : vector<8x64xf32>
    %234 = arith.divf %232, %233 : vector<8x64xf32>
    %235 = vector.extract_strided_slice %234 {offsets = [0, 0], sizes = [8, 32], strides = [1, 1]} : vector<8x64xf32> to vector<8x32xf32>
    %236 = vector.extract_strided_slice %234 {offsets = [0, 32], sizes = [8, 32], strides = [1, 1]} : vector<8x64xf32> to vector<8x32xf32>
    %237 = vector.extract_strided_slice %223 {offsets = [0, 64], sizes = [8, 32], strides = [1, 1]} : vector<8x96xf32> to vector<8x32xf32>
    %238 = vector.extract_strided_slice %226 {offsets = [0, 64], sizes = [8, 32], strides = [1, 1]} : vector<8x96xf32> to vector<8x32xf32>
    %239 = arith.mulf %235, %238 : vector<8x32xf32>
    %240 = arith.addf %237, %239 : vector<8x32xf32>
    %241 = math.tanh %240 : vector<8x32xf32>
    %cst_75 = arith.constant 1.000000e+00 : f32
    %242 = vector.broadcast %cst_75 : f32 to vector<8x32xf32>
    %243 = arith.subf %242, %236 : vector<8x32xf32>
    %244 = arith.mulf %243, %241 : vector<8x32xf32>
    %245 = arith.mulf %236, %195 : vector<8x32xf32>
    %246 = arith.addf %244, %245 : vector<8x32xf32>
    %cst_76 = arith.constant dense<0.000000e+00> : vector<8x128xf32>
    %247 = tpu.matmul %246, %6, %cst_76 {dimension_numbers = #tpu.dot_dimension_numbers<[1], [0], [0], [1], [0, 0, 1, 1], [], []>} : vector<8x32xf32>, vector<32x128xf32>, vector<8x128xf32> -> vector<8x128xf32>
    %248 = vector.broadcast %7 : vector<1x128xf32> to vector<8x128xf32>
    %249 = arith.addf %247, %248 : vector<8x128xf32>
    %cst_77 = arith.constant dense<0xFF800000> : vector<8xf32>
    %250 = vector.multi_reduction <maximumf>, %249, %cst_77 [1] : vector<8x128xf32> to vector<8xf32>
    %251 = vector.shape_cast %250 : vector<8xf32> to vector<8x1xf32>
    %252 = vector.broadcast %251 : vector<8x1xf32> to vector<8x128xf32>
    %253 = arith.subf %249, %252 : vector<8x128xf32>
    %254 = math.exp %253 : vector<8x128xf32>
    %cst_78 = arith.constant dense<0.000000e+00> : vector<8xf32>
    %255 = vector.multi_reduction <add>, %254, %cst_78 [1] : vector<8x128xf32> to vector<8xf32>
    %256 = vector.shape_cast %255 : vector<8xf32> to vector<8x1xf32>
    %257 = tpu.reciprocal %256 : vector<8x1xf32> -> vector<8x1xf32>
    %258 = vector.broadcast %257 : vector<8x1xf32> to vector<8x128xf32>
    %259 = arith.mulf %254, %258 : vector<8x128xf32>
    %260 = arith.index_cast %c4_i32 : i32 to index
    %c0_79 = arith.constant 0 : index
    %c0_80 = arith.constant 0 : index
    %261 = vector.load %arg10[%260, %c0_79, %c0_80] : memref<8x8x128xf32, #tpu.memory_space<vmem>>, vector<1x8x128xf32>
    %262 = vector.shape_cast %261 : vector<1x8x128xf32> to vector<8x128xf32>
    %263 = vector.shape_cast %259 : vector<8x128xf32> to vector<1x8x128xf32>
    tpu.vector_store %arg10[%260, %c0_79, %c0_80], %263 {strides = array<i32>} : memref<8x8x128xf32, #tpu.memory_space<vmem>>, vector<1x8x128xf32>,
    %c5_i32 = arith.constant 5 : i32
    %264 = arith.index_cast %c5_i32 : i32 to index
    %c0_81 = arith.constant 0 : index
    %c0_82 = arith.constant 0 : index
    %265 = vector.load %arg0[%264, %c0_81, %c0_82] : memref<8x8x16xf32, #tpu.memory_space<vmem>>, vector<1x8x16xf32>
    %266 = vector.shape_cast %265 : vector<1x8x16xf32> to vector<8x16xf32>
    %cst_83 = arith.constant dense<0.000000e+00> : vector<8x32xf32>
    %267 = tpu.matmul %266, %0, %cst_83 {dimension_numbers = #tpu.dot_dimension_numbers<[1], [0], [0], [1], [0, 0, 1, 1], [], []>} : vector<8x16xf32>, vector<16x32xf32>, vector<8x32xf32> -> vector<8x32xf32>
    %268 = vector.broadcast %1 : vector<1x32xf32> to vector<8x32xf32>
    %269 = arith.addf %267, %268 : vector<8x32xf32>
    %cst_84 = arith.constant 0.000000e+00 : f32
    %270 = vector.broadcast %cst_84 : f32 to vector<8x32xf32>
    %271 = arith.maximumf %269, %270 : vector<8x32xf32>
    %cst_85 = arith.constant dense<0.000000e+00> : vector<8x96xf32>
    %272 = tpu.matmul %271, %2, %cst_85 {dimension_numbers = #tpu.dot_dimension_numbers<[1], [0], [0], [1], [0, 0, 1, 1], [], []>} : vector<8x32xf32>, vector<32x96xf32>, vector<8x96xf32> -> vector<8x96xf32>
    %273 = vector.broadcast %3 : vector<1x96xf32> to vector<8x96xf32>
    %274 = arith.addf %272, %273 : vector<8x96xf32>
    %cst_86 = arith.constant dense<0.000000e+00> : vector<8x96xf32>
    %275 = tpu.matmul %246, %4, %cst_86 {dimension_numbers = #tpu.dot_dimension_numbers<[1], [0], [0], [1], [0, 0, 1, 1], [], []>} : vector<8x32xf32>, vector<32x96xf32>, vector<8x96xf32> -> vector<8x96xf32>
    %276 = vector.broadcast %5 : vector<1x96xf32> to vector<8x96xf32>
    %277 = arith.addf %275, %276 : vector<8x96xf32>
    %278 = vector.extract_strided_slice %274 {offsets = [0, 0], sizes = [8, 64], strides = [1, 1]} : vector<8x96xf32> to vector<8x64xf32>
    %279 = vector.extract_strided_slice %277 {offsets = [0, 0], sizes = [8, 64], strides = [1, 1]} : vector<8x96xf32> to vector<8x64xf32>
    %280 = arith.addf %278, %279 : vector<8x64xf32>
    %281 = arith.negf %280 : vector<8x64xf32>
    %282 = math.exp %281 : vector<8x64xf32>
    %cst_87 = arith.constant 1.000000e+00 : f32
    %283 = vector.broadcast %cst_87 : f32 to vector<8x64xf32>
    %284 = arith.addf %283, %282 : vector<8x64xf32>
    %285 = arith.divf %283, %284 : vector<8x64xf32>
    %286 = vector.extract_strided_slice %285 {offsets = [0, 0], sizes = [8, 32], strides = [1, 1]} : vector<8x64xf32> to vector<8x32xf32>
    %287 = vector.extract_strided_slice %285 {offsets = [0, 32], sizes = [8, 32], strides = [1, 1]} : vector<8x64xf32> to vector<8x32xf32>
    %288 = vector.extract_strided_slice %274 {offsets = [0, 64], sizes = [8, 32], strides = [1, 1]} : vector<8x96xf32> to vector<8x32xf32>
    %289 = vector.extract_strided_slice %277 {offsets = [0, 64], sizes = [8, 32], strides = [1, 1]} : vector<8x96xf32> to vector<8x32xf32>
    %290 = arith.mulf %286, %289 : vector<8x32xf32>
    %291 = arith.addf %288, %290 : vector<8x32xf32>
    %292 = math.tanh %291 : vector<8x32xf32>
    %cst_88 = arith.constant 1.000000e+00 : f32
    %293 = vector.broadcast %cst_88 : f32 to vector<8x32xf32>
    %294 = arith.subf %293, %287 : vector<8x32xf32>
    %295 = arith.mulf %294, %292 : vector<8x32xf32>
    %296 = arith.mulf %287, %246 : vector<8x32xf32>
    %297 = arith.addf %295, %296 : vector<8x32xf32>
    %cst_89 = arith.constant dense<0.000000e+00> : vector<8x128xf32>
    %298 = tpu.matmul %297, %6, %cst_89 {dimension_numbers = #tpu.dot_dimension_numbers<[1], [0], [0], [1], [0, 0, 1, 1], [], []>} : vector<8x32xf32>, vector<32x128xf32>, vector<8x128xf32> -> vector<8x128xf32>
    %299 = vector.broadcast %7 : vector<1x128xf32> to vector<8x128xf32>
    %300 = arith.addf %298, %299 : vector<8x128xf32>
    %cst_90 = arith.constant dense<0xFF800000> : vector<8xf32>
    %301 = vector.multi_reduction <maximumf>, %300, %cst_90 [1] : vector<8x128xf32> to vector<8xf32>
    %302 = vector.shape_cast %301 : vector<8xf32> to vector<8x1xf32>
    %303 = vector.broadcast %302 : vector<8x1xf32> to vector<8x128xf32>
    %304 = arith.subf %300, %303 : vector<8x128xf32>
    %305 = math.exp %304 : vector<8x128xf32>
    %cst_91 = arith.constant dense<0.000000e+00> : vector<8xf32>
    %306 = vector.multi_reduction <add>, %305, %cst_91 [1] : vector<8x128xf32> to vector<8xf32>
    %307 = vector.shape_cast %306 : vector<8xf32> to vector<8x1xf32>
    %308 = tpu.reciprocal %307 : vector<8x1xf32> -> vector<8x1xf32>
    %309 = vector.broadcast %308 : vector<8x1xf32> to vector<8x128xf32>
    %310 = arith.mulf %305, %309 : vector<8x128xf32>
    %311 = arith.index_cast %c5_i32 : i32 to index
    %c0_92 = arith.constant 0 : index
    %c0_93 = arith.constant 0 : index
    %312 = vector.load %arg10[%311, %c0_92, %c0_93] : memref<8x8x128xf32, #tpu.memory_space<vmem>>, vector<1x8x128xf32>
    %313 = vector.shape_cast %312 : vector<1x8x128xf32> to vector<8x128xf32>
    %314 = vector.shape_cast %310 : vector<8x128xf32> to vector<1x8x128xf32>
    tpu.vector_store %arg10[%311, %c0_92, %c0_93], %314 {strides = array<i32>} : memref<8x8x128xf32, #tpu.memory_space<vmem>>, vector<1x8x128xf32>,
    %c6_i32 = arith.constant 6 : i32
    %315 = arith.index_cast %c6_i32 : i32 to index
    %c0_94 = arith.constant 0 : index
    %c0_95 = arith.constant 0 : index
    %316 = vector.load %arg0[%315, %c0_94, %c0_95] : memref<8x8x16xf32, #tpu.memory_space<vmem>>, vector<1x8x16xf32>
    %317 = vector.shape_cast %316 : vector<1x8x16xf32> to vector<8x16xf32>
    %cst_96 = arith.constant dense<0.000000e+00> : vector<8x32xf32>
    %318 = tpu.matmul %317, %0, %cst_96 {dimension_numbers = #tpu.dot_dimension_numbers<[1], [0], [0], [1], [0, 0, 1, 1], [], []>} : vector<8x16xf32>, vector<16x32xf32>, vector<8x32xf32> -> vector<8x32xf32>
    %319 = vector.broadcast %1 : vector<1x32xf32> to vector<8x32xf32>
    %320 = arith.addf %318, %319 : vector<8x32xf32>
    %cst_97 = arith.constant 0.000000e+00 : f32
    %321 = vector.broadcast %cst_97 : f32 to vector<8x32xf32>
    %322 = arith.maximumf %320, %321 : vector<8x32xf32>
    %cst_98 = arith.constant dense<0.000000e+00> : vector<8x96xf32>
    %323 = tpu.matmul %322, %2, %cst_98 {dimension_numbers = #tpu.dot_dimension_numbers<[1], [0], [0], [1], [0, 0, 1, 1], [], []>} : vector<8x32xf32>, vector<32x96xf32>, vector<8x96xf32> -> vector<8x96xf32>
    %324 = vector.broadcast %3 : vector<1x96xf32> to vector<8x96xf32>
    %325 = arith.addf %323, %324 : vector<8x96xf32>
    %cst_99 = arith.constant dense<0.000000e+00> : vector<8x96xf32>
    %326 = tpu.matmul %297, %4, %cst_99 {dimension_numbers = #tpu.dot_dimension_numbers<[1], [0], [0], [1], [0, 0, 1, 1], [], []>} : vector<8x32xf32>, vector<32x96xf32>, vector<8x96xf32> -> vector<8x96xf32>
    %327 = vector.broadcast %5 : vector<1x96xf32> to vector<8x96xf32>
    %328 = arith.addf %326, %327 : vector<8x96xf32>
    %329 = vector.extract_strided_slice %325 {offsets = [0, 0], sizes = [8, 64], strides = [1, 1]} : vector<8x96xf32> to vector<8x64xf32>
    %330 = vector.extract_strided_slice %328 {offsets = [0, 0], sizes = [8, 64], strides = [1, 1]} : vector<8x96xf32> to vector<8x64xf32>
    %331 = arith.addf %329, %330 : vector<8x64xf32>
    %332 = arith.negf %331 : vector<8x64xf32>
    %333 = math.exp %332 : vector<8x64xf32>
    %cst_100 = arith.constant 1.000000e+00 : f32
    %334 = vector.broadcast %cst_100 : f32 to vector<8x64xf32>
    %335 = arith.addf %334, %333 : vector<8x64xf32>
    %336 = arith.divf %334, %335 : vector<8x64xf32>
    %337 = vector.extract_strided_slice %336 {offsets = [0, 0], sizes = [8, 32], strides = [1, 1]} : vector<8x64xf32> to vector<8x32xf32>
    %338 = vector.extract_strided_slice %336 {offsets = [0, 32], sizes = [8, 32], strides = [1, 1]} : vector<8x64xf32> to vector<8x32xf32>
    %339 = vector.extract_strided_slice %325 {offsets = [0, 64], sizes = [8, 32], strides = [1, 1]} : vector<8x96xf32> to vector<8x32xf32>
    %340 = vector.extract_strided_slice %328 {offsets = [0, 64], sizes = [8, 32], strides = [1, 1]} : vector<8x96xf32> to vector<8x32xf32>
    %341 = arith.mulf %337, %340 : vector<8x32xf32>
    %342 = arith.addf %339, %341 : vector<8x32xf32>
    %343 = math.tanh %342 : vector<8x32xf32>
    %cst_101 = arith.constant 1.000000e+00 : f32
    %344 = vector.broadcast %cst_101 : f32 to vector<8x32xf32>
    %345 = arith.subf %344, %338 : vector<8x32xf32>
    %346 = arith.mulf %345, %343 : vector<8x32xf32>
    %347 = arith.mulf %338, %297 : vector<8x32xf32>
    %348 = arith.addf %346, %347 : vector<8x32xf32>
    %cst_102 = arith.constant dense<0.000000e+00> : vector<8x128xf32>
    %349 = tpu.matmul %348, %6, %cst_102 {dimension_numbers = #tpu.dot_dimension_numbers<[1], [0], [0], [1], [0, 0, 1, 1], [], []>} : vector<8x32xf32>, vector<32x128xf32>, vector<8x128xf32> -> vector<8x128xf32>
    %350 = vector.broadcast %7 : vector<1x128xf32> to vector<8x128xf32>
    %351 = arith.addf %349, %350 : vector<8x128xf32>
    %cst_103 = arith.constant dense<0xFF800000> : vector<8xf32>
    %352 = vector.multi_reduction <maximumf>, %351, %cst_103 [1] : vector<8x128xf32> to vector<8xf32>
    %353 = vector.shape_cast %352 : vector<8xf32> to vector<8x1xf32>
    %354 = vector.broadcast %353 : vector<8x1xf32> to vector<8x128xf32>
    %355 = arith.subf %351, %354 : vector<8x128xf32>
    %356 = math.exp %355 : vector<8x128xf32>
    %cst_104 = arith.constant dense<0.000000e+00> : vector<8xf32>
    %357 = vector.multi_reduction <add>, %356, %cst_104 [1] : vector<8x128xf32> to vector<8xf32>
    %358 = vector.shape_cast %357 : vector<8xf32> to vector<8x1xf32>
    %359 = tpu.reciprocal %358 : vector<8x1xf32> -> vector<8x1xf32>
    %360 = vector.broadcast %359 : vector<8x1xf32> to vector<8x128xf32>
    %361 = arith.mulf %356, %360 : vector<8x128xf32>
    %362 = arith.index_cast %c6_i32 : i32 to index
    %c0_105 = arith.constant 0 : index
    %c0_106 = arith.constant 0 : index
    %363 = vector.load %arg10[%362, %c0_105, %c0_106] : memref<8x8x128xf32, #tpu.memory_space<vmem>>, vector<1x8x128xf32>
    %364 = vector.shape_cast %363 : vector<1x8x128xf32> to vector<8x128xf32>
    %365 = vector.shape_cast %361 : vector<8x128xf32> to vector<1x8x128xf32>
    tpu.vector_store %arg10[%362, %c0_105, %c0_106], %365 {strides = array<i32>} : memref<8x8x128xf32, #tpu.memory_space<vmem>>, vector<1x8x128xf32>,
    %c7_i32 = arith.constant 7 : i32
    %366 = arith.index_cast %c7_i32 : i32 to index
    %c0_107 = arith.constant 0 : index
    %c0_108 = arith.constant 0 : index
    %367 = vector.load %arg0[%366, %c0_107, %c0_108] : memref<8x8x16xf32, #tpu.memory_space<vmem>>, vector<1x8x16xf32>
    %368 = vector.shape_cast %367 : vector<1x8x16xf32> to vector<8x16xf32>
    %cst_109 = arith.constant dense<0.000000e+00> : vector<8x32xf32>
    %369 = tpu.matmul %368, %0, %cst_109 {dimension_numbers = #tpu.dot_dimension_numbers<[1], [0], [0], [1], [0, 0, 1, 1], [], []>} : vector<8x16xf32>, vector<16x32xf32>, vector<8x32xf32> -> vector<8x32xf32>
    %370 = vector.broadcast %1 : vector<1x32xf32> to vector<8x32xf32>
    %371 = arith.addf %369, %370 : vector<8x32xf32>
    %cst_110 = arith.constant 0.000000e+00 : f32
    %372 = vector.broadcast %cst_110 : f32 to vector<8x32xf32>
    %373 = arith.maximumf %371, %372 : vector<8x32xf32>
    %cst_111 = arith.constant dense<0.000000e+00> : vector<8x96xf32>
    %374 = tpu.matmul %373, %2, %cst_111 {dimension_numbers = #tpu.dot_dimension_numbers<[1], [0], [0], [1], [0, 0, 1, 1], [], []>} : vector<8x32xf32>, vector<32x96xf32>, vector<8x96xf32> -> vector<8x96xf32>
    %375 = vector.broadcast %3 : vector<1x96xf32> to vector<8x96xf32>
    %376 = arith.addf %374, %375 : vector<8x96xf32>
    %cst_112 = arith.constant dense<0.000000e+00> : vector<8x96xf32>
    %377 = tpu.matmul %348, %4, %cst_112 {dimension_numbers = #tpu.dot_dimension_numbers<[1], [0], [0], [1], [0, 0, 1, 1], [], []>} : vector<8x32xf32>, vector<32x96xf32>, vector<8x96xf32> -> vector<8x96xf32>
    %378 = vector.broadcast %5 : vector<1x96xf32> to vector<8x96xf32>
    %379 = arith.addf %377, %378 : vector<8x96xf32>
    %380 = vector.extract_strided_slice %376 {offsets = [0, 0], sizes = [8, 64], strides = [1, 1]} : vector<8x96xf32> to vector<8x64xf32>
    %381 = vector.extract_strided_slice %379 {offsets = [0, 0], sizes = [8, 64], strides = [1, 1]} : vector<8x96xf32> to vector<8x64xf32>
    %382 = arith.addf %380, %381 : vector<8x64xf32>
    %383 = arith.negf %382 : vector<8x64xf32>
    %384 = math.exp %383 : vector<8x64xf32>
    %cst_113 = arith.constant 1.000000e+00 : f32
    %385 = vector.broadcast %cst_113 : f32 to vector<8x64xf32>
    %386 = arith.addf %385, %384 : vector<8x64xf32>
    %387 = arith.divf %385, %386 : vector<8x64xf32>
    %388 = vector.extract_strided_slice %387 {offsets = [0, 0], sizes = [8, 32], strides = [1, 1]} : vector<8x64xf32> to vector<8x32xf32>
    %389 = vector.extract_strided_slice %387 {offsets = [0, 32], sizes = [8, 32], strides = [1, 1]} : vector<8x64xf32> to vector<8x32xf32>
    %390 = vector.extract_strided_slice %376 {offsets = [0, 64], sizes = [8, 32], strides = [1, 1]} : vector<8x96xf32> to vector<8x32xf32>
    %391 = vector.extract_strided_slice %379 {offsets = [0, 64], sizes = [8, 32], strides = [1, 1]} : vector<8x96xf32> to vector<8x32xf32>
    %392 = arith.mulf %388, %391 : vector<8x32xf32>
    %393 = arith.addf %390, %392 : vector<8x32xf32>
    %394 = math.tanh %393 : vector<8x32xf32>
    %cst_114 = arith.constant 1.000000e+00 : f32
    %395 = vector.broadcast %cst_114 : f32 to vector<8x32xf32>
    %396 = arith.subf %395, %389 : vector<8x32xf32>
    %397 = arith.mulf %396, %394 : vector<8x32xf32>
    %398 = arith.mulf %389, %348 : vector<8x32xf32>
    %399 = arith.addf %397, %398 : vector<8x32xf32>
    %cst_115 = arith.constant dense<0.000000e+00> : vector<8x128xf32>
    %400 = tpu.matmul %399, %6, %cst_115 {dimension_numbers = #tpu.dot_dimension_numbers<[1], [0], [0], [1], [0, 0, 1, 1], [], []>} : vector<8x32xf32>, vector<32x128xf32>, vector<8x128xf32> -> vector<8x128xf32>
    %401 = vector.broadcast %7 : vector<1x128xf32> to vector<8x128xf32>
    %402 = arith.addf %400, %401 : vector<8x128xf32>
    %cst_116 = arith.constant dense<0xFF800000> : vector<8xf32>
    %403 = vector.multi_reduction <maximumf>, %402, %cst_116 [1] : vector<8x128xf32> to vector<8xf32>
    %404 = vector.shape_cast %403 : vector<8xf32> to vector<8x1xf32>
    %405 = vector.broadcast %404 : vector<8x1xf32> to vector<8x128xf32>
    %406 = arith.subf %402, %405 : vector<8x128xf32>
    %407 = math.exp %406 : vector<8x128xf32>
    %cst_117 = arith.constant dense<0.000000e+00> : vector<8xf32>
    %408 = vector.multi_reduction <add>, %407, %cst_117 [1] : vector<8x128xf32> to vector<8xf32>
    %409 = vector.shape_cast %408 : vector<8xf32> to vector<8x1xf32>
    %410 = tpu.reciprocal %409 : vector<8x1xf32> -> vector<8x1xf32>
    %411 = vector.broadcast %410 : vector<8x1xf32> to vector<8x128xf32>
    %412 = arith.mulf %407, %411 : vector<8x128xf32>
    %413 = arith.index_cast %c7_i32 : i32 to index
    %c0_118 = arith.constant 0 : index
    %c0_119 = arith.constant 0 : index
    %414 = vector.load %arg10[%413, %c0_118, %c0_119] : memref<8x8x128xf32, #tpu.memory_space<vmem>>, vector<1x8x128xf32>
    %415 = vector.shape_cast %414 : vector<1x8x128xf32> to vector<8x128xf32>
    %416 = vector.shape_cast %412 : vector<8x128xf32> to vector<1x8x128xf32>
    tpu.vector_store %arg10[%413, %c0_118, %c0_119], %416 {strides = array<i32>} : memref<8x8x128xf32, #tpu.memory_space<vmem>>, vector<1x8x128xf32>,
    %c8_i32 = arith.constant 8 : i32
    %c0_120 = arith.constant 0 : index
    %c0_121 = arith.constant 0 : index
    %417 = vector.load %arg11[%c0_120, %c0_121] : memref<8x32xf32, #tpu.memory_space<vmem>>, vector<8x32xf32>
    tpu.vector_store %arg11[%c0_120, %c0_121], %399 {strides = array<i32>} : memref<8x32xf32, #tpu.memory_space<vmem>>, vector<8x32xf32>,
    return
  }
}

</mosaic_0001>

<llo_original>
// kernel: actor_rnn_forward_seq.1
$region0: #{actor_rnn_forward_seq.1}
  #allocation0 [shape = 'u32[]', space=smem, size = 0x4, offset = 0x4, fixed_abs, tag = 'smem constant byte address 0x4 - core index']
  #allocation1 [shape = 'u32[144,128]{1,0:T(1,128)}', space=vmem, size = 0x12000, scoped, tag = 'internal scratch']
  %s0 = inlined_call_operand.hbm [shape: f32[8,8,16], index: 0, kind: input, shape index: {}]
  %s1 = inlined_call_operand.hbm [shape: f32[8,32], index: 1, kind: input, shape index: {}]
  %s2 = inlined_call_operand.hbm [shape: f32[16,32], index: 2, kind: input, shape index: {}]
  %s3 = inlined_call_operand.vmem [shape: f32[1,32], index: 3, kind: input, shape index: {}]
  %s4 = inlined_call_operand.vmem [shape: f32[32,96], index: 4, kind: input, shape index: {}]
  %s5 = inlined_call_operand.vmem [shape: f32[1,96], index: 5, kind: input, shape index: {}]
  %s6 = inlined_call_operand.hbm [shape: f32[32,96], index: 6, kind: input, shape index: {}]
  %s7 = inlined_call_operand.hbm [shape: f32[1,96], index: 7, kind: input, shape index: {}]
  %s8 = inlined_call_operand.hbm [shape: f32[32,128], index: 8, kind: input, shape index: {}]
  %s9 = inlined_call_operand.hbm [shape: f32[1,128], index: 9, kind: input, shape index: {}]
  %s10 = inlined_call_operand.hbm [shape: f32[8,8,128], index: 10, kind: output, shape index: {0}]
  %s11 = inlined_call_operand.hbm [shape: f32[8,32], index: 11, kind: output, shape index: {1}]
  %12 = xla_tuple %s10, %s11
  %s13 = sld [smem:[#allocation0]]
  $region86: #{actor_rnn_forward_seq.1} parent=0
    _
  %s15 = ssub.s32 1, %s13
  %s16 = scalar_select 0, %s15, %s13
  $region1: #{actor_rnn_forward_seq.1} parent=0
    #allocation2 [shape = 'u8[32768]{0}', space=vmem, size = 0x8000, scoped, tag = 'input window, operand 0, single buffered']
    #allocation3 [shape = 's32[1]{0}', space=sflag, size = 0x4, scoped, tag = 'scoped memory for actor_rnn_forward_seq.1']
    #allocation4 [shape = 's32[1]{0}', space=sflag, size = 0x4, scoped, tag = 'scoped memory for actor_rnn_forward_seq.1']
    #allocation5 [shape = 'u8[4096]{0}', space=vmem, size = 0x1000, scoped, tag = 'input window, operand 1, single buffered']
    #allocation6 [shape = 's32[1]{0}', space=sflag, size = 0x4, scoped, tag = 'scoped memory for actor_rnn_forward_seq.1']
    #allocation7 [shape = 'u8[8192]{0}', space=vmem, size = 0x2000, scoped, tag = 'input window, operand 2, single buffered']
    #allocation8 [shape = 'u8[16384]{0}', space=vmem, size = 0x4000, scoped, tag = 'input window, operand 6, single buffered']
    #allocation9 [shape = 's32[1]{0}', space=sflag, size = 0x4, scoped, tag = 'scoped memory for actor_rnn_forward_seq.1']
    #allocation10 [shape = 'u8[512]{0}', space=vmem, size = 0x400, scoped, tag = 'input window, operand 7, single buffered']
    #allocation11 [shape = 'u8[16384]{0}', space=vmem, size = 0x4000, scoped, tag = 'input window, operand 8, single buffered']
    #allocation12 [shape = 's32[1]{0}', space=sflag, size = 0x4, scoped, tag = 'scoped memory for actor_rnn_forward_seq.1']
    #allocation13 [shape = 'u8[512]{0}', space=vmem, size = 0x400, scoped, tag = 'input window, operand 9, single buffered']
    #allocation14 [shape = 'u8[32768]{0}', space=vmem, size = 0x8000, scoped, tag = 'output window, operand 0, single buffered']
    #allocation15 [shape = 'u8[4096]{0}', space=vmem, size = 0x1000, scoped, tag = 'output window, operand 1, single buffered']
    #allocation16 [shape = 's32[1]{0}', space=sflag, size = 0x4, scoped, tag = 'scoped memory for actor_rnn_forward_seq.1']
    %17 = vsyncpa [#allocation3], 0
    %18 = vsyncpa [#allocation6], 0
    %19 = vsyncpa [#allocation9], 0
    %20 = vsyncpa [#allocation12], 0
    %21 = vsyncpa [#allocation4], 0
    %22 = vsyncpa [#allocation16], 0
    // Predicated region
    $region2: #{actor_rnn_forward_seq.1} parent=1 // pred_check
      _
    $region3: #{actor_rnn_forward_seq.1} parent=1 // pred_check_branch
      %24 = sbr.rel (0) target = $region5
    $region4: #{actor_rnn_forward_seq.1} parent=1 // pred_region
      %s26 = ssub.s32 1024, 1024
      %27 = vsyncadd [#allocation3], %s26
      %s28 = sshll.u32 [#allocation2], 4
      %s29 = int_to_ptr.vmem [resolvable:$true] %s28
      %34 = dma.hbm_to_vmem [thread:$0]  %s0, 1024, %s29, [#allocation3], 128, 128, 8
    $region5: #{actor_rnn_forward_seq.1} parent=1 // pred_fallthru
      _
    // Predicated region
    $region6: #{actor_rnn_forward_seq.1} parent=1 // pred_check
      _
    $region7: #{actor_rnn_forward_seq.1} parent=1 // pred_check_branch
      %36 = sbr.rel (0) target = $region9
    $region8: #{actor_rnn_forward_seq.1} parent=1 // pred_region
      %s38 = ssub.s32 128, 128
      %39 = vsyncadd [#allocation6], %s38
      %s41 = sshll.u32 [#allocation5], 4
      %s42 = int_to_ptr.vmem [resolvable:$true] %s41
      %44 = dma.hbm_to_vmem [thread:$0]  %s1, 128, %s42, [#allocation6]
    $region9: #{actor_rnn_forward_seq.1} parent=1 // pred_fallthru
      _
    // Predicated region
    $region10: #{actor_rnn_forward_seq.1} parent=1 // pred_check
      _
    $region11: #{actor_rnn_forward_seq.1} parent=1 // pred_check_branch
      %46 = sbr.rel (0) target = $region13
    $region12: #{actor_rnn_forward_seq.1} parent=1 // pred_region
      %s48 = ssub.s32 256, 256
      %49 = vsyncadd [#allocation6], %s48
      %s50 = sshll.u32 [#allocation7], 4
      %s51 = int_to_ptr.vmem [resolvable:$true] %s50
      %56 = dma.hbm_to_vmem [thread:$0]  %s2, 256, %s51, [#allocation6], 128, 128, 8
    $region13: #{actor_rnn_forward_seq.1} parent=1 // pred_fallthru
      _
    // Predicated region
    $region14: #{actor_rnn_forward_seq.1} parent=1 // pred_check
      _
    $region15: #{actor_rnn_forward_seq.1} parent=1 // pred_check_branch
      %58 = sbr.rel (0) target = $region17
    $region16: #{actor_rnn_forward_seq.1} parent=1 // pred_region
      _
    $region17: #{actor_rnn_forward_seq.1} parent=1 // pred_fallthru
      _
    // Predicated region
    $region18: #{actor_rnn_forward_seq.1} parent=1 // pred_check
      _
    $region19: #{actor_rnn_forward_seq.1} parent=1 // pred_check_branch
      %60 = sbr.rel (0) target = $region21
    $region20: #{actor_rnn_forward_seq.1} parent=1 // pred_region
      _
    $region21: #{actor_rnn_forward_seq.1} parent=1 // pred_fallthru
      _
    // Predicated region
    $region22: #{actor_rnn_forward_seq.1} parent=1 // pred_check
      _
    $region23: #{actor_rnn_forward_seq.1} parent=1 // pred_check_branch
      %62 = sbr.rel (0) target = $region25
    $region24: #{actor_rnn_forward_seq.1} parent=1 // pred_region
      _
    $region25: #{actor_rnn_forward_seq.1} parent=1 // pred_fallthru
      _
    // Predicated region
    $region26: #{actor_rnn_forward_seq.1} parent=1 // pred_check
      _
    $region27: #{actor_rnn_forward_seq.1} parent=1 // pred_check_branch
      %64 = sbr.rel (0) target = $region29
    $region28: #{actor_rnn_forward_seq.1} parent=1 // pred_region
      %s66 = ssub.s32 512, 512
      %67 = vsyncadd [#allocation9], %s66
      %s68 = sshll.u32 [#allocation8], 4
      %s69 = int_to_ptr.vmem [resolvable:$true] %s68
      %74 = dma.hbm_to_vmem [thread:$0]  %s6, 512, %s69, [#allocation9], 128, 128, 8
    $region29: #{actor_rnn_forward_seq.1} parent=1 // pred_fallthru
      _
    // Predicated region
    $region30: #{actor_rnn_forward_seq.1} parent=1 // pred_check
      _
    $region31: #{actor_rnn_forward_seq.1} parent=1 // pred_check_branch
      %76 = sbr.rel (0) target = $region33
    $region32: #{actor_rnn_forward_seq.1} parent=1 // pred_region
      %s78 = ssub.s32 16, 16
      %79 = vsyncadd [#allocation9], %s78
      %s81 = sshll.u32 [#allocation10], 4
      %s82 = int_to_ptr.vmem [resolvable:$true] %s81
      %84 = dma.hbm_to_vmem [thread:$0]  %s7, 16, %s82, [#allocation9]
    $region33: #{actor_rnn_forward_seq.1} parent=1 // pred_fallthru
      _
    // Predicated region
    $region34: #{actor_rnn_forward_seq.1} parent=1 // pred_check
      _
    $region35: #{actor_rnn_forward_seq.1} parent=1 // pred_check_branch
      %86 = sbr.rel (0) target = $region37
    $region36: #{actor_rnn_forward_seq.1} parent=1 // pred_region
      %s88 = ssub.s32 512, 512
      %89 = vsyncadd [#allocation12], %s88
      %s90 = sshll.u32 [#allocation11], 4
      %s91 = int_to_ptr.vmem [resolvable:$true] %s90
      %96 = dma.hbm_to_vmem [thread:$0]  %s8, 512, %s91, [#allocation12], 128, 128, 8
    $region37: #{actor_rnn_forward_seq.1} parent=1 // pred_fallthru
      _
    // Predicated region
    $region38: #{actor_rnn_forward_seq.1} parent=1 // pred_check
      _
    $region39: #{actor_rnn_forward_seq.1} parent=1 // pred_check_branch
      %98 = sbr.rel (0) target = $region41
    $region40: #{actor_rnn_forward_seq.1} parent=1 // pred_region
      %s100 = ssub.s32 16, 16
      %101 = vsyncadd [#allocation12], %s100
      %s103 = sshll.u32 [#allocation13], 4
      %s104 = int_to_ptr.vmem [resolvable:$true] %s103
      %106 = dma.hbm_to_vmem [thread:$0]  %s9, 16, %s104, [#allocation12]
    $region41: #{actor_rnn_forward_seq.1} parent=1 // pred_fallthru
      _
    // Predicated region
    $region42: #{actor_rnn_forward_seq.1} parent=1 // pred_check
      _
    $region43: #{actor_rnn_forward_seq.1} parent=1 // pred_check_branch
      %108 = sbr.rel (0) target = $region45
    $region44: #{actor_rnn_forward_seq.1} parent=1 // pred_region
      %109 = dma.done [#allocation3], 1024
    $region45: #{actor_rnn_forward_seq.1} parent=1 // pred_fallthru
      _
    // Predicated region
    $region46: #{actor_rnn_forward_seq.1} parent=1 // pred_check
      _
    $region47: #{actor_rnn_forward_seq.1} parent=1 // pred_check_branch
      %111 = sbr.rel (0) target = $region49
    $region48: #{actor_rnn_forward_seq.1} parent=1 // pred_region
      %112 = dma.done [#allocation6], 128
    $region49: #{actor_rnn_forward_seq.1} parent=1 // pred_fallthru
      _
    // Predicated region
    $region50: #{actor_rnn_forward_seq.1} parent=1 // pred_check
      _
    $region51: #{actor_rnn_forward_seq.1} parent=1 // pred_check_branch
      %114 = sbr.rel (0) target = $region53
    $region52: #{actor_rnn_forward_seq.1} parent=1 // pred_region
      %115 = dma.done [#allocation6], 256
    $region53: #{actor_rnn_forward_seq.1} parent=1 // pred_fallthru
      _
    // Predicated region
    $region54: #{actor_rnn_forward_seq.1} parent=1 // pred_check
      _
    $region55: #{actor_rnn_forward_seq.1} parent=1 // pred_check_branch
      %117 = sbr.rel (0) target = $region57
    $region56: #{actor_rnn_forward_seq.1} parent=1 // pred_region
      %118 = dma.done [#allocation9], 512
    $region57: #{actor_rnn_forward_seq.1} parent=1 // pred_fallthru
      _
    // Predicated region
    $region58: #{actor_rnn_forward_seq.1} parent=1 // pred_check
      _
    $region59: #{actor_rnn_forward_seq.1} parent=1 // pred_check_branch
      %120 = sbr.rel (0) target = $region61
    $region60: #{actor_rnn_forward_seq.1} parent=1 // pred_region
      %121 = dma.done [#allocation9], 16
    $region61: #{actor_rnn_forward_seq.1} parent=1 // pred_fallthru
      _
    // Predicated region
    $region62: #{actor_rnn_forward_seq.1} parent=1 // pred_check
      _
    $region63: #{actor_rnn_forward_seq.1} parent=1 // pred_check_branch
      %123 = sbr.rel (0) target = $region65
    $region64: #{actor_rnn_forward_seq.1} parent=1 // pred_region
      %124 = dma.done [#allocation12], 512
    $region65: #{actor_rnn_forward_seq.1} parent=1 // pred_fallthru
      _
    // Predicated region
    $region66: #{actor_rnn_forward_seq.1} parent=1 // pred_check
      _
    $region67: #{actor_rnn_forward_seq.1} parent=1 // pred_check_branch
      %126 = sbr.rel (0) target = $region69
    $region68: #{actor_rnn_forward_seq.1} parent=1 // pred_region
      %127 = dma.done [#allocation12], 16
    $region69: #{actor_rnn_forward_seq.1} parent=1 // pred_fallthru
      _
    %v128 = vld [vmem:[#allocation7] sm:$0xff]
    %v129 = vld [vmem:[#allocation7 + $0x8] sm:$0xff]
    %v130 = vld [vmem:[%s3] sm:$0x1]
    %v131 = vld [vmem:[%s4] sm:$0xff]
    %v132 = vld [vmem:[%s4 + $0x8] sm:$0xff]
    %v133 = vld [vmem:[%s4 + $0x10] sm:$0xff]
    %v134 = vld [vmem:[%s4 + $0x18] sm:$0xff]
    %v135 = vld [vmem:[%s5] sm:$0x1]
    %v136 = vld [vmem:[#allocation8] sm:$0xff]
    %v137 = vld [vmem:[#allocation8 + $0x8] sm:$0xff]
    %v138 = vld [vmem:[#allocation8 + $0x10] sm:$0xff]
    %v139 = vld [vmem:[#allocation8 + $0x18] sm:$0xff]
    %v140 = vld [vmem:[#allocation10] sm:$0x1]
    %v141 = vld [vmem:[#allocation11] sm:$0xff]
    %v142 = vld [vmem:[#allocation11 + $0x8] sm:$0xff]
    %v143 = vld [vmem:[#allocation11 + $0x10] sm:$0xff]
    %v144 = vld [vmem:[#allocation11 + $0x18] sm:$0xff]
    %v145 = vld [vmem:[#allocation13] sm:$0x1]
    %v146 = vld [vmem:[#allocation5] sm:$0xff]
    %v147 = vld [vmem:[#allocation2] sm:$0xff]
    %v149 = vlaneseq
    %v150 = vshrl.u32 %v149, 7
    %v151 = vsub.s32 0, %v150
    %v152 = vrot.slane %v130, %v151
    %vm154 = vcmask 130048
    %v156 = vsel %vm154, %v147, 0
    %158 = vmatprep.subr.mxu0 0.0
    %159 = vmatpush1.msra.mxu0 %v128
    %160 = vmatprep.subr.mxu0 0.0
    %161 = vmatpush1.msra.mxu0 %v129
    %162 = vmatprep.subr.mxu0 0.0
    %163 = vmatpush1.msra.mxu0 0.0
    %164 = vmatprep.subr.mxu0 0.0
    %165 = vmatpush1.msra.mxu0 0.0
    %166 = vmatprep.subr.mxu0 0.0
    %167 = vmatpush1.msra.mxu0 0.0
    %168 = vmatprep.subr.mxu0 0.0
    %169 = vmatpush1.msra.mxu0 0.0
    %170 = vmatprep.subr.mxu0 0.0
    %171 = vmatpush1.msra.mxu0 0.0
    %172 = vmatprep.subr.mxu0 0.0
    %173 = vmatpush1.msra.mxu0 0.0
    %174 = vmatprep.subr.mxu0 0.0
    %175 = vmatpush1.msra.mxu0 0.0
    %176 = vmatprep.subr.mxu0 0.0
    %177 = vmatpush1.msra.mxu0 0.0
    %178 = vmatprep.subr.mxu0 0.0
    %179 = vmatpush1.msra.mxu0 0.0
    %180 = vmatprep.subr.mxu0 0.0
    %181 = vmatpush1.msra.mxu0 0.0
    %182 = vmatprep.subr.mxu0 0.0
    %183 = vmatpush1.msra.mxu0 0.0
    %184 = vmatprep.subr.mxu0 0.0
    %185 = vmatpush1.msra.mxu0 0.0
    %186 = vmatprep.subr.mxu0 0.0
    %187 = vmatpush1.msra.mxu0 0.0
    %188 = vmatprep.subr.mxu0 0.0
    %189 = vmatpush1.msra.mxu0 0.0
    %190 = vmatprep.subr.mxu0 0.0
    %191 = vmatpush1.msra.mxu0 0.0
    %192 = vmatprep.subr.mxu0 0.0
    %193 = vmatpush1.msra.mxu0 0.0
    %194 = vmatprep.subr.mxu0 0.0
    %195 = vmatpush1.msra.mxu0 0.0
    %196 = vmatprep.subr.mxu0 0.0
    %197 = vmatpush1.msra.mxu0 0.0
    %198 = vmatprep.subr.mxu0 0.0
    %199 = vmatpush1.msra.mxu0 0.0
    %200 = vmatprep.subr.mxu0 0.0
    %201 = vmatpush1.msra.mxu0 0.0
    %202 = vmatprep.subr.mxu0 0.0
    %203 = vmatpush1.msra.mxu0 0.0
    %204 = vmatprep.subr.mxu0 0.0
    %205 = vmatpush1.msra.mxu0 0.0
    %206 = vmatprep.subr.mxu0 0.0
    %207 = vmatpush1.msra.mxu0 0.0
    %208 = vmatprep.subr.mxu0 0.0
    %209 = vmatpush1.msra.mxu0 0.0
    %210 = vmatprep.subr.mxu0 0.0
    %211 = vmatpush1.msra.mxu0 0.0
    %212 = vmatprep.subr.mxu0 0.0
    %213 = vmatpush1.msra.mxu0 0.0
    %214 = vmatprep.subr.mxu0 0.0
    %215 = vmatpush1.msra.mxu0 0.0
    %216 = vmatprep.subr.mxu0 0.0
    %217 = vmatpush1.msra.mxu0 0.0
    %218 = vmatprep.subr.mxu0 0.0
    %219 = vmatpush1.msra.mxu0 0.0
    %220 = vmatprep.subr.mxu0 0.0
    %221 = vmatpush1.msra.mxu0 0.0
    %222 = vmatprep.mubr.f32.mxu0 0.0
    %223 = vmatmul.mubr.f32.gmra.mrb[0].mxu0 %v156
    %v224 = vpop.f32.mrb[0].mxu0
    %v225 = vadd.f32 %v152, %v224
    %v226 = vpop.f32.mrb[0].mxu0
    %227 = vdwg.mxu0
    %v228 = vmax.f32 %v225, 0.0
    %v230 = vlaneseq
    %v231 = vshrl.u32 %v230, 7
    %v232 = vsub.s32 0, %v231
    %v233 = vrot.slane %v135, %v232
    %vm235 = vcmask 261120
    %v237 = vsel %vm235, %v228, 0
    %239 = vmatprep.subr.mxu0 0.0
    %240 = vmatpush1.msra.mxu0 %v131
    %241 = vmatprep.subr.mxu0 0.0
    %242 = vmatpush1.msra.mxu0 %v132
    %243 = vmatprep.subr.mxu0 0.0
    %244 = vmatpush1.msra.mxu0 %v133
    %245 = vmatprep.subr.mxu0 0.0
    %246 = vmatpush1.msra.mxu0 %v134
    %247 = vmatprep.subr.mxu0 0.0
    %248 = vmatpush1.msra.mxu0 0.0
    %249 = vmatprep.subr.mxu0 0.0
    %250 = vmatpush1.msra.mxu0 0.0
    %251 = vmatprep.subr.mxu0 0.0
    %252 = vmatpush1.msra.mxu0 0.0
    %253 = vmatprep.subr.mxu0 0.0
    %254 = vmatpush1.msra.mxu0 0.0
    %255 = vmatprep.subr.mxu0 0.0
    %256 = vmatpush1.msra.mxu0 0.0
    %257 = vmatprep.subr.mxu0 0.0
    %258 = vmatpush1.msra.mxu0 0.0
    %259 = vmatprep.subr.mxu0 0.0
    %260 = vmatpush1.msra.mxu0 0.0
    %261 = vmatprep.subr.mxu0 0.0
    %262 = vmatpush1.msra.mxu0 0.0
    %263 = vmatprep.subr.mxu0 0.0
    %264 = vmatpush1.msra.mxu0 0.0
    %265 = vmatprep.subr.mxu0 0.0
    %266 = vmatpush1.msra.mxu0 0.0
    %267 = vmatprep.subr.mxu0 0.0
    %268 = vmatpush1.msra.mxu0 0.0
    %269 = vmatprep.subr.mxu0 0.0
    %270 = vmatpush1.msra.mxu0 0.0
    %271 = vmatprep.subr.mxu0 0.0
    %272 = vmatpush1.msra.mxu0 0.0
    %273 = vmatprep.subr.mxu0 0.0
    %274 = vmatpush1.msra.mxu0 0.0
    %275 = vmatprep.subr.mxu0 0.0
    %276 = vmatpush1.msra.mxu0 0.0
    %277 = vmatprep.subr.mxu0 0.0
    %278 = vmatpush1.msra.mxu0 0.0
    %279 = vmatprep.subr.mxu0 0.0
    %280 = vmatpush1.msra.mxu0 0.0
    %281 = vmatprep.subr.mxu0 0.0
    %282 = vmatpush1.msra.mxu0 0.0
    %283 = vmatprep.subr.mxu0 0.0
    %284 = vmatpush1.msra.mxu0 0.0
    %285 = vmatprep.subr.mxu0 0.0
    %286 = vmatpush1.msra.mxu0 0.0
    %287 = vmatprep.subr.mxu0 0.0
    %288 = vmatpush1.msra.mxu0 0.0
    %289 = vmatprep.subr.mxu0 0.0
    %290 = vmatpush1.msra.mxu0 0.0
    %291 = vmatprep.subr.mxu0 0.0
    %292 = vmatpush1.msra.mxu0 0.0
    %293 = vmatprep.subr.mxu0 0.0
    %294 = vmatpush1.msra.mxu0 0.0
    %295 = vmatprep.subr.mxu0 0.0
    %296 = vmatpush1.msra.mxu0 0.0
    %297 = vmatprep.subr.mxu0 0.0
    %298 = vmatpush1.msra.mxu0 0.0
    %299 = vmatprep.subr.mxu0 0.0
    %300 = vmatpush1.msra.mxu0 0.0
    %301 = vmatprep.subr.mxu0 0.0
    %302 = vmatpush1.msra.mxu0 0.0
    %303 = vmatprep.mubr.f32.mxu0 0.0
    %304 = vmatmul.mubr.f32.gmra.mrb[0].mxu0 %v237
    %v305 = vpop.f32.mrb[0].mxu0
    %v306 = vadd.f32 %v233, %v305
    %v307 = vpop.f32.mrb[0].mxu0
    %308 = vdwg.mxu0
    %v310 = vlaneseq
    %v311 = vshrl.u32 %v310, 7
    %v312 = vsub.s32 0, %v311
    %v313 = vrot.slane %v140, %v312
    %v316 = vsel %vm235, %v146, 0
    %318 = vmatprep.subr.mxu0 0.0
    %319 = vmatpush1.msra.mxu0 %v136
    %320 = vmatprep.subr.mxu0 0.0
    %321 = vmatpush1.msra.mxu0 %v137
    %322 = vmatprep.subr.mxu0 0.0
    %323 = vmatpush1.msra.mxu0 %v138
    %324 = vmatprep.subr.mxu0 0.0
    %325 = vmatpush1.msra.mxu0 %v139
    %326 = vmatprep.subr.mxu0 0.0
    %327 = vmatpush1.msra.mxu0 0.0
    %328 = vmatprep.subr.mxu0 0.0
    %329 = vmatpush1.msra.mxu0 0.0
    %330 = vmatprep.subr.mxu0 0.0
    %331 = vmatpush1.msra.mxu0 0.0
    %332 = vmatprep.subr.mxu0 0.0
    %333 = vmatpush1.msra.mxu0 0.0
    %334 = vmatprep.subr.mxu0 0.0
    %335 = vmatpush1.msra.mxu0 0.0
    %336 = vmatprep.subr.mxu0 0.0
    %337 = vmatpush1.msra.mxu0 0.0
    %338 = vmatprep.subr.mxu0 0.0
    %339 = vmatpush1.msra.mxu0 0.0
    %340 = vmatprep.subr.mxu0 0.0
    %341 = vmatpush1.msra.mxu0 0.0
    %342 = vmatprep.subr.mxu0 0.0
    %343 = vmatpush1.msra.mxu0 0.0
    %344 = vmatprep.subr.mxu0 0.0
    %345 = vmatpush1.msra.mxu0 0.0
    %346 = vmatprep.subr.mxu0 0.0
    %347 = vmatpush1.msra.mxu0 0.0
    %348 = vmatprep.subr.mxu0 0.0
    %349 = vmatpush1.msra.mxu0 0.0
    %350 = vmatprep.subr.mxu0 0.0
    %351 = vmatpush1.msra.mxu0 0.0
    %352 = vmatprep.subr.mxu0 0.0
    %353 = vmatpush1.msra.mxu0 0.0
    %354 = vmatprep.subr.mxu0 0.0
    %355 = vmatpush1.msra.mxu0 0.0
    %356 = vmatprep.subr.mxu0 0.0
    %357 = vmatpush1.msra.mxu0 0.0
    %358 = vmatprep.subr.mxu0 0.0
    %359 = vmatpush1.msra.mxu0 0.0
    %360 = vmatprep.subr.mxu0 0.0
    %361 = vmatpush1.msra.mxu0 0.0
    %362 = vmatprep.subr.mxu0 0.0
    %363 = vmatpush1.msra.mxu0 0.0
    %364 = vmatprep.subr.mxu0 0.0
    %365 = vmatpush1.msra.mxu0 0.0
    %366 = vmatprep.subr.mxu0 0.0
    %367 = vmatpush1.msra.mxu0 0.0
    %368 = vmatprep.subr.mxu0 0.0
    %369 = vmatpush1.msra.mxu0 0.0
    %370 = vmatprep.subr.mxu0 0.0
    %371 = vmatpush1.msra.mxu0 0.0
    %372 = vmatprep.subr.mxu0 0.0
    %373 = vmatpush1.msra.mxu0 0.0
    %374 = vmatprep.subr.mxu0 0.0
    %375 = vmatpush1.msra.mxu0 0.0
    %376 = vmatprep.subr.mxu0 0.0
    %377 = vmatpush1.msra.mxu0 0.0
    %378 = vmatprep.subr.mxu0 0.0
    %379 = vmatpush1.msra.mxu0 0.0
    %380 = vmatprep.subr.mxu0 0.0
    %381 = vmatpush1.msra.mxu0 0.0
    %382 = vmatprep.mubr.f32.mxu0 0.0
    %383 = vmatmul.mubr.f32.gmra.mrb[0].mxu0 %v316
    %v384 = vpop.f32.mrb[0].mxu0
    %v385 = vadd.f32 %v313, %v384
    %v386 = vpop.f32.mrb[0].mxu0
    %387 = vdwg.mxu0
    %v388 = vadd.f32 %v306, %v385
    %v389 = vxor.u32 %v388, 2147483648
    %v390 = vmul.f32 %v389, 1.442695
    %v391 = vpow.pop %v390
    %v392 = vadd.f32 %v391, 1.0
    %v393 = vrcp.pop %v392
    %v394 = vmul.f32 1.0, %v393
    %396 = vrot.lane.b32.xlu0 %v385, 64
    %v397 = vpop.permute.xlu0 %396
    %v399 = vmul.f32 %v394, %v397
    %401 = vrot.lane.b32.xlu0 %v399, 64
    %v402 = vpop.permute.xlu0 %401
    %v404 = vadd.f32 %v306, %v402
    %v405 = vtanh.pop %v404
    %v406 = vsub.f32 1.0, %v394
    %408 = vrot.lane.b32.xlu0 %v405, 96
    %v409 = vpop.permute.xlu0 %408
    %v411 = vmul.f32 %v406, %v409
    %412 = vrot.lane.b32.xlu0 %v146, 32
    %v413 = vpop.permute.xlu0 %412
    %v415 = vmul.f32 %v394, %v413
    %v416 = vadd.f32 %v411, %v415
    %v418 = vlaneseq
    %v419 = vshrl.u32 %v418, 7
    %v420 = vsub.s32 0, %v419
    %v421 = vrot.slane %v145, %v420
    %424 = vrot.lane.b32.xlu0 %v416, 96
    %v425 = vpop.permute.xlu0 %424
    %v426 = vsel %vm235, %v425, 0
    %428 = vmatprep.subr.mxu0 0.0
    %429 = vmatpush1.msra.mxu0 %v141
    %430 = vmatprep.subr.mxu0 0.0
    %431 = vmatpush1.msra.mxu0 %v142
    %432 = vmatprep.subr.mxu0 0.0
    %433 = vmatpush1.msra.mxu0 %v143
    %434 = vmatprep.subr.mxu0 0.0
    %435 = vmatpush1.msra.mxu0 %v144
    %436 = vmatprep.subr.mxu0 0.0
    %437 = vmatpush1.msra.mxu0 0.0
    %438 = vmatprep.subr.mxu0 0.0
    %439 = vmatpush1.msra.mxu0 0.0
    %440 = vmatprep.subr.mxu0 0.0
    %441 = vmatpush1.msra.mxu0 0.0
    %442 = vmatprep.subr.mxu0 0.0
    %443 = vmatpush1.msra.mxu0 0.0
    %444 = vmatprep.subr.mxu0 0.0
    %445 = vmatpush1.msra.mxu0 0.0
    %446 = vmatprep.subr.mxu0 0.0
    %447 = vmatpush1.msra.mxu0 0.0
    %448 = vmatprep.subr.mxu0 0.0
    %449 = vmatpush1.msra.mxu0 0.0
    %450 = vmatprep.subr.mxu0 0.0
    %451 = vmatpush1.msra.mxu0 0.0
    %452 = vmatprep.subr.mxu0 0.0
    %453 = vmatpush1.msra.mxu0 0.0
    %454 = vmatprep.subr.mxu0 0.0
    %455 = vmatpush1.msra.mxu0 0.0
    %456 = vmatprep.subr.mxu0 0.0
    %457 = vmatpush1.msra.mxu0 0.0
    %458 = vmatprep.subr.mxu0 0.0
    %459 = vmatpush1.msra.mxu0 0.0
    %460 = vmatprep.subr.mxu0 0.0
    %461 = vmatpush1.msra.mxu0 0.0
    %462 = vmatprep.subr.mxu0 0.0
    %463 = vmatpush1.msra.mxu0 0.0
    %464 = vmatprep.subr.mxu0 0.0
    %465 = vmatpush1.msra.mxu0 0.0
    %466 = vmatprep.subr.mxu0 0.0
    %467 = vmatpush1.msra.mxu0 0.0
    %468 = vmatprep.subr.mxu0 0.0
    %469 = vmatpush1.msra.mxu0 0.0
    %470 = vmatprep.subr.mxu0 0.0
    %471 = vmatpush1.msra.mxu0 0.0
    %472 = vmatprep.subr.mxu0 0.0
    %473 = vmatpush1.msra.mxu0 0.0
    %474 = vmatprep.subr.mxu0 0.0
    %475 = vmatpush1.msra.mxu0 0.0
    %476 = vmatprep.subr.mxu0 0.0
    %477 = vmatpush1.msra.mxu0 0.0
    %478 = vmatprep.subr.mxu0 0.0
    %479 = vmatpush1.msra.mxu0 0.0
    %480 = vmatprep.subr.mxu0 0.0
    %481 = vmatpush1.msra.mxu0 0.0
    %482 = vmatprep.subr.mxu0 0.0
    %483 = vmatpush1.msra.mxu0 0.0
    %484 = vmatprep.subr.mxu0 0.0
    %485 = vmatpush1.msra.mxu0 0.0
    %486 = vmatprep.subr.mxu0 0.0
    %487 = vmatpush1.msra.mxu0 0.0
    %488 = vmatprep.subr.mxu0 0.0
    %489 = vmatpush1.msra.mxu0 0.0
    %490 = vmatprep.subr.mxu0 0.0
    %491 = vmatpush1.msra.mxu0 0.0
    %492 = vmatprep.mubr.f32.mxu0 0.0
    %493 = vmatmul.mubr.f32.gmra.mrb[0].mxu0 %v426
    %v494 = vpop.f32.mrb[0].mxu0
    %v495 = vadd.f32 %v421, %v494
    %v496 = vpop.f32.mrb[0].mxu0
    %497 = vdwg.mxu0
    %498 = vmax.xlane.f32.xlu0 %v495
    %v499 = vpop.xlane.xlu0 %498
    %v500 = vsub.f32 %v495, %v499
    %v501 = vmul.f32 %v500, 1.442695
    %v502 = vpow.pop %v501
    %503 = vadd.xlane.f32.xlu0 %v502
    %v504 = vpop.xlane.xlu0 %503
    %v505 = vrcp.pop %v504
    %v506 = vmul.f32 %v502, %v505
    %507 = vst [vmem:[#allocation14] sm:$0xff] %v506
    %s508 = scalar_lea.vmem [#allocation2], 8
    %v509 = vld [vmem:[%s508] sm:$0xff]
    %v511 = vsel %vm154, %v509, 0
    %513 = vmatprep.subr.mxu0 0.0
    %514 = vmatpush1.msra.mxu0 %v128
    %515 = vmatprep.subr.mxu0 0.0
    %516 = vmatpush1.msra.mxu0 %v129
    %517 = vmatprep.subr.mxu0 0.0
    %518 = vmatpush1.msra.mxu0 0.0
    %519 = vmatprep.subr.mxu0 0.0
    %520 = vmatpush1.msra.mxu0 0.0
    %521 = vmatprep.subr.mxu0 0.0
    %522 = vmatpush1.msra.mxu0 0.0
    %523 = vmatprep.subr.mxu0 0.0
    %524 = vmatpush1.msra.mxu0 0.0
    %525 = vmatprep.subr.mxu0 0.0
    %526 = vmatpush1.msra.mxu0 0.0
    %527 = vmatprep.subr.mxu0 0.0
    %528 = vmatpush1.msra.mxu0 0.0
    %529 = vmatprep.subr.mxu0 0.0
    %530 = vmatpush1.msra.mxu0 0.0
    %531 = vmatprep.subr.mxu0 0.0
    %532 = vmatpush1.msra.mxu0 0.0
    %533 = vmatprep.subr.mxu0 0.0
    %534 = vmatpush1.msra.mxu0 0.0
    %535 = vmatprep.subr.mxu0 0.0
    %536 = vmatpush1.msra.mxu0 0.0
    %537 = vmatprep.subr.mxu0 0.0
    %538 = vmatpush1.msra.mxu0 0.0
    %539 = vmatprep.subr.mxu0 0.0
    %540 = vmatpush1.msra.mxu0 0.0
    %541 = vmatprep.subr.mxu0 0.0
    %542 = vmatpush1.msra.mxu0 0.0
    %543 = vmatprep.subr.mxu0 0.0
    %544 = vmatpush1.msra.mxu0 0.0
    %545 = vmatprep.subr.mxu0 0.0
    %546 = vmatpush1.msra.mxu0 0.0
    %547 = vmatprep.subr.mxu0 0.0
    %548 = vmatpush1.msra.mxu0 0.0
    %549 = vmatprep.subr.mxu0 0.0
    %550 = vmatpush1.msra.mxu0 0.0
    %551 = vmatprep.subr.mxu0 0.0
    %552 = vmatpush1.msra.mxu0 0.0
    %553 = vmatprep.subr.mxu0 0.0
    %554 = vmatpush1.msra.mxu0 0.0
    %555 = vmatprep.subr.mxu0 0.0
    %556 = vmatpush1.msra.mxu0 0.0
    %557 = vmatprep.subr.mxu0 0.0
    %558 = vmatpush1.msra.mxu0 0.0
    %559 = vmatprep.subr.mxu0 0.0
    %560 = vmatpush1.msra.mxu0 0.0
    %561 = vmatprep.subr.mxu0 0.0
    %562 = vmatpush1.msra.mxu0 0.0
    %563 = vmatprep.subr.mxu0 0.0
    %564 = vmatpush1.msra.mxu0 0.0
    %565 = vmatprep.subr.mxu0 0.0
    %566 = vmatpush1.msra.mxu0 0.0
    %567 = vmatprep.subr.mxu0 0.0
    %568 = vmatpush1.msra.mxu0 0.0
    %569 = vmatprep.subr.mxu0 0.0
    %570 = vmatpush1.msra.mxu0 0.0
    %571 = vmatprep.subr.mxu0 0.0
    %572 = vmatpush1.msra.mxu0 0.0
    %573 = vmatprep.subr.mxu0 0.0
    %574 = vmatpush1.msra.mxu0 0.0
    %575 = vmatprep.subr.mxu0 0.0
    %576 = vmatpush1.msra.mxu0 0.0
    %577 = vmatprep.mubr.f32.mxu0 0.0
    %578 = vmatmul.mubr.f32.gmra.mrb[0].mxu0 %v511
    %v579 = vpop.f32.mrb[0].mxu0
    %v580 = vadd.f32 %v152, %v579
    %v581 = vpop.f32.mrb[0].mxu0
    %582 = vdwg.mxu0
    %v583 = vmax.f32 %v580, 0.0
    %v585 = vsel %vm235, %v583, 0
    %587 = vmatprep.subr.mxu0 0.0
    %588 = vmatpush1.msra.mxu0 %v131
    %589 = vmatprep.subr.mxu0 0.0
    %590 = vmatpush1.msra.mxu0 %v132
    %591 = vmatprep.subr.mxu0 0.0
    %592 = vmatpush1.msra.mxu0 %v133
    %593 = vmatprep.subr.mxu0 0.0
    %594 = vmatpush1.msra.mxu0 %v134
    %595 = vmatprep.subr.mxu0 0.0
    %596 = vmatpush1.msra.mxu0 0.0
    %597 = vmatprep.subr.mxu0 0.0
    %598 = vmatpush1.msra.mxu0 0.0
    %599 = vmatprep.subr.mxu0 0.0
    %600 = vmatpush1.msra.mxu0 0.0
    %601 = vmatprep.subr.mxu0 0.0
    %602 = vmatpush1.msra.mxu0 0.0
    %603 = vmatprep.subr.mxu0 0.0
    %604 = vmatpush1.msra.mxu0 0.0
    %605 = vmatprep.subr.mxu0 0.0
    %606 = vmatpush1.msra.mxu0 0.0
    %607 = vmatprep.subr.mxu0 0.0
    %608 = vmatpush1.msra.mxu0 0.0
    %609 = vmatprep.subr.mxu0 0.0
    %610 = vmatpush1.msra.mxu0 0.0
    %611 = vmatprep.subr.mxu0 0.0
    %612 = vmatpush1.msra.mxu0 0.0
    %613 = vmatprep.subr.mxu0 0.0
    %614 = vmatpush1.msra.mxu0 0.0
    %615 = vmatprep.subr.mxu0 0.0
    %616 = vmatpush1.msra.mxu0 0.0
    %617 = vmatprep.subr.mxu0 0.0
    %618 = vmatpush1.msra.mxu0 0.0
    %619 = vmatprep.subr.mxu0 0.0
    %620 = vmatpush1.msra.mxu0 0.0
    %621 = vmatprep.subr.mxu0 0.0
    %622 = vmatpush1.msra.mxu0 0.0
    %623 = vmatprep.subr.mxu0 0.0
    %624 = vmatpush1.msra.mxu0 0.0
    %625 = vmatprep.subr.mxu0 0.0
    %626 = vmatpush1.msra.mxu0 0.0
    %627 = vmatprep.subr.mxu0 0.0
    %628 = vmatpush1.msra.mxu0 0.0
    %629 = vmatprep.subr.mxu0 0.0
    %630 = vmatpush1.msra.mxu0 0.0
    %631 = vmatprep.subr.mxu0 0.0
    %632 = vmatpush1.msra.mxu0 0.0
    %633 = vmatprep.subr.mxu0 0.0
    %634 = vmatpush1.msra.mxu0 0.0
    %635 = vmatprep.subr.mxu0 0.0
    %636 = vmatpush1.msra.mxu0 0.0
    %637 = vmatprep.subr.mxu0 0.0
    %638 = vmatpush1.msra.mxu0 0.0
    %639 = vmatprep.subr.mxu0 0.0
    %640 = vmatpush1.msra.mxu0 0.0
    %641 = vmatprep.subr.mxu0 0.0
    %642 = vmatpush1.msra.mxu0 0.0
    %643 = vmatprep.subr.mxu0 0.0
    %644 = vmatpush1.msra.mxu0 0.0
    %645 = vmatprep.subr.mxu0 0.0
    %646 = vmatpush1.msra.mxu0 0.0
    %647 = vmatprep.subr.mxu0 0.0
    %648 = vmatpush1.msra.mxu0 0.0
    %649 = vmatprep.subr.mxu0 0.0
    %650 = vmatpush1.msra.mxu0 0.0
    %651 = vmatprep.mubr.f32.mxu0 0.0
    %652 = vmatmul.mubr.f32.gmra.mrb[0].mxu0 %v585
    %v653 = vpop.f32.mrb[0].mxu0
    %v654 = vadd.f32 %v233, %v653
    %v655 = vpop.f32.mrb[0].mxu0
    %656 = vdwg.mxu0
    %657 = vmatprep.subr.mxu0 0.0
    %658 = vmatpush1.msra.mxu0 %v136
    %659 = vmatprep.subr.mxu0 0.0
    %660 = vmatpush1.msra.mxu0 %v137
    %661 = vmatprep.subr.mxu0 0.0
    %662 = vmatpush1.msra.mxu0 %v138
    %663 = vmatprep.subr.mxu0 0.0
    %664 = vmatpush1.msra.mxu0 %v139
    %665 = vmatprep.subr.mxu0 0.0
    %666 = vmatpush1.msra.mxu0 0.0
    %667 = vmatprep.subr.mxu0 0.0
    %668 = vmatpush1.msra.mxu0 0.0
    %669 = vmatprep.subr.mxu0 0.0
    %670 = vmatpush1.msra.mxu0 0.0
    %671 = vmatprep.subr.mxu0 0.0
    %672 = vmatpush1.msra.mxu0 0.0
    %673 = vmatprep.subr.mxu0 0.0
    %674 = vmatpush1.msra.mxu0 0.0
    %675 = vmatprep.subr.mxu0 0.0
    %676 = vmatpush1.msra.mxu0 0.0
    %677 = vmatprep.subr.mxu0 0.0
    %678 = vmatpush1.msra.mxu0 0.0
    %679 = vmatprep.subr.mxu0 0.0
    %680 = vmatpush1.msra.mxu0 0.0
    %681 = vmatprep.subr.mxu0 0.0
    %682 = vmatpush1.msra.mxu0 0.0
    %683 = vmatprep.subr.mxu0 0.0
    %684 = vmatpush1.msra.mxu0 0.0
    %685 = vmatprep.subr.mxu0 0.0
    %686 = vmatpush1.msra.mxu0 0.0
    %687 = vmatprep.subr.mxu0 0.0
    %688 = vmatpush1.msra.mxu0 0.0
    %689 = vmatprep.subr.mxu0 0.0
    %690 = vmatpush1.msra.mxu0 0.0
    %691 = vmatprep.subr.mxu0 0.0
    %692 = vmatpush1.msra.mxu0 0.0
    %693 = vmatprep.subr.mxu0 0.0
    %694 = vmatpush1.msra.mxu0 0.0
    %695 = vmatprep.subr.mxu0 0.0
    %696 = vmatpush1.msra.mxu0 0.0
    %697 = vmatprep.subr.mxu0 0.0
    %698 = vmatpush1.msra.mxu0 0.0
    %699 = vmatprep.subr.mxu0 0.0
    %700 = vmatpush1.msra.mxu0 0.0
    %701 = vmatprep.subr.mxu0 0.0
    %702 = vmatpush1.msra.mxu0 0.0
    %703 = vmatprep.subr.mxu0 0.0
    %704 = vmatpush1.msra.mxu0 0.0
    %705 = vmatprep.subr.mxu0 0.0
    %706 = vmatpush1.msra.mxu0 0.0
    %707 = vmatprep.subr.mxu0 0.0
    %708 = vmatpush1.msra.mxu0 0.0
    %709 = vmatprep.subr.mxu0 0.0
    %710 = vmatpush1.msra.mxu0 0.0
    %711 = vmatprep.subr.mxu0 0.0
    %712 = vmatpush1.msra.mxu0 0.0
    %713 = vmatprep.subr.mxu0 0.0
    %714 = vmatpush1.msra.mxu0 0.0
    %715 = vmatprep.subr.mxu0 0.0
    %716 = vmatpush1.msra.mxu0 0.0
    %717 = vmatprep.subr.mxu0 0.0
    %718 = vmatpush1.msra.mxu0 0.0
    %719 = vmatprep.subr.mxu0 0.0
    %720 = vmatpush1.msra.mxu0 0.0
    %721 = vmatprep.mubr.f32.mxu0 0.0
    %722 = vmatmul.mubr.f32.gmra.mrb[0].mxu0 %v426
    %v723 = vpop.f32.mrb[0].mxu0
    %v724 = vadd.f32 %v313, %v723
    %v725 = vpop.f32.mrb[0].mxu0
    %726 = vdwg.mxu0
    %v727 = vadd.f32 %v654, %v724
    %v728 = vxor.u32 %v727, 2147483648
    %v729 = vmul.f32 %v728, 1.442695
    %v730 = vpow.pop %v729
    %v731 = vadd.f32 %v730, 1.0
    %v732 = vrcp.pop %v731
    %v733 = vmul.f32 1.0, %v732
    %735 = vrot.lane.b32.xlu0 %v724, 64
    %v736 = vpop.permute.xlu0 %735
    %v738 = vmul.f32 %v733, %v736
    %740 = vrot.lane.b32.xlu0 %v738, 64
    %v741 = vpop.permute.xlu0 %740
    %v743 = vadd.f32 %v654, %v741
    %v744 = vtanh.pop %v743
    %v745 = vsub.f32 1.0, %v733
    %747 = vrot.lane.b32.xlu0 %v744, 96
    %v748 = vpop.permute.xlu0 %747
    %v750 = vmul.f32 %v745, %v748
    %v751 = vmul.f32 %v733, %v416
    %v752 = vadd.f32 %v750, %v751
    %754 = vrot.lane.b32.xlu0 %v752, 96
    %v755 = vpop.permute.xlu0 %754
    %v756 = vsel %vm235, %v755, 0
    %758 = vmatprep.subr.mxu0 0.0
    %759 = vmatpush1.msra.mxu0 %v141
    %760 = vmatprep.subr.mxu0 0.0
    %761 = vmatpush1.msra.mxu0 %v142
    %762 = vmatprep.subr.mxu0 0.0
    %763 = vmatpush1.msra.mxu0 %v143
    %764 = vmatprep.subr.mxu0 0.0
    %765 = vmatpush1.msra.mxu0 %v144
    %766 = vmatprep.subr.mxu0 0.0
    %767 = vmatpush1.msra.mxu0 0.0
    %768 = vmatprep.subr.mxu0 0.0
    %769 = vmatpush1.msra.mxu0 0.0
    %770 = vmatprep.subr.mxu0 0.0
    %771 = vmatpush1.msra.mxu0 0.0
    %772 = vmatprep.subr.mxu0 0.0
    %773 = vmatpush1.msra.mxu0 0.0
    %774 = vmatprep.subr.mxu0 0.0
    %775 = vmatpush1.msra.mxu0 0.0
    %776 = vmatprep.subr.mxu0 0.0
    %777 = vmatpush1.msra.mxu0 0.0
    %778 = vmatprep.subr.mxu0 0.0
    %779 = vmatpush1.msra.mxu0 0.0
    %780 = vmatprep.subr.mxu0 0.0
    %781 = vmatpush1.msra.mxu0 0.0
    %782 = vmatprep.subr.mxu0 0.0
    %783 = vmatpush1.msra.mxu0 0.0
    %784 = vmatprep.subr.mxu0 0.0
    %785 = vmatpush1.msra.mxu0 0.0
    %786 = vmatprep.subr.mxu0 0.0
    %787 = vmatpush1.msra.mxu0 0.0
    %788 = vmatprep.subr.mxu0 0.0
    %789 = vmatpush1.msra.mxu0 0.0
    %790 = vmatprep.subr.mxu0 0.0
    %791 = vmatpush1.msra.mxu0 0.0
    %792 = vmatprep.subr.mxu0 0.0
    %793 = vmatpush1.msra.mxu0 0.0
    %794 = vmatprep.subr.mxu0 0.0
    %795 = vmatpush1.msra.mxu0 0.0
    %796 = vmatprep.subr.mxu0 0.0
    %797 = vmatpush1.msra.mxu0 0.0
    %798 = vmatprep.subr.mxu0 0.0
    %799 = vmatpush1.msra.mxu0 0.0
    %800 = vmatprep.subr.mxu0 0.0
    %801 = vmatpush1.msra.mxu0 0.0
    %802 = vmatprep.subr.mxu0 0.0
    %803 = vmatpush1.msra.mxu0 0.0
    %804 = vmatprep.subr.mxu0 0.0
    %805 = vmatpush1.msra.mxu0 0.0
    %806 = vmatprep.subr.mxu0 0.0
    %807 = vmatpush1.msra.mxu0 0.0
    %808 = vmatprep.subr.mxu0 0.0
    %809 = vmatpush1.msra.mxu0 0.0
    %810 = vmatprep.subr.mxu0 0.0
    %811 = vmatpush1.msra.mxu0 0.0
    %812 = vmatprep.subr.mxu0 0.0
    %813 = vmatpush1.msra.mxu0 0.0
    %814 = vmatprep.subr.mxu0 0.0
    %815 = vmatpush1.msra.mxu0 0.0
    %816 = vmatprep.subr.mxu0 0.0
    %817 = vmatpush1.msra.mxu0 0.0
    %818 = vmatprep.subr.mxu0 0.0
    %819 = vmatpush1.msra.mxu0 0.0
    %820 = vmatprep.subr.mxu0 0.0
    %821 = vmatpush1.msra.mxu0 0.0
    %822 = vmatprep.mubr.f32.mxu0 0.0
    %823 = vmatmul.mubr.f32.gmra.mrb[0].mxu0 %v756
    %v824 = vpop.f32.mrb[0].mxu0
    %v825 = vadd.f32 %v421, %v824
    %v826 = vpop.f32.mrb[0].mxu0
    %827 = vdwg.mxu0
    %828 = vmax.xlane.f32.xlu0 %v825
    %v829 = vpop.xlane.xlu0 %828
    %v830 = vsub.f32 %v825, %v829
    %v831 = vmul.f32 %v830, 1.442695
    %v832 = vpow.pop %v831
    %833 = vadd.xlane.f32.xlu0 %v832
    %v834 = vpop.xlane.xlu0 %833
    %v835 = vrcp.pop %v834
    %v836 = vmul.f32 %v832, %v835
    %s837 = scalar_lea.vmem [#allocation14], 8
    %838 = vst [vmem:[%s837] sm:$0xff] %v836
    %s839 = scalar_lea.vmem [#allocation2], 16
    %v840 = vld [vmem:[%s839] sm:$0xff]
    %v842 = vsel %vm154, %v840, 0
    %844 = vmatprep.subr.mxu0 0.0
    %845 = vmatpush1.msra.mxu0 %v128
    %846 = vmatprep.subr.mxu0 0.0
    %847 = vmatpush1.msra.mxu0 %v129
    %848 = vmatprep.subr.mxu0 0.0
    %849 = vmatpush1.msra.mxu0 0.0
    %850 = vmatprep.subr.mxu0 0.0
    %851 = vmatpush1.msra.mxu0 0.0
    %852 = vmatprep.subr.mxu0 0.0
    %853 = vmatpush1.msra.mxu0 0.0
    %854 = vmatprep.subr.mxu0 0.0
    %855 = vmatpush1.msra.mxu0 0.0
    %856 = vmatprep.subr.mxu0 0.0
    %857 = vmatpush1.msra.mxu0 0.0
    %858 = vmatprep.subr.mxu0 0.0
    %859 = vmatpush1.msra.mxu0 0.0
    %860 = vmatprep.subr.mxu0 0.0
    %861 = vmatpush1.msra.mxu0 0.0
    %862 = vmatprep.subr.mxu0 0.0
    %863 = vmatpush1.msra.mxu0 0.0
    %864 = vmatprep.subr.mxu0 0.0
    %865 = vmatpush1.msra.mxu0 0.0
    %866 = vmatprep.subr.mxu0 0.0
    %867 = vmatpush1.msra.mxu0 0.0
    %868 = vmatprep.subr.mxu0 0.0
    %869 = vmatpush1.msra.mxu0 0.0
    %870 = vmatprep.subr.mxu0 0.0
    %871 = vmatpush1.msra.mxu0 0.0
    %872 = vmatprep.subr.mxu0 0.0
    %873 = vmatpush1.msra.mxu0 0.0
    %874 = vmatprep.subr.mxu0 0.0
    %875 = vmatpush1.msra.mxu0 0.0
    %876 = vmatprep.subr.mxu0 0.0
    %877 = vmatpush1.msra.mxu0 0.0
    %878 = vmatprep.subr.mxu0 0.0
    %879 = vmatpush1.msra.mxu0 0.0
    %880 = vmatprep.subr.mxu0 0.0
    %881 = vmatpush1.msra.mxu0 0.0
    %882 = vmatprep.subr.mxu0 0.0
    %883 = vmatpush1.msra.mxu0 0.0
    %884 = vmatprep.subr.mxu0 0.0
    %885 = vmatpush1.msra.mxu0 0.0
    %886 = vmatprep.subr.mxu0 0.0
    %887 = vmatpush1.msra.mxu0 0.0
    %888 = vmatprep.subr.mxu0 0.0
    %889 = vmatpush1.msra.mxu0 0.0
    %890 = vmatprep.subr.mxu0 0.0
    %891 = vmatpush1.msra.mxu0 0.0
    %892 = vmatprep.subr.mxu0 0.0
    %893 = vmatpush1.msra.mxu0 0.0
    %894 = vmatprep.subr.mxu0 0.0
    %895 = vmatpush1.msra.mxu0 0.0
    %896 = vmatprep.subr.mxu0 0.0
    %897 = vmatpush1.msra.mxu0 0.0
    %898 = vmatprep.subr.mxu0 0.0
    %899 = vmatpush1.msra.mxu0 0.0
    %900 = vmatprep.subr.mxu0 0.0
    %901 = vmatpush1.msra.mxu0 0.0
    %902 = vmatprep.subr.mxu0 0.0
    %903 = vmatpush1.msra.mxu0 0.0
    %904 = vmatprep.subr.mxu0 0.0
    %905 = vmatpush1.msra.mxu0 0.0
    %906 = vmatprep.subr.mxu0 0.0
    %907 = vmatpush1.msra.mxu0 0.0
    %908 = vmatprep.mubr.f32.mxu0 0.0
    %909 = vmatmul.mubr.f32.gmra.mrb[0].mxu0 %v842
    %v910 = vpop.f32.mrb[0].mxu0
    %v911 = vadd.f32 %v152, %v910
    %v912 = vpop.f32.mrb[0].mxu0
    %913 = vdwg.mxu0
    %v914 = vmax.f32 %v911, 0.0
    %v916 = vsel %vm235, %v914, 0
    %918 = vmatprep.subr.mxu0 0.0
    %919 = vmatpush1.msra.mxu0 %v131
    %920 = vmatprep.subr.mxu0 0.0
    %921 = vmatpush1.msra.mxu0 %v132
    %922 = vmatprep.subr.mxu0 0.0
    %923 = vmatpush1.msra.mxu0 %v133
    %924 = vmatprep.subr.mxu0 0.0
    %925 = vmatpush1.msra.mxu0 %v134
    %926 = vmatprep.subr.mxu0 0.0
    %927 = vmatpush1.msra.mxu0 0.0
    %928 = vmatprep.subr.mxu0 0.0
    %929 = vmatpush1.msra.mxu0 0.0
    %930 = vmatprep.subr.mxu0 0.0
    %931 = vmatpush1.msra.mxu0 0.0
    %932 = vmatprep.subr.mxu0 0.0
    %933 = vmatpush1.msra.mxu0 0.0
    %934 = vmatprep.subr.mxu0 0.0
    %935 = vmatpush1.msra.mxu0 0.0
    %936 = vmatprep.subr.mxu0 0.0
    %937 = vmatpush1.msra.mxu0 0.0
    %938 = vmatprep.subr.mxu0 0.0
    %939 = vmatpush1.msra.mxu0 0.0
    %940 = vmatprep.subr.mxu0 0.0
    %941 = vmatpush1.msra.mxu0 0.0
    %942 = vmatprep.subr.mxu0 0.0
    %943 = vmatpush1.msra.mxu0 0.0
    %944 = vmatprep.subr.mxu0 0.0
    %945 = vmatpush1.msra.mxu0 0.0
    %946 = vmatprep.subr.mxu0 0.0
    %947 = vmatpush1.msra.mxu0 0.0
    %948 = vmatprep.subr.mxu0 0.0
    %949 = vmatpush1.msra.mxu0 0.0
    %950 = vmatprep.subr.mxu0 0.0
    %951 = vmatpush1.msra.mxu0 0.0
    %952 = vmatprep.subr.mxu0 0.0
    %953 = vmatpush1.msra.mxu0 0.0
    %954 = vmatprep.subr.mxu0 0.0
    %955 = vmatpush1.msra.mxu0 0.0
    %956 = vmatprep.subr.mxu0 0.0
    %957 = vmatpush1.msra.mxu0 0.0
    %958 = vmatprep.subr.mxu0 0.0
    %959 = vmatpush1.msra.mxu0 0.0
    %960 = vmatprep.subr.mxu0 0.0
    %961 = vmatpush1.msra.mxu0 0.0
    %962 = vmatprep.subr.mxu0 0.0
    %963 = vmatpush1.msra.mxu0 0.0
    %964 = vmatprep.subr.mxu0 0.0
    %965 = vmatpush1.msra.mxu0 0.0
    %966 = vmatprep.subr.mxu0 0.0
    %967 = vmatpush1.msra.mxu0 0.0
    %968 = vmatprep.subr.mxu0 0.0
    %969 = vmatpush1.msra.mxu0 0.0
    %970 = vmatprep.subr.mxu0 0.0
    %971 = vmatpush1.msra.mxu0 0.0
    %972 = vmatprep.subr.mxu0 0.0
    %973 = vmatpush1.msra.mxu0 0.0
    %974 = vmatprep.subr.mxu0 0.0
    %975 = vmatpush1.msra.mxu0 0.0
    %976 = vmatprep.subr.mxu0 0.0
    %977 = vmatpush1.msra.mxu0 0.0
    %978 = vmatprep.subr.mxu0 0.0
    %979 = vmatpush1.msra.mxu0 0.0
    %980 = vmatprep.subr.mxu0 0.0
    %981 = vmatpush1.msra.mxu0 0.0
    %982 = vmatprep.mubr.f32.mxu0 0.0
    %983 = vmatmul.mubr.f32.gmra.mrb[0].mxu0 %v916
    %v984 = vpop.f32.mrb[0].mxu0
    %v985 = vadd.f32 %v233, %v984
    %v986 = vpop.f32.mrb[0].mxu0
    %987 = vdwg.mxu0
    %988 = vmatprep.subr.mxu0 0.0
    %989 = vmatpush1.msra.mxu0 %v136
    %990 = vmatprep.subr.mxu0 0.0
    %991 = vmatpush1.msra.mxu0 %v137
    %992 = vmatprep.subr.mxu0 0.0
    %993 = vmatpush1.msra.mxu0 %v138
    %994 = vmatprep.subr.mxu0 0.0
    %995 = vmatpush1.msra.mxu0 %v139
    %996 = vmatprep.subr.mxu0 0.0
    %997 = vmatpush1.msra.mxu0 0.0
    %998 = vmatprep.subr.mxu0 0.0
    %999 = vmatpush1.msra.mxu0 0.0
    %1000 = vmatprep.subr.mxu0 0.0
    %1001 = vmatpush1.msra.mxu0 0.0
    %1002 = vmatprep.subr.mxu0 0.0
    %1003 = vmatpush1.msra.mxu0 0.0
    %1004 = vmatprep.subr.mxu0 0.0
    %1005 = vmatpush1.msra.mxu0 0.0
    %1006 = vmatprep.subr.mxu0 0.0
    %1007 = vmatpush1.msra.mxu0 0.0
    %1008 = vmatprep.subr.mxu0 0.0
    %1009 = vmatpush1.msra.mxu0 0.0
    %1010 = vmatprep.subr.mxu0 0.0
    %1011 = vmatpush1.msra.mxu0 0.0
    %1012 = vmatprep.subr.mxu0 0.0
    %1013 = vmatpush1.msra.mxu0 0.0
    %1014 = vmatprep.subr.mxu0 0.0
    %1015 = vmatpush1.msra.mxu0 0.0
    %1016 = vmatprep.subr.mxu0 0.0
    %1017 = vmatpush1.msra.mxu0 0.0
    %1018 = vmatprep.subr.mxu0 0.0
    %1019 = vmatpush1.msra.mxu0 0.0
    %1020 = vmatprep.subr.mxu0 0.0
    %1021 = vmatpush1.msra.mxu0 0.0
    %1022 = vmatprep.subr.mxu0 0.0
    %1023 = vmatpush1.msra.mxu0 0.0
    %1024 = vmatprep.subr.mxu0 0.0
    %1025 = vmatpush1.msra.mxu0 0.0
    %1026 = vmatprep.subr.mxu0 0.0
    %1027 = vmatpush1.msra.mxu0 0.0
    %1028 = vmatprep.subr.mxu0 0.0
    %1029 = vmatpush1.msra.mxu0 0.0
    %1030 = vmatprep.subr.mxu0 0.0
    %1031 = vmatpush1.msra.mxu0 0.0
    %1032 = vmatprep.subr.mxu0 0.0
    %1033 = vmatpush1.msra.mxu0 0.0
    %1034 = vmatprep.subr.mxu0 0.0
    %1035 = vmatpush1.msra.mxu0 0.0
    %1036 = vmatprep.subr.mxu0 0.0
    %1037 = vmatpush1.msra.mxu0 0.0
    %1038 = vmatprep.subr.mxu0 0.0
    %1039 = vmatpush1.msra.mxu0 0.0
    %1040 = vmatprep.subr.mxu0 0.0
    %1041 = vmatpush1.msra.mxu0 0.0
    %1042 = vmatprep.subr.mxu0 0.0
    %1043 = vmatpush1.msra.mxu0 0.0
    %1044 = vmatprep.subr.mxu0 0.0
    %1045 = vmatpush1.msra.mxu0 0.0
    %1046 = vmatprep.subr.mxu0 0.0
    %1047 = vmatpush1.msra.mxu0 0.0
    %1048 = vmatprep.subr.mxu0 0.0
    %1049 = vmatpush1.msra.mxu0 0.0
    %1050 = vmatprep.subr.mxu0 0.0
    %1051 = vmatpush1.msra.mxu0 0.0
    %1052 = vmatprep.mubr.f32.mxu0 0.0
    %1053 = vmatmul.mubr.f32.gmra.mrb[0].mxu0 %v756
    %v1054 = vpop.f32.mrb[0].mxu0
    %v1055 = vadd.f32 %v313, %v1054
    %v1056 = vpop.f32.mrb[0].mxu0
    %1057 = vdwg.mxu0
    %v1058 = vadd.f32 %v985, %v1055
    %v1059 = vxor.u32 %v1058, 2147483648
    %v1060 = vmul.f32 %v1059, 1.442695
    %v1061 = vpow.pop %v1060
    %v1062 = vadd.f32 %v1061, 1.0
    %v1063 = vrcp.pop %v1062
    %v1064 = vmul.f32 1.0, %v1063
    %1066 = vrot.lane.b32.xlu0 %v1055, 64
    %v1067 = vpop.permute.xlu0 %1066
    %v1069 = vmul.f32 %v1064, %v1067
    %1071 = vrot.lane.b32.xlu0 %v1069, 64
    %v1072 = vpop.permute.xlu0 %1071
    %v1074 = vadd.f32 %v985, %v1072
    %v1075 = vtanh.pop %v1074
    %v1076 = vsub.f32 1.0, %v1064
    %1078 = vrot.lane.b32.xlu0 %v1075, 96
    %v1079 = vpop.permute.xlu0 %1078
    %v1081 = vmul.f32 %v1076, %v1079
    %v1082 = vmul.f32 %v1064, %v752
    %v1083 = vadd.f32 %v1081, %v1082
    %1085 = vrot.lane.b32.xlu0 %v1083, 96
    %v1086 = vpop.permute.xlu0 %1085
    %v1087 = vsel %vm235, %v1086, 0
    %1089 = vmatprep.subr.mxu0 0.0
    %1090 = vmatpush1.msra.mxu0 %v141
    %1091 = vmatprep.subr.mxu0 0.0
    %1092 = vmatpush1.msra.mxu0 %v142
    %1093 = vmatprep.subr.mxu0 0.0
    %1094 = vmatpush1.msra.mxu0 %v143
    %1095 = vmatprep.subr.mxu0 0.0
    %1096 = vmatpush1.msra.mxu0 %v144
    %1097 = vmatprep.subr.mxu0 0.0
    %1098 = vmatpush1.msra.mxu0 0.0
    %1099 = vmatprep.subr.mxu0 0.0
    %1100 = vmatpush1.msra.mxu0 0.0
    %1101 = vmatprep.subr.mxu0 0.0
    %1102 = vmatpush1.msra.mxu0 0.0
    %1103 = vmatprep.subr.mxu0 0.0
    %1104 = vmatpush1.msra.mxu0 0.0
    %1105 = vmatprep.subr.mxu0 0.0
    %1106 = vmatpush1.msra.mxu0 0.0
    %1107 = vmatprep.subr.mxu0 0.0
    %1108 = vmatpush1.msra.mxu0 0.0
    %1109 = vmatprep.subr.mxu0 0.0
    %1110 = vmatpush1.msra.mxu0 0.0
    %1111 = vmatprep.subr.mxu0 0.0
    %1112 = vmatpush1.msra.mxu0 0.0
    %1113 = vmatprep.subr.mxu0 0.0
    %1114 = vmatpush1.msra.mxu0 0.0
    %1115 = vmatprep.subr.mxu0 0.0
    %1116 = vmatpush1.msra.mxu0 0.0
    %1117 = vmatprep.subr.mxu0 0.0
    %1118 = vmatpush1.msra.mxu0 0.0
    %1119 = vmatprep.subr.mxu0 0.0
    %1120 = vmatpush1.msra.mxu0 0.0
    %1121 = vmatprep.subr.mxu0 0.0
    %1122 = vmatpush1.msra.mxu0 0.0
    %1123 = vmatprep.subr.mxu0 0.0
    %1124 = vmatpush1.msra.mxu0 0.0
    %1125 = vmatprep.subr.mxu0 0.0
    %1126 = vmatpush1.msra.mxu0 0.0
    %1127 = vmatprep.subr.mxu0 0.0
    %1128 = vmatpush1.msra.mxu0 0.0
    %1129 = vmatprep.subr.mxu0 0.0
    %1130 = vmatpush1.msra.mxu0 0.0
    %1131 = vmatprep.subr.mxu0 0.0
    %1132 = vmatpush1.msra.mxu0 0.0
    %1133 = vmatprep.subr.mxu0 0.0
    %1134 = vmatpush1.msra.mxu0 0.0
    %1135 = vmatprep.subr.mxu0 0.0
    %1136 = vmatpush1.msra.mxu0 0.0
    %1137 = vmatprep.subr.mxu0 0.0
    %1138 = vmatpush1.msra.mxu0 0.0
    %1139 = vmatprep.subr.mxu0 0.0
    %1140 = vmatpush1.msra.mxu0 0.0
    %1141 = vmatprep.subr.mxu0 0.0
    %1142 = vmatpush1.msra.mxu0 0.0
    %1143 = vmatprep.subr.mxu0 0.0
    %1144 = vmatpush1.msra.mxu0 0.0
    %1145 = vmatprep.subr.mxu0 0.0
    %1146 = vmatpush1.msra.mxu0 0.0
    %1147 = vmatprep.subr.mxu0 0.0
    %1148 = vmatpush1.msra.mxu0 0.0
    %1149 = vmatprep.subr.mxu0 0.0
    %1150 = vmatpush1.msra.mxu0 0.0
    %1151 = vmatprep.subr.mxu0 0.0
    %1152 = vmatpush1.msra.mxu0 0.0
    %1153 = vmatprep.mubr.f32.mxu0 0.0
    %1154 = vmatmul.mubr.f32.gmra.mrb[0].mxu0 %v1087
    %v1155 = vpop.f32.mrb[0].mxu0
    %v1156 = vadd.f32 %v421, %v1155
    %v1157 = vpop.f32.mrb[0].mxu0
    %1158 = vdwg.mxu0
    %1159 = vmax.xlane.f32.xlu0 %v1156
    %v1160 = vpop.xlane.xlu0 %1159
    %v1161 = vsub.f32 %v1156, %v1160
    %v1162 = vmul.f32 %v1161, 1.442695
    %v1163 = vpow.pop %v1162
    %1164 = vadd.xlane.f32.xlu0 %v1163
    %v1165 = vpop.xlane.xlu0 %1164
    %v1166 = vrcp.pop %v1165
    %v1167 = vmul.f32 %v1163, %v1166
    %s1168 = scalar_lea.vmem [#allocation14], 16
    %1169 = vst [vmem:[%s1168] sm:$0xff] %v1167
    %s1170 = scalar_lea.vmem [#allocation2], 24
    %v1171 = vld [vmem:[%s1170] sm:$0xff]
    %v1173 = vsel %vm154, %v1171, 0
    %1175 = vmatprep.subr.mxu0 0.0
    %1176 = vmatpush1.msra.mxu0 %v128
    %1177 = vmatprep.subr.mxu0 0.0
    %1178 = vmatpush1.msra.mxu0 %v129
    %1179 = vmatprep.subr.mxu0 0.0
    %1180 = vmatpush1.msra.mxu0 0.0
    %1181 = vmatprep.subr.mxu0 0.0
    %1182 = vmatpush1.msra.mxu0 0.0
    %1183 = vmatprep.subr.mxu0 0.0
    %1184 = vmatpush1.msra.mxu0 0.0
    %1185 = vmatprep.subr.mxu0 0.0
    %1186 = vmatpush1.msra.mxu0 0.0
    %1187 = vmatprep.subr.mxu0 0.0
    %1188 = vmatpush1.msra.mxu0 0.0
    %1189 = vmatprep.subr.mxu0 0.0
    %1190 = vmatpush1.msra.mxu0 0.0
    %1191 = vmatprep.subr.mxu0 0.0
    %1192 = vmatpush1.msra.mxu0 0.0
    %1193 = vmatprep.subr.mxu0 0.0
    %1194 = vmatpush1.msra.mxu0 0.0
    %1195 = vmatprep.subr.mxu0 0.0
    %1196 = vmatpush1.msra.mxu0 0.0
    %1197 = vmatprep.subr.mxu0 0.0
    %1198 = vmatpush1.msra.mxu0 0.0
    %1199 = vmatprep.subr.mxu0 0.0
    %1200 = vmatpush1.msra.mxu0 0.0
    %1201 = vmatprep.subr.mxu0 0.0
    %1202 = vmatpush1.msra.mxu0 0.0
    %1203 = vmatprep.subr.mxu0 0.0
    %1204 = vmatpush1.msra.mxu0 0.0
    %1205 = vmatprep.subr.mxu0 0.0
    %1206 = vmatpush1.msra.mxu0 0.0
    %1207 = vmatprep.subr.mxu0 0.0
    %1208 = vmatpush1.msra.mxu0 0.0
    %1209 = vmatprep.subr.mxu0 0.0
    %1210 = vmatpush1.msra.mxu0 0.0
    %1211 = vmatprep.subr.mxu0 0.0
    %1212 = vmatpush1.msra.mxu0 0.0
    %1213 = vmatprep.subr.mxu0 0.0
    %1214 = vmatpush1.msra.mxu0 0.0
    %1215 = vmatprep.subr.mxu0 0.0
    %1216 = vmatpush1.msra.mxu0 0.0
    %1217 = vmatprep.subr.mxu0 0.0
    %1218 = vmatpush1.msra.mxu0 0.0
    %1219 = vmatprep.subr.mxu0 0.0
    %1220 = vmatpush1.msra.mxu0 0.0
    %1221 = vmatprep.subr.mxu0 0.0
    %1222 = vmatpush1.msra.mxu0 0.0
    %1223 = vmatprep.subr.mxu0 0.0
    %1224 = vmatpush1.msra.mxu0 0.0
    %1225 = vmatprep.subr.mxu0 0.0
    %1226 = vmatpush1.msra.mxu0 0.0
    %1227 = vmatprep.subr.mxu0 0.0
    %1228 = vmatpush1.msra.mxu0 0.0
    %1229 = vmatprep.subr.mxu0 0.0
    %1230 = vmatpush1.msra.mxu0 0.0
    %1231 = vmatprep.subr.mxu0 0.0
    %1232 = vmatpush1.msra.mxu0 0.0
    %1233 = vmatprep.subr.mxu0 0.0
    %1234 = vmatpush1.msra.mxu0 0.0
    %1235 = vmatprep.subr.mxu0 0.0
    %1236 = vmatpush1.msra.mxu0 0.0
    %1237 = vmatprep.subr.mxu0 0.0
    %1238 = vmatpush1.msra.mxu0 0.0
    %1239 = vmatprep.mubr.f32.mxu0 0.0
    %1240 = vmatmul.mubr.f32.gmra.mrb[0].mxu0 %v1173
    %v1241 = vpop.f32.mrb[0].mxu0
    %v1242 = vadd.f32 %v152, %v1241
    %v1243 = vpop.f32.mrb[0].mxu0
    %1244 = vdwg.mxu0
    %v1245 = vmax.f32 %v1242, 0.0
    %v1247 = vsel %vm235, %v1245, 0
    %1249 = vmatprep.subr.mxu0 0.0
    %1250 = vmatpush1.msra.mxu0 %v131
    %1251 = vmatprep.subr.mxu0 0.0
    %1252 = vmatpush1.msra.mxu0 %v132
    %1253 = vmatprep.subr.mxu0 0.0
    %1254 = vmatpush1.msra.mxu0 %v133
    %1255 = vmatprep.subr.mxu0 0.0
    %1256 = vmatpush1.msra.mxu0 %v134
    %1257 = vmatprep.subr.mxu0 0.0
    %1258 = vmatpush1.msra.mxu0 0.0
    %1259 = vmatprep.subr.mxu0 0.0
    %1260 = vmatpush1.msra.mxu0 0.0
    %1261 = vmatprep.subr.mxu0 0.0
    %1262 = vmatpush1.msra.mxu0 0.0
    %1263 = vmatprep.subr.mxu0 0.0
    %1264 = vmatpush1.msra.mxu0 0.0
    %1265 = vmatprep.subr.mxu0 0.0
    %1266 = vmatpush1.msra.mxu0 0.0
    %1267 = vmatprep.subr.mxu0 0.0
    %1268 = vmatpush1.msra.mxu0 0.0
    %1269 = vmatprep.subr.mxu0 0.0
    %1270 = vmatpush1.msra.mxu0 0.0
    %1271 = vmatprep.subr.mxu0 0.0
    %1272 = vmatpush1.msra.mxu0 0.0
    %1273 = vmatprep.subr.mxu0 0.0
    %1274 = vmatpush1.msra.mxu0 0.0
    %1275 = vmatprep.subr.mxu0 0.0
    %1276 = vmatpush1.msra.mxu0 0.0
    %1277 = vmatprep.subr.mxu0 0.0
    %1278 = vmatpush1.msra.mxu0 0.0
    %1279 = vmatprep.subr.mxu0 0.0
    %1280 = vmatpush1.msra.mxu0 0.0
    %1281 = vmatprep.subr.mxu0 0.0
    %1282 = vmatpush1.msra.mxu0 0.0
    %1283 = vmatprep.subr.mxu0 0.0
    %1284 = vmatpush1.msra.mxu0 0.0
    %1285 = vmatprep.subr.mxu0 0.0
    %1286 = vmatpush1.msra.mxu0 0.0
    %1287 = vmatprep.subr.mxu0 0.0
    %1288 = vmatpush1.msra.mxu0 0.0
    %1289 = vmatprep.subr.mxu0 0.0
    %1290 = vmatpush1.msra.mxu0 0.0
    %1291 = vmatprep.subr.mxu0 0.0
    %1292 = vmatpush1.msra.mxu0 0.0
    %1293 = vmatprep.subr.mxu0 0.0
    %1294 = vmatpush1.msra.mxu0 0.0
    %1295 = vmatprep.subr.mxu0 0.0
    %1296 = vmatpush1.msra.mxu0 0.0
    %1297 = vmatprep.subr.mxu0 0.0
    %1298 = vmatpush1.msra.mxu0 0.0
    %1299 = vmatprep.subr.mxu0 0.0
    %1300 = vmatpush1.msra.mxu0 0.0
    %1301 = vmatprep.subr.mxu0 0.0
    %1302 = vmatpush1.msra.mxu0 0.0
    %1303 = vmatprep.subr.mxu0 0.0
    %1304 = vmatpush1.msra.mxu0 0.0
    %1305 = vmatprep.subr.mxu0 0.0
    %1306 = vmatpush1.msra.mxu0 0.0
    %1307 = vmatprep.subr.mxu0 0.0
    %1308 = vmatpush1.msra.mxu0 0.0
    %1309 = vmatprep.subr.mxu0 0.0
    %1310 = vmatpush1.msra.mxu0 0.0
    %1311 = vmatprep.subr.mxu0 0.0
    %1312 = vmatpush1.msra.mxu0 0.0
    %1313 = vmatprep.mubr.f32.mxu0 0.0
    %1314 = vmatmul.mubr.f32.gmra.mrb[0].mxu0 %v1247
    %v1315 = vpop.f32.mrb[0].mxu0
    %v1316 = vadd.f32 %v233, %v1315
    %v1317 = vpop.f32.mrb[0].mxu0
    %1318 = vdwg.mxu0
    %1319 = vmatprep.subr.mxu0 0.0
    %1320 = vmatpush1.msra.mxu0 %v136
    %1321 = vmatprep.subr.mxu0 0.0
    %1322 = vmatpush1.msra.mxu0 %v137
    %1323 = vmatprep.subr.mxu0 0.0
    %1324 = vmatpush1.msra.mxu0 %v138
    %1325 = vmatprep.subr.mxu0 0.0
    %1326 = vmatpush1.msra.mxu0 %v139
    %1327 = vmatprep.subr.mxu0 0.0
    %1328 = vmatpush1.msra.mxu0 0.0
    %1329 = vmatprep.subr.mxu0 0.0
    %1330 = vmatpush1.msra.mxu0 0.0
    %1331 = vmatprep.subr.mxu0 0.0
    %1332 = vmatpush1.msra.mxu0 0.0
    %1333 = vmatprep.subr.mxu0 0.0
    %1334 = vmatpush1.msra.mxu0 0.0
    %1335 = vmatprep.subr.mxu0 0.0
    %1336 = vmatpush1.msra.mxu0 0.0
    %1337 = vmatprep.subr.mxu0 0.0
    %1338 = vmatpush1.msra.mxu0 0.0
    %1339 = vmatprep.subr.mxu0 0.0
    %1340 = vmatpush1.msra.mxu0 0.0
    %1341 = vmatprep.subr.mxu0 0.0
    %1342 = vmatpush1.msra.mxu0 0.0
    %1343 = vmatprep.subr.mxu0 0.0
    %1344 = vmatpush1.msra.mxu0 0.0
    %1345 = vmatprep.subr.mxu0 0.0
    %1346 = vmatpush1.msra.mxu0 0.0
    %1347 = vmatprep.subr.mxu0 0.0
    %1348 = vmatpush1.msra.mxu0 0.0
    %1349 = vmatprep.subr.mxu0 0.0
    %1350 = vmatpush1.msra.mxu0 0.0
    %1351 = vmatprep.subr.mxu0 0.0
    %1352 = vmatpush1.msra.mxu0 0.0
    %1353 = vmatprep.subr.mxu0 0.0
    %1354 = vmatpush1.msra.mxu0 0.0
    %1355 = vmatprep.subr.mxu0 0.0
    %1356 = vmatpush1.msra.mxu0 0.0
    %1357 = vmatprep.subr.mxu0 0.0
    %1358 = vmatpush1.msra.mxu0 0.0
    %1359 = vmatprep.subr.mxu0 0.0
    %1360 = vmatpush1.msra.mxu0 0.0
    %1361 = vmatprep.subr.mxu0 0.0
    %1362 = vmatpush1.msra.mxu0 0.0
    %1363 = vmatprep.subr.mxu0 0.0
    %1364 = vmatpush1.msra.mxu0 0.0
    %1365 = vmatprep.subr.mxu0 0.0
    %1366 = vmatpush1.msra.mxu0 0.0
    %1367 = vmatprep.subr.mxu0 0.0
    %1368 = vmatpush1.msra.mxu0 0.0
    %1369 = vmatprep.subr.mxu0 0.0
    %1370 = vmatpush1.msra.mxu0 0.0
    %1371 = vmatprep.subr.mxu0 0.0
    %1372 = vmatpush1.msra.mxu0 0.0
    %1373 = vmatprep.subr.mxu0 0.0
    %1374 = vmatpush1.msra.mxu0 0.0
    %1375 = vmatprep.subr.mxu0 0.0
    %1376 = vmatpush1.msra.mxu0 0.0
    %1377 = vmatprep.subr.mxu0 0.0
    %1378 = vmatpush1.msra.mxu0 0.0
    %1379 = vmatprep.subr.mxu0 0.0
    %1380 = vmatpush1.msra.mxu0 0.0
    %1381 = vmatprep.subr.mxu0 0.0
    %1382 = vmatpush1.msra.mxu0 0.0
    %1383 = vmatprep.mubr.f32.mxu0 0.0
    %1384 = vmatmul.mubr.f32.gmra.mrb[0].mxu0 %v1087
    %v1385 = vpop.f32.mrb[0].mxu0
    %v1386 = vadd.f32 %v313, %v1385
    %v1387 = vpop.f32.mrb[0].mxu0
    %1388 = vdwg.mxu0
    %v1389 = vadd.f32 %v1316, %v1386
    %v1390 = vxor.u32 %v1389, 2147483648
    %v1391 = vmul.f32 %v1390, 1.442695
    %v1392 = vpow.pop %v1391
    %v1393 = vadd.f32 %v1392, 1.0
    %v1394 = vrcp.pop %v1393
    %v1395 = vmul.f32 1.0, %v1394
    %1397 = vrot.lane.b32.xlu0 %v1386, 64
    %v1398 = vpop.permute.xlu0 %1397
    %v1400 = vmul.f32 %v1395, %v1398
    %1402 = vrot.lane.b32.xlu0 %v1400, 64
    %v1403 = vpop.permute.xlu0 %1402
    %v1405 = vadd.f32 %v1316, %v1403
    %v1406 = vtanh.pop %v1405
    %v1407 = vsub.f32 1.0, %v1395
    %1409 = vrot.lane.b32.xlu0 %v1406, 96
    %v1410 = vpop.permute.xlu0 %1409
    %v1412 = vmul.f32 %v1407, %v1410
    %v1413 = vmul.f32 %v1395, %v1083
    %v1414 = vadd.f32 %v1412, %v1413
    %1416 = vrot.lane.b32.xlu0 %v1414, 96
    %v1417 = vpop.permute.xlu0 %1416
    %v1418 = vsel %vm235, %v1417, 0
    %1420 = vmatprep.subr.mxu0 0.0
    %1421 = vmatpush1.msra.mxu0 %v141
    %1422 = vmatprep.subr.mxu0 0.0
    %1423 = vmatpush1.msra.mxu0 %v142
    %1424 = vmatprep.subr.mxu0 0.0
    %1425 = vmatpush1.msra.mxu0 %v143
    %1426 = vmatprep.subr.mxu0 0.0
    %1427 = vmatpush1.msra.mxu0 %v144
    %1428 = vmatprep.subr.mxu0 0.0
    %1429 = vmatpush1.msra.mxu0 0.0
    %1430 = vmatprep.subr.mxu0 0.0
    %1431 = vmatpush1.msra.mxu0 0.0
    %1432 = vmatprep.subr.mxu0 0.0
    %1433 = vmatpush1.msra.mxu0 0.0
    %1434 = vmatprep.subr.mxu0 0.0
    %1435 = vmatpush1.msra.mxu0 0.0
    %1436 = vmatprep.subr.mxu0 0.0
    %1437 = vmatpush1.msra.mxu0 0.0
    %1438 = vmatprep.subr.mxu0 0.0
    %1439 = vmatpush1.msra.mxu0 0.0
    %1440 = vmatprep.subr.mxu0 0.0
    %1441 = vmatpush1.msra.mxu0 0.0
    %1442 = vmatprep.subr.mxu0 0.0
    %1443 = vmatpush1.msra.mxu0 0.0
    %1444 = vmatprep.subr.mxu0 0.0
    %1445 = vmatpush1.msra.mxu0 0.0
    %1446 = vmatprep.subr.mxu0 0.0
    %1447 = vmatpush1.msra.mxu0 0.0
    %1448 = vmatprep.subr.mxu0 0.0
    %1449 = vmatpush1.msra.mxu0 0.0
    %1450 = vmatprep.subr.mxu0 0.0
    %1451 = vmatpush1.msra.mxu0 0.0
    %1452 = vmatprep.subr.mxu0 0.0
    %1453 = vmatpush1.msra.mxu0 0.0
    %1454 = vmatprep.subr.mxu0 0.0
    %1455 = vmatpush1.msra.mxu0 0.0
    %1456 = vmatprep.subr.mxu0 0.0
    %1457 = vmatpush1.msra.mxu0 0.0
    %1458 = vmatprep.subr.mxu0 0.0
    %1459 = vmatpush1.msra.mxu0 0.0
    %1460 = vmatprep.subr.mxu0 0.0
    %1461 = vmatpush1.msra.mxu0 0.0
    %1462 = vmatprep.subr.mxu0 0.0
    %1463 = vmatpush1.msra.mxu0 0.0
    %1464 = vmatprep.subr.mxu0 0.0
    %1465 = vmatpush1.msra.mxu0 0.0
    %1466 = vmatprep.subr.mxu0 0.0
    %1467 = vmatpush1.msra.mxu0 0.0
    %1468 = vmatprep.subr.mxu0 0.0
    %1469 = vmatpush1.msra.mxu0 0.0
    %1470 = vmatprep.subr.mxu0 0.0
    %1471 = vmatpush1.msra.mxu0 0.0
    %1472 = vmatprep.subr.mxu0 0.0
    %1473 = vmatpush1.msra.mxu0 0.0
    %1474 = vmatprep.subr.mxu0 0.0
    %1475 = vmatpush1.msra.mxu0 0.0
    %1476 = vmatprep.subr.mxu0 0.0
    %1477 = vmatpush1.msra.mxu0 0.0
    %1478 = vmatprep.subr.mxu0 0.0
    %1479 = vmatpush1.msra.mxu0 0.0
    %1480 = vmatprep.subr.mxu0 0.0
    %1481 = vmatpush1.msra.mxu0 0.0
    %1482 = vmatprep.subr.mxu0 0.0
    %1483 = vmatpush1.msra.mxu0 0.0
    %1484 = vmatprep.mubr.f32.mxu0 0.0
    %1485 = vmatmul.mubr.f32.gmra.mrb[0].mxu0 %v1418
    %v1486 = vpop.f32.mrb[0].mxu0
    %v1487 = vadd.f32 %v421, %v1486
    %v1488 = vpop.f32.mrb[0].mxu0
    %1489 = vdwg.mxu0
    %1490 = vmax.xlane.f32.xlu0 %v1487
    %v1491 = vpop.xlane.xlu0 %1490
    %v1492 = vsub.f32 %v1487, %v1491
    %v1493 = vmul.f32 %v1492, 1.442695
    %v1494 = vpow.pop %v1493
    %1495 = vadd.xlane.f32.xlu0 %v1494
    %v1496 = vpop.xlane.xlu0 %1495
    %v1497 = vrcp.pop %v1496
    %v1498 = vmul.f32 %v1494, %v1497
    %s1499 = scalar_lea.vmem [#allocation14], 24
    %1500 = vst [vmem:[%s1499] sm:$0xff] %v1498
    %s1501 = scalar_lea.vmem [#allocation2], 32
    %v1502 = vld [vmem:[%s1501] sm:$0xff]
    %v1504 = vsel %vm154, %v1502, 0
    %1506 = vmatprep.subr.mxu0 0.0
    %1507 = vmatpush1.msra.mxu0 %v128
    %1508 = vmatprep.subr.mxu0 0.0
    %1509 = vmatpush1.msra.mxu0 %v129
    %1510 = vmatprep.subr.mxu0 0.0
    %1511 = vmatpush1.msra.mxu0 0.0
    %1512 = vmatprep.subr.mxu0 0.0
    %1513 = vmatpush1.msra.mxu0 0.0
    %1514 = vmatprep.subr.mxu0 0.0
    %1515 = vmatpush1.msra.mxu0 0.0
    %1516 = vmatprep.subr.mxu0 0.0
    %1517 = vmatpush1.msra.mxu0 0.0
    %1518 = vmatprep.subr.mxu0 0.0
    %1519 = vmatpush1.msra.mxu0 0.0
    %1520 = vmatprep.subr.mxu0 0.0
    %1521 = vmatpush1.msra.mxu0 0.0
    %1522 = vmatprep.subr.mxu0 0.0
    %1523 = vmatpush1.msra.mxu0 0.0
    %1524 = vmatprep.subr.mxu0 0.0
    %1525 = vmatpush1.msra.mxu0 0.0
    %1526 = vmatprep.subr.mxu0 0.0
    %1527 = vmatpush1.msra.mxu0 0.0
    %1528 = vmatprep.subr.mxu0 0.0
    %1529 = vmatpush1.msra.mxu0 0.0
    %1530 = vmatprep.subr.mxu0 0.0
    %1531 = vmatpush1.msra.mxu0 0.0
    %1532 = vmatprep.subr.mxu0 0.0
    %1533 = vmatpush1.msra.mxu0 0.0
    %1534 = vmatprep.subr.mxu0 0.0
    %1535 = vmatpush1.msra.mxu0 0.0
    %1536 = vmatprep.subr.mxu0 0.0
    %1537 = vmatpush1.msra.mxu0 0.0
    %1538 = vmatprep.subr.mxu0 0.0
    %1539 = vmatpush1.msra.mxu0 0.0
    %1540 = vmatprep.subr.mxu0 0.0
    %1541 = vmatpush1.msra.mxu0 0.0
    %1542 = vmatprep.subr.mxu0 0.0
    %1543 = vmatpush1.msra.mxu0 0.0
    %1544 = vmatprep.subr.mxu0 0.0
    %1545 = vmatpush1.msra.mxu0 0.0
    %1546 = vmatprep.subr.mxu0 0.0
    %1547 = vmatpush1.msra.mxu0 0.0
    %1548 = vmatprep.subr.mxu0 0.0
    %1549 = vmatpush1.msra.mxu0 0.0
    %1550 = vmatprep.subr.mxu0 0.0
    %1551 = vmatpush1.msra.mxu0 0.0
    %1552 = vmatprep.subr.mxu0 0.0
    %1553 = vmatpush1.msra.mxu0 0.0
    %1554 = vmatprep.subr.mxu0 0.0
    %1555 = vmatpush1.msra.mxu0 0.0
    %1556 = vmatprep.subr.mxu0 0.0
    %1557 = vmatpush1.msra.mxu0 0.0
    %1558 = vmatprep.subr.mxu0 0.0
    %1559 = vmatpush1.msra.mxu0 0.0
    %1560 = vmatprep.subr.mxu0 0.0
    %1561 = vmatpush1.msra.mxu0 0.0
    %1562 = vmatprep.subr.mxu0 0.0
    %1563 = vmatpush1.msra.mxu0 0.0
    %1564 = vmatprep.subr.mxu0 0.0
    %1565 = vmatpush1.msra.mxu0 0.0
    %1566 = vmatprep.subr.mxu0 0.0
    %1567 = vmatpush1.msra.mxu0 0.0
    %1568 = vmatprep.subr.mxu0 0.0
    %1569 = vmatpush1.msra.mxu0 0.0
    %1570 = vmatprep.mubr.f32.mxu0 0.0
    %1571 = vmatmul.mubr.f32.gmra.mrb[0].mxu0 %v1504
    %v1572 = vpop.f32.mrb[0].mxu0
    %v1573 = vadd.f32 %v152, %v1572
    %v1574 = vpop.f32.mrb[0].mxu0
    %1575 = vdwg.mxu0
    %v1576 = vmax.f32 %v1573, 0.0
    %v1578 = vsel %vm235, %v1576, 0
    %1580 = vmatprep.subr.mxu0 0.0
    %1581 = vmatpush1.msra.mxu0 %v131
    %1582 = vmatprep.subr.mxu0 0.0
    %1583 = vmatpush1.msra.mxu0 %v132
    %1584 = vmatprep.subr.mxu0 0.0
    %1585 = vmatpush1.msra.mxu0 %v133
    %1586 = vmatprep.subr.mxu0 0.0
    %1587 = vmatpush1.msra.mxu0 %v134
    %1588 = vmatprep.subr.mxu0 0.0
    %1589 = vmatpush1.msra.mxu0 0.0
    %1590 = vmatprep.subr.mxu0 0.0
    %1591 = vmatpush1.msra.mxu0 0.0
    %1592 = vmatprep.subr.mxu0 0.0
    %1593 = vmatpush1.msra.mxu0 0.0
    %1594 = vmatprep.subr.mxu0 0.0
    %1595 = vmatpush1.msra.mxu0 0.0
    %1596 = vmatprep.subr.mxu0 0.0
    %1597 = vmatpush1.msra.mxu0 0.0
    %1598 = vmatprep.subr.mxu0 0.0
    %1599 = vmatpush1.msra.mxu0 0.0
    %1600 = vmatprep.subr.mxu0 0.0
    %1601 = vmatpush1.msra.mxu0 0.0
    %1602 = vmatprep.subr.mxu0 0.0
    %1603 = vmatpush1.msra.mxu0 0.0
    %1604 = vmatprep.subr.mxu0 0.0
    %1605 = vmatpush1.msra.mxu0 0.0
    %1606 = vmatprep.subr.mxu0 0.0
    %1607 = vmatpush1.msra.mxu0 0.0
    %1608 = vmatprep.subr.mxu0 0.0
    %1609 = vmatpush1.msra.mxu0 0.0
    %1610 = vmatprep.subr.mxu0 0.0
    %1611 = vmatpush1.msra.mxu0 0.0
    %1612 = vmatprep.subr.mxu0 0.0
    %1613 = vmatpush1.msra.mxu0 0.0
    %1614 = vmatprep.subr.mxu0 0.0
    %1615 = vmatpush1.msra.mxu0 0.0
    %1616 = vmatprep.subr.mxu0 0.0
    %1617 = vmatpush1.msra.mxu0 0.0
    %1618 = vmatprep.subr.mxu0 0.0
    %1619 = vmatpush1.msra.mxu0 0.0
    %1620 = vmatprep.subr.mxu0 0.0
    %1621 = vmatpush1.msra.mxu0 0.0
    %1622 = vmatprep.subr.mxu0 0.0
    %1623 = vmatpush1.msra.mxu0 0.0
    %1624 = vmatprep.subr.mxu0 0.0
    %1625 = vmatpush1.msra.mxu0 0.0
    %1626 = vmatprep.subr.mxu0 0.0
    %1627 = vmatpush1.msra.mxu0 0.0
    %1628 = vmatprep.subr.mxu0 0.0
    %1629 = vmatpush1.msra.mxu0 0.0
    %1630 = vmatprep.subr.mxu0 0.0
    %1631 = vmatpush1.msra.mxu0 0.0
    %1632 = vmatprep.subr.mxu0 0.0
    %1633 = vmatpush1.msra.mxu0 0.0
    %1634 = vmatprep.subr.mxu0 0.0
    %1635 = vmatpush1.msra.mxu0 0.0
    %1636 = vmatprep.subr.mxu0 0.0
    %1637 = vmatpush1.msra.mxu0 0.0
    %1638 = vmatprep.subr.mxu0 0.0
    %1639 = vmatpush1.msra.mxu0 0.0
    %1640 = vmatprep.subr.mxu0 0.0
    %1641 = vmatpush1.msra.mxu0 0.0
    %1642 = vmatprep.subr.mxu0 0.0
    %1643 = vmatpush1.msra.mxu0 0.0
    %1644 = vmatprep.mubr.f32.mxu0 0.0
    %1645 = vmatmul.mubr.f32.gmra.mrb[0].mxu0 %v1578
    %v1646 = vpop.f32.mrb[0].mxu0
    %v1647 = vadd.f32 %v233, %v1646
    %v1648 = vpop.f32.mrb[0].mxu0
    %1649 = vdwg.mxu0
    %1650 = vmatprep.subr.mxu0 0.0
    %1651 = vmatpush1.msra.mxu0 %v136
    %1652 = vmatprep.subr.mxu0 0.0
    %1653 = vmatpush1.msra.mxu0 %v137
    %1654 = vmatprep.subr.mxu0 0.0
    %1655 = vmatpush1.msra.mxu0 %v138
    %1656 = vmatprep.subr.mxu0 0.0
    %1657 = vmatpush1.msra.mxu0 %v139
    %1658 = vmatprep.subr.mxu0 0.0
    %1659 = vmatpush1.msra.mxu0 0.0
    %1660 = vmatprep.subr.mxu0 0.0
    %1661 = vmatpush1.msra.mxu0 0.0
    %1662 = vmatprep.subr.mxu0 0.0
    %1663 = vmatpush1.msra.mxu0 0.0
    %1664 = vmatprep.subr.mxu0 0.0
    %1665 = vmatpush1.msra.mxu0 0.0
    %1666 = vmatprep.subr.mxu0 0.0
    %1667 = vmatpush1.msra.mxu0 0.0
    %1668 = vmatprep.subr.mxu0 0.0
    %1669 = vmatpush1.msra.mxu0 0.0
    %1670 = vmatprep.subr.mxu0 0.0
    %1671 = vmatpush1.msra.mxu0 0.0
    %1672 = vmatprep.subr.mxu0 0.0
    %1673 = vmatpush1.msra.mxu0 0.0
    %1674 = vmatprep.subr.mxu0 0.0
    %1675 = vmatpush1.msra.mxu0 0.0
    %1676 = vmatprep.subr.mxu0 0.0
    %1677 = vmatpush1.msra.mxu0 0.0
    %1678 = vmatprep.subr.mxu0 0.0
    %1679 = vmatpush1.msra.mxu0 0.0
    %1680 = vmatprep.subr.mxu0 0.0
    %1681 = vmatpush1.msra.mxu0 0.0
    %1682 = vmatprep.subr.mxu0 0.0
    %1683 = vmatpush1.msra.mxu0 0.0
    %1684 = vmatprep.subr.mxu0 0.0
    %1685 = vmatpush1.msra.mxu0 0.0
    %1686 = vmatprep.subr.mxu0 0.0
    %1687 = vmatpush1.msra.mxu0 0.0
    %1688 = vmatprep.subr.mxu0 0.0
    %1689 = vmatpush1.msra.mxu0 0.0
    %1690 = vmatprep.subr.mxu0 0.0
    %1691 = vmatpush1.msra.mxu0 0.0
    %1692 = vmatprep.subr.mxu0 0.0
    %1693 = vmatpush1.msra.mxu0 0.0
    %1694 = vmatprep.subr.mxu0 0.0
    %1695 = vmatpush1.msra.mxu0 0.0
    %1696 = vmatprep.subr.mxu0 0.0
    %1697 = vmatpush1.msra.mxu0 0.0
    %1698 = vmatprep.subr.mxu0 0.0
    %1699 = vmatpush1.msra.mxu0 0.0
    %1700 = vmatprep.subr.mxu0 0.0
    %1701 = vmatpush1.msra.mxu0 0.0
    %1702 = vmatprep.subr.mxu0 0.0
    %1703 = vmatpush1.msra.mxu0 0.0
    %1704 = vmatprep.subr.mxu0 0.0
    %1705 = vmatpush1.msra.mxu0 0.0
    %1706 = vmatprep.subr.mxu0 0.0
    %1707 = vmatpush1.msra.mxu0 0.0
    %1708 = vmatprep.subr.mxu0 0.0
    %1709 = vmatpush1.msra.mxu0 0.0
    %1710 = vmatprep.subr.mxu0 0.0
    %1711 = vmatpush1.msra.mxu0 0.0
    %1712 = vmatprep.subr.mxu0 0.0
    %1713 = vmatpush1.msra.mxu0 0.0
    %1714 = vmatprep.mubr.f32.mxu0 0.0
    %1715 = vmatmul.mubr.f32.gmra.mrb[0].mxu0 %v1418
    %v1716 = vpop.f32.mrb[0].mxu0
    %v1717 = vadd.f32 %v313, %v1716
    %v1718 = vpop.f32.mrb[0].mxu0
    %1719 = vdwg.mxu0
    %v1720 = vadd.f32 %v1647, %v1717
    %v1721 = vxor.u32 %v1720, 2147483648
    %v1722 = vmul.f32 %v1721, 1.442695
    %v1723 = vpow.pop %v1722
    %v1724 = vadd.f32 %v1723, 1.0
    %v1725 = vrcp.pop %v1724
    %v1726 = vmul.f32 1.0, %v1725
    %1728 = vrot.lane.b32.xlu0 %v1717, 64
    %v1729 = vpop.permute.xlu0 %1728
    %v1731 = vmul.f32 %v1726, %v1729
    %1733 = vrot.lane.b32.xlu0 %v1731, 64
    %v1734 = vpop.permute.xlu0 %1733
    %v1736 = vadd.f32 %v1647, %v1734
    %v1737 = vtanh.pop %v1736
    %v1738 = vsub.f32 1.0, %v1726
    %1740 = vrot.lane.b32.xlu0 %v1737, 96
    %v1741 = vpop.permute.xlu0 %1740
    %v1743 = vmul.f32 %v1738, %v1741
    %v1744 = vmul.f32 %v1726, %v1414
    %v1745 = vadd.f32 %v1743, %v1744
    %1747 = vrot.lane.b32.xlu0 %v1745, 96
    %v1748 = vpop.permute.xlu0 %1747
    %v1749 = vsel %vm235, %v1748, 0
    %1751 = vmatprep.subr.mxu0 0.0
    %1752 = vmatpush1.msra.mxu0 %v141
    %1753 = vmatprep.subr.mxu0 0.0
    %1754 = vmatpush1.msra.mxu0 %v142
    %1755 = vmatprep.subr.mxu0 0.0
    %1756 = vmatpush1.msra.mxu0 %v143
    %1757 = vmatprep.subr.mxu0 0.0
    %1758 = vmatpush1.msra.mxu0 %v144
    %1759 = vmatprep.subr.mxu0 0.0
    %1760 = vmatpush1.msra.mxu0 0.0
    %1761 = vmatprep.subr.mxu0 0.0
    %1762 = vmatpush1.msra.mxu0 0.0
    %1763 = vmatprep.subr.mxu0 0.0
    %1764 = vmatpush1.msra.mxu0 0.0
    %1765 = vmatprep.subr.mxu0 0.0
    %1766 = vmatpush1.msra.mxu0 0.0
    %1767 = vmatprep.subr.mxu0 0.0
    %1768 = vmatpush1.msra.mxu0 0.0
    %1769 = vmatprep.subr.mxu0 0.0
    %1770 = vmatpush1.msra.mxu0 0.0
    %1771 = vmatprep.subr.mxu0 0.0
    %1772 = vmatpush1.msra.mxu0 0.0
    %1773 = vmatprep.subr.mxu0 0.0
    %1774 = vmatpush1.msra.mxu0 0.0
    %1775 = vmatprep.subr.mxu0 0.0
    %1776 = vmatpush1.msra.mxu0 0.0
    %1777 = vmatprep.subr.mxu0 0.0
    %1778 = vmatpush1.msra.mxu0 0.0
    %1779 = vmatprep.subr.mxu0 0.0
    %1780 = vmatpush1.msra.mxu0 0.0
    %1781 = vmatprep.subr.mxu0 0.0
    %1782 = vmatpush1.msra.mxu0 0.0
    %1783 = vmatprep.subr.mxu0 0.0
    %1784 = vmatpush1.msra.mxu0 0.0
    %1785 = vmatprep.subr.mxu0 0.0
    %1786 = vmatpush1.msra.mxu0 0.0
    %1787 = vmatprep.subr.mxu0 0.0
    %1788 = vmatpush1.msra.mxu0 0.0
    %1789 = vmatprep.subr.mxu0 0.0
    %1790 = vmatpush1.msra.mxu0 0.0
    %1791 = vmatprep.subr.mxu0 0.0
    %1792 = vmatpush1.msra.mxu0 0.0
    %1793 = vmatprep.subr.mxu0 0.0
    %1794 = vmatpush1.msra.mxu0 0.0
    %1795 = vmatprep.subr.mxu0 0.0
    %1796 = vmatpush1.msra.mxu0 0.0
    %1797 = vmatprep.subr.mxu0 0.0
    %1798 = vmatpush1.msra.mxu0 0.0
    %1799 = vmatprep.subr.mxu0 0.0
    %1800 = vmatpush1.msra.mxu0 0.0
    %1801 = vmatprep.subr.mxu0 0.0
    %1802 = vmatpush1.msra.mxu0 0.0
    %1803 = vmatprep.subr.mxu0 0.0
    %1804 = vmatpush1.msra.mxu0 0.0
    %1805 = vmatprep.subr.mxu0 0.0
    %1806 = vmatpush1.msra.mxu0 0.0
    %1807 = vmatprep.subr.mxu0 0.0
    %1808 = vmatpush1.msra.mxu0 0.0
    %1809 = vmatprep.subr.mxu0 0.0
    %1810 = vmatpush1.msra.mxu0 0.0
    %1811 = vmatprep.subr.mxu0 0.0
    %1812 = vmatpush1.msra.mxu0 0.0
    %1813 = vmatprep.subr.mxu0 0.0
    %1814 = vmatpush1.msra.mxu0 0.0
    %1815 = vmatprep.mubr.f32.mxu0 0.0
    %1816 = vmatmul.mubr.f32.gmra.mrb[0].mxu0 %v1749
    %v1817 = vpop.f32.mrb[0].mxu0
    %v1818 = vadd.f32 %v421, %v1817
    %v1819 = vpop.f32.mrb[0].mxu0
    %1820 = vdwg.mxu0
    %1821 = vmax.xlane.f32.xlu0 %v1818
    %v1822 = vpop.xlane.xlu0 %1821
    %v1823 = vsub.f32 %v1818, %v1822
    %v1824 = vmul.f32 %v1823, 1.442695
    %v1825 = vpow.pop %v1824
    %1826 = vadd.xlane.f32.xlu0 %v1825
    %v1827 = vpop.xlane.xlu0 %1826
    %v1828 = vrcp.pop %v1827
    %v1829 = vmul.f32 %v1825, %v1828
    %s1830 = scalar_lea.vmem [#allocation14], 32
    %1831 = vst [vmem:[%s1830] sm:$0xff] %v1829
    %s1832 = scalar_lea.vmem [#allocation2], 40
    %v1833 = vld [vmem:[%s1832] sm:$0xff]
    %v1835 = vsel %vm154, %v1833, 0
    %1837 = vmatprep.subr.mxu0 0.0
    %1838 = vmatpush1.msra.mxu0 %v128
    %1839 = vmatprep.subr.mxu0 0.0
    %1840 = vmatpush1.msra.mxu0 %v129
    %1841 = vmatprep.subr.mxu0 0.0
    %1842 = vmatpush1.msra.mxu0 0.0
    %1843 = vmatprep.subr.mxu0 0.0
    %1844 = vmatpush1.msra.mxu0 0.0
    %1845 = vmatprep.subr.mxu0 0.0
    %1846 = vmatpush1.msra.mxu0 0.0
    %1847 = vmatprep.subr.mxu0 0.0
    %1848 = vmatpush1.msra.mxu0 0.0
    %1849 = vmatprep.subr.mxu0 0.0
    %1850 = vmatpush1.msra.mxu0 0.0
    %1851 = vmatprep.subr.mxu0 0.0
    %1852 = vmatpush1.msra.mxu0 0.0
    %1853 = vmatprep.subr.mxu0 0.0
    %1854 = vmatpush1.msra.mxu0 0.0
    %1855 = vmatprep.subr.mxu0 0.0
    %1856 = vmatpush1.msra.mxu0 0.0
    %1857 = vmatprep.subr.mxu0 0.0
    %1858 = vmatpush1.msra.mxu0 0.0
    %1859 = vmatprep.subr.mxu0 0.0
    %1860 = vmatpush1.msra.mxu0 0.0
    %1861 = vmatprep.subr.mxu0 0.0
    %1862 = vmatpush1.msra.mxu0 0.0
    %1863 = vmatprep.subr.mxu0 0.0
    %1864 = vmatpush1.msra.mxu0 0.0
    %1865 = vmatprep.subr.mxu0 0.0
    %1866 = vmatpush1.msra.mxu0 0.0
    %1867 = vmatprep.subr.mxu0 0.0
    %1868 = vmatpush1.msra.mxu0 0.0
    %1869 = vmatprep.subr.mxu0 0.0
    %1870 = vmatpush1.msra.mxu0 0.0
    %1871 = vmatprep.subr.mxu0 0.0
    %1872 = vmatpush1.msra.mxu0 0.0
    %1873 = vmatprep.subr.mxu0 0.0
    %1874 = vmatpush1.msra.mxu0 0.0
    %1875 = vmatprep.subr.mxu0 0.0
    %1876 = vmatpush1.msra.mxu0 0.0
    %1877 = vmatprep.subr.mxu0 0.0
    %1878 = vmatpush1.msra.mxu0 0.0
    %1879 = vmatprep.subr.mxu0 0.0
    %1880 = vmatpush1.msra.mxu0 0.0
    %1881 = vmatprep.subr.mxu0 0.0
    %1882 = vmatpush1.msra.mxu0 0.0
    %1883 = vmatprep.subr.mxu0 0.0
    %1884 = vmatpush1.msra.mxu0 0.0
    %1885 = vmatprep.subr.mxu0 0.0
    %1886 = vmatpush1.msra.mxu0 0.0
    %1887 = vmatprep.subr.mxu0 0.0
    %1888 = vmatpush1.msra.mxu0 0.0
    %1889 = vmatprep.subr.mxu0 0.0
    %1890 = vmatpush1.msra.mxu0 0.0
    %1891 = vmatprep.subr.mxu0 0.0
    %1892 = vmatpush1.msra.mxu0 0.0
    %1893 = vmatprep.subr.mxu0 0.0
    %1894 = vmatpush1.msra.mxu0 0.0
    %1895 = vmatprep.subr.mxu0 0.0
    %1896 = vmatpush1.msra.mxu0 0.0
    %1897 = vmatprep.subr.mxu0 0.0
    %1898 = vmatpush1.msra.mxu0 0.0
    %1899 = vmatprep.subr.mxu0 0.0
    %1900 = vmatpush1.msra.mxu0 0.0
    %1901 = vmatprep.mubr.f32.mxu0 0.0
    %1902 = vmatmul.mubr.f32.gmra.mrb[0].mxu0 %v1835
    %v1903 = vpop.f32.mrb[0].mxu0
    %v1904 = vadd.f32 %v152, %v1903
    %v1905 = vpop.f32.mrb[0].mxu0
    %1906 = vdwg.mxu0
    %v1907 = vmax.f32 %v1904, 0.0
    %v1909 = vsel %vm235, %v1907, 0
    %1911 = vmatprep.subr.mxu0 0.0
    %1912 = vmatpush1.msra.mxu0 %v131
    %1913 = vmatprep.subr.mxu0 0.0
    %1914 = vmatpush1.msra.mxu0 %v132
    %1915 = vmatprep.subr.mxu0 0.0
    %1916 = vmatpush1.msra.mxu0 %v133
    %1917 = vmatprep.subr.mxu0 0.0
    %1918 = vmatpush1.msra.mxu0 %v134
    %1919 = vmatprep.subr.mxu0 0.0
    %1920 = vmatpush1.msra.mxu0 0.0
    %1921 = vmatprep.subr.mxu0 0.0
    %1922 = vmatpush1.msra.mxu0 0.0
    %1923 = vmatprep.subr.mxu0 0.0
    %1924 = vmatpush1.msra.mxu0 0.0
    %1925 = vmatprep.subr.mxu0 0.0
    %1926 = vmatpush1.msra.mxu0 0.0
    %1927 = vmatprep.subr.mxu0 0.0
    %1928 = vmatpush1.msra.mxu0 0.0
    %1929 = vmatprep.subr.mxu0 0.0
    %1930 = vmatpush1.msra.mxu0 0.0
    %1931 = vmatprep.subr.mxu0 0.0
    %1932 = vmatpush1.msra.mxu0 0.0
    %1933 = vmatprep.subr.mxu0 0.0
    %1934 = vmatpush1.msra.mxu0 0.0
    %1935 = vmatprep.subr.mxu0 0.0
    %1936 = vmatpush1.msra.mxu0 0.0
    %1937 = vmatprep.subr.mxu0 0.0
    %1938 = vmatpush1.msra.mxu0 0.0
    %1939 = vmatprep.subr.mxu0 0.0
    %1940 = vmatpush1.msra.mxu0 0.0
    %1941 = vmatprep.subr.mxu0 0.0
    %1942 = vmatpush1.msra.mxu0 0.0
    %1943 = vmatprep.subr.mxu0 0.0
    %1944 = vmatpush1.msra.mxu0 0.0
    %1945 = vmatprep.subr.mxu0 0.0
    %1946 = vmatpush1.msra.mxu0 0.0
    %1947 = vmatprep.subr.mxu0 0.0
    %1948 = vmatpush1.msra.mxu0 0.0
    %1949 = vmatprep.subr.mxu0 0.0
    %1950 = vmatpush1.msra.mxu0 0.0
    %1951 = vmatprep.subr.mxu0 0.0
    %1952 = vmatpush1.msra.mxu0 0.0
    %1953 = vmatprep.subr.mxu0 0.0
    %1954 = vmatpush1.msra.mxu0 0.0
    %1955 = vmatprep.subr.mxu0 0.0
    %1956 = vmatpush1.msra.mxu0 0.0
    %1957 = vmatprep.subr.mxu0 0.0
    %1958 = vmatpush1.msra.mxu0 0.0
    %1959 = vmatprep.subr.mxu0 0.0
    %1960 = vmatpush1.msra.mxu0 0.0
    %1961 = vmatprep.subr.mxu0 0.0
    %1962 = vmatpush1.msra.mxu0 0.0
    %1963 = vmatprep.subr.mxu0 0.0
    %1964 = vmatpush1.msra.mxu0 0.0
    %1965 = vmatprep.subr.mxu0 0.0
    %1966 = vmatpush1.msra.mxu0 0.0
    %1967 = vmatprep.subr.mxu0 0.0
    %1968 = vmatpush1.msra.mxu0 0.0
    %1969 = vmatprep.subr.mxu0 0.0
    %1970 = vmatpush1.msra.mxu0 0.0
    %1971 = vmatprep.subr.mxu0 0.0
    %1972 = vmatpush1.msra.mxu0 0.0
    %1973 = vmatprep.subr.mxu0 0.0
    %1974 = vmatpush1.msra.mxu0 0.0
    %1975 = vmatprep.mubr.f32.mxu0 0.0
    %1976 = vmatmul.mubr.f32.gmra.mrb[0].mxu0 %v1909
    %v1977 = vpop.f32.mrb[0].mxu0
    %v1978 = vadd.f32 %v233, %v1977
    %v1979 = vpop.f32.mrb[0].mxu0
    %1980 = vdwg.mxu0
    %1981 = vmatprep.subr.mxu0 0.0
    %1982 = vmatpush1.msra.mxu0 %v136
    %1983 = vmatprep.subr.mxu0 0.0
    %1984 = vmatpush1.msra.mxu0 %v137
    %1985 = vmatprep.subr.mxu0 0.0
    %1986 = vmatpush1.msra.mxu0 %v138
    %1987 = vmatprep.subr.mxu0 0.0
    %1988 = vmatpush1.msra.mxu0 %v139
    %1989 = vmatprep.subr.mxu0 0.0
    %1990 = vmatpush1.msra.mxu0 0.0
    %1991 = vmatprep.subr.mxu0 0.0
    %1992 = vmatpush1.msra.mxu0 0.0
    %1993 = vmatprep.subr.mxu0 0.0
    %1994 = vmatpush1.msra.mxu0 0.0
    %1995 = vmatprep.subr.mxu0 0.0
    %1996 = vmatpush1.msra.mxu0 0.0
    %1997 = vmatprep.subr.mxu0 0.0
    %1998 = vmatpush1.msra.mxu0 0.0
    %1999 = vmatprep.subr.mxu0 0.0
    %2000 = vmatpush1.msra.mxu0 0.0
    %2001 = vmatprep.subr.mxu0 0.0
    %2002 = vmatpush1.msra.mxu0 0.0
    %2003 = vmatprep.subr.mxu0 0.0
    %2004 = vmatpush1.msra.mxu0 0.0
    %2005 = vmatprep.subr.mxu0 0.0
    %2006 = vmatpush1.msra.mxu0 0.0
    %2007 = vmatprep.subr.mxu0 0.0
    %2008 = vmatpush1.msra.mxu0 0.0
    %2009 = vmatprep.subr.mxu0 0.0
    %2010 = vmatpush1.msra.mxu0 0.0
    %2011 = vmatprep.subr.mxu0 0.0
    %2012 = vmatpush1.msra.mxu0 0.0
    %2013 = vmatprep.subr.mxu0 0.0
    %2014 = vmatpush1.msra.mxu0 0.0
    %2015 = vmatprep.subr.mxu0 0.0
    %2016 = vmatpush1.msra.mxu0 0.0
    %2017 = vmatprep.subr.mxu0 0.0
    %2018 = vmatpush1.msra.mxu0 0.0
    %2019 = vmatprep.subr.mxu0 0.0
    %2020 = vmatpush1.msra.mxu0 0.0
    %2021 = vmatprep.subr.mxu0 0.0
    %2022 = vmatpush1.msra.mxu0 0.0
    %2023 = vmatprep.subr.mxu0 0.0
    %2024 = vmatpush1.msra.mxu0 0.0
    %2025 = vmatprep.subr.mxu0 0.0
    %2026 = vmatpush1.msra.mxu0 0.0
    %2027 = vmatprep.subr.mxu0 0.0
    %2028 = vmatpush1.msra.mxu0 0.0
    %2029 = vmatprep.subr.mxu0 0.0
    %2030 = vmatpush1.msra.mxu0 0.0
    %2031 = vmatprep.subr.mxu0 0.0
    %2032 = vmatpush1.msra.mxu0 0.0
    %2033 = vmatprep.subr.mxu0 0.0
    %2034 = vmatpush1.msra.mxu0 0.0
    %2035 = vmatprep.subr.mxu0 0.0
    %2036 = vmatpush1.msra.mxu0 0.0
    %2037 = vmatprep.subr.mxu0 0.0
    %2038 = vmatpush1.msra.mxu0 0.0
    %2039 = vmatprep.subr.mxu0 0.0
    %2040 = vmatpush1.msra.mxu0 0.0
    %2041 = vmatprep.subr.mxu0 0.0
    %2042 = vmatpush1.msra.mxu0 0.0
    %2043 = vmatprep.subr.mxu0 0.0
    %2044 = vmatpush1.msra.mxu0 0.0
    %2045 = vmatprep.mubr.f32.mxu0 0.0
    %2046 = vmatmul.mubr.f32.gmra.mrb[0].mxu0 %v1749
    %v2047 = vpop.f32.mrb[0].mxu0
    %v2048 = vadd.f32 %v313, %v2047
    %v2049 = vpop.f32.mrb[0].mxu0
    %2050 = vdwg.mxu0
    %v2051 = vadd.f32 %v1978, %v2048
    %v2052 = vxor.u32 %v2051, 2147483648
    %v2053 = vmul.f32 %v2052, 1.442695
    %v2054 = vpow.pop %v2053
    %v2055 = vadd.f32 %v2054, 1.0
    %v2056 = vrcp.pop %v2055
    %v2057 = vmul.f32 1.0, %v2056
    %2059 = vrot.lane.b32.xlu0 %v2048, 64
    %v2060 = vpop.permute.xlu0 %2059
    %v2062 = vmul.f32 %v2057, %v2060
    %2064 = vrot.lane.b32.xlu0 %v2062, 64
    %v2065 = vpop.permute.xlu0 %2064
    %v2067 = vadd.f32 %v1978, %v2065
    %v2068 = vtanh.pop %v2067
    %v2069 = vsub.f32 1.0, %v2057
    %2071 = vrot.lane.b32.xlu0 %v2068, 96
    %v2072 = vpop.permute.xlu0 %2071
    %v2074 = vmul.f32 %v2069, %v2072
    %v2075 = vmul.f32 %v2057, %v1745
    %v2076 = vadd.f32 %v2074, %v2075
    %2078 = vrot.lane.b32.xlu0 %v2076, 96
    %v2079 = vpop.permute.xlu0 %2078
    %v2080 = vsel %vm235, %v2079, 0
    %2082 = vmatprep.subr.mxu0 0.0
    %2083 = vmatpush1.msra.mxu0 %v141
    %2084 = vmatprep.subr.mxu0 0.0
    %2085 = vmatpush1.msra.mxu0 %v142
    %2086 = vmatprep.subr.mxu0 0.0
    %2087 = vmatpush1.msra.mxu0 %v143
    %2088 = vmatprep.subr.mxu0 0.0
    %2089 = vmatpush1.msra.mxu0 %v144
    %2090 = vmatprep.subr.mxu0 0.0
    %2091 = vmatpush1.msra.mxu0 0.0
    %2092 = vmatprep.subr.mxu0 0.0
    %2093 = vmatpush1.msra.mxu0 0.0
    %2094 = vmatprep.subr.mxu0 0.0
    %2095 = vmatpush1.msra.mxu0 0.0
    %2096 = vmatprep.subr.mxu0 0.0
    %2097 = vmatpush1.msra.mxu0 0.0
    %2098 = vmatprep.subr.mxu0 0.0
    %2099 = vmatpush1.msra.mxu0 0.0
    %2100 = vmatprep.subr.mxu0 0.0
    %2101 = vmatpush1.msra.mxu0 0.0
    %2102 = vmatprep.subr.mxu0 0.0
    %2103 = vmatpush1.msra.mxu0 0.0
    %2104 = vmatprep.subr.mxu0 0.0
    %2105 = vmatpush1.msra.mxu0 0.0
    %2106 = vmatprep.subr.mxu0 0.0
    %2107 = vmatpush1.msra.mxu0 0.0
    %2108 = vmatprep.subr.mxu0 0.0
    %2109 = vmatpush1.msra.mxu0 0.0
    %2110 = vmatprep.subr.mxu0 0.0
    %2111 = vmatpush1.msra.mxu0 0.0
    %2112 = vmatprep.subr.mxu0 0.0
    %2113 = vmatpush1.msra.mxu0 0.0
    %2114 = vmatprep.subr.mxu0 0.0
    %2115 = vmatpush1.msra.mxu0 0.0
    %2116 = vmatprep.subr.mxu0 0.0
    %2117 = vmatpush1.msra.mxu0 0.0
    %2118 = vmatprep.subr.mxu0 0.0
    %2119 = vmatpush1.msra.mxu0 0.0
    %2120 = vmatprep.subr.mxu0 0.0
    %2121 = vmatpush1.msra.mxu0 0.0
    %2122 = vmatprep.subr.mxu0 0.0
    %2123 = vmatpush1.msra.mxu0 0.0
    %2124 = vmatprep.subr.mxu0 0.0
    %2125 = vmatpush1.msra.mxu0 0.0
    %2126 = vmatprep.subr.mxu0 0.0
    %2127 = vmatpush1.msra.mxu0 0.0
    %2128 = vmatprep.subr.mxu0 0.0
    %2129 = vmatpush1.msra.mxu0 0.0
    %2130 = vmatprep.subr.mxu0 0.0
    %2131 = vmatpush1.msra.mxu0 0.0
    %2132 = vmatprep.subr.mxu0 0.0
    %2133 = vmatpush1.msra.mxu0 0.0
    %2134 = vmatprep.subr.mxu0 0.0
    %2135 = vmatpush1.msra.mxu0 0.0
    %2136 = vmatprep.subr.mxu0 0.0
    %2137 = vmatpush1.msra.mxu0 0.0
    %2138 = vmatprep.subr.mxu0 0.0
    %2139 = vmatpush1.msra.mxu0 0.0
    %2140 = vmatprep.subr.mxu0 0.0
    %2141 = vmatpush1.msra.mxu0 0.0
    %2142 = vmatprep.subr.mxu0 0.0
    %2143 = vmatpush1.msra.mxu0 0.0
    %2144 = vmatprep.subr.mxu0 0.0
    %2145 = vmatpush1.msra.mxu0 0.0
    %2146 = vmatprep.mubr.f32.mxu0 0.0
    %2147 = vmatmul.mubr.f32.gmra.mrb[0].mxu0 %v2080
    %v2148 = vpop.f32.mrb[0].mxu0
    %v2149 = vadd.f32 %v421, %v2148
    %v2150 = vpop.f32.mrb[0].mxu0
    %2151 = vdwg.mxu0
    %2152 = vmax.xlane.f32.xlu0 %v2149
    %v2153 = vpop.xlane.xlu0 %2152
    %v2154 = vsub.f32 %v2149, %v2153
    %v2155 = vmul.f32 %v2154, 1.442695
    %v2156 = vpow.pop %v2155
    %2157 = vadd.xlane.f32.xlu0 %v2156
    %v2158 = vpop.xlane.xlu0 %2157
    %v2159 = vrcp.pop %v2158
    %v2160 = vmul.f32 %v2156, %v2159
    %s2161 = scalar_lea.vmem [#allocation14], 40
    %2162 = vst [vmem:[%s2161] sm:$0xff] %v2160
    %s2163 = scalar_lea.vmem [#allocation2], 48
    %v2164 = vld [vmem:[%s2163] sm:$0xff]
    %v2166 = vsel %vm154, %v2164, 0
    %2168 = vmatprep.subr.mxu0 0.0
    %2169 = vmatpush1.msra.mxu0 %v128
    %2170 = vmatprep.subr.mxu0 0.0
    %2171 = vmatpush1.msra.mxu0 %v129
    %2172 = vmatprep.subr.mxu0 0.0
    %2173 = vmatpush1.msra.mxu0 0.0
    %2174 = vmatprep.subr.mxu0 0.0
    %2175 = vmatpush1.msra.mxu0 0.0
    %2176 = vmatprep.subr.mxu0 0.0
    %2177 = vmatpush1.msra.mxu0 0.0
    %2178 = vmatprep.subr.mxu0 0.0
    %2179 = vmatpush1.msra.mxu0 0.0
    %2180 = vmatprep.subr.mxu0 0.0
    %2181 = vmatpush1.msra.mxu0 0.0
    %2182 = vmatprep.subr.mxu0 0.0
    %2183 = vmatpush1.msra.mxu0 0.0
    %2184 = vmatprep.subr.mxu0 0.0
    %2185 = vmatpush1.msra.mxu0 0.0
    %2186 = vmatprep.subr.mxu0 0.0
    %2187 = vmatpush1.msra.mxu0 0.0
    %2188 = vmatprep.subr.mxu0 0.0
    %2189 = vmatpush1.msra.mxu0 0.0
    %2190 = vmatprep.subr.mxu0 0.0
    %2191 = vmatpush1.msra.mxu0 0.0
    %2192 = vmatprep.subr.mxu0 0.0
    %2193 = vmatpush1.msra.mxu0 0.0
    %2194 = vmatprep.subr.mxu0 0.0
    %2195 = vmatpush1.msra.mxu0 0.0
    %2196 = vmatprep.subr.mxu0 0.0
    %2197 = vmatpush1.msra.mxu0 0.0
    %2198 = vmatprep.subr.mxu0 0.0
    %2199 = vmatpush1.msra.mxu0 0.0
    %2200 = vmatprep.subr.mxu0 0.0
    %2201 = vmatpush1.msra.mxu0 0.0
    %2202 = vmatprep.subr.mxu0 0.0
    %2203 = vmatpush1.msra.mxu0 0.0
    %2204 = vmatprep.subr.mxu0 0.0
    %2205 = vmatpush1.msra.mxu0 0.0
    %2206 = vmatprep.subr.mxu0 0.0
    %2207 = vmatpush1.msra.mxu0 0.0
    %2208 = vmatprep.subr.mxu0 0.0
    %2209 = vmatpush1.msra.mxu0 0.0
    %2210 = vmatprep.subr.mxu0 0.0
    %2211 = vmatpush1.msra.mxu0 0.0
    %2212 = vmatprep.subr.mxu0 0.0
    %2213 = vmatpush1.msra.mxu0 0.0
    %2214 = vmatprep.subr.mxu0 0.0
    %2215 = vmatpush1.msra.mxu0 0.0
    %2216 = vmatprep.subr.mxu0 0.0
    %2217 = vmatpush1.msra.mxu0 0.0
    %2218 = vmatprep.subr.mxu0 0.0
    %2219 = vmatpush1.msra.mxu0 0.0
    %2220 = vmatprep.subr.mxu0 0.0
    %2221 = vmatpush1.msra.mxu0 0.0
    %2222 = vmatprep.subr.mxu0 0.0
    %2223 = vmatpush1.msra.mxu0 0.0
    %2224 = vmatprep.subr.mxu0 0.0
    %2225 = vmatpush1.msra.mxu0 0.0
    %2226 = vmatprep.subr.mxu0 0.0
    %2227 = vmatpush1.msra.mxu0 0.0
    %2228 = vmatprep.subr.mxu0 0.0
    %2229 = vmatpush1.msra.mxu0 0.0
    %2230 = vmatprep.subr.mxu0 0.0
    %2231 = vmatpush1.msra.mxu0 0.0
    %2232 = vmatprep.mubr.f32.mxu0 0.0
    %2233 = vmatmul.mubr.f32.gmra.mrb[0].mxu0 %v2166
    %v2234 = vpop.f32.mrb[0].mxu0
    %v2235 = vadd.f32 %v152, %v2234
    %v2236 = vpop.f32.mrb[0].mxu0
    %2237 = vdwg.mxu0
    %v2238 = vmax.f32 %v2235, 0.0
    %v2240 = vsel %vm235, %v2238, 0
    %2242 = vmatprep.subr.mxu0 0.0
    %2243 = vmatpush1.msra.mxu0 %v131
    %2244 = vmatprep.subr.mxu0 0.0
    %2245 = vmatpush1.msra.mxu0 %v132
    %2246 = vmatprep.subr.mxu0 0.0
    %2247 = vmatpush1.msra.mxu0 %v133
    %2248 = vmatprep.subr.mxu0 0.0
    %2249 = vmatpush1.msra.mxu0 %v134
    %2250 = vmatprep.subr.mxu0 0.0
    %2251 = vmatpush1.msra.mxu0 0.0
    %2252 = vmatprep.subr.mxu0 0.0
    %2253 = vmatpush1.msra.mxu0 0.0
    %2254 = vmatprep.subr.mxu0 0.0
    %2255 = vmatpush1.msra.mxu0 0.0
    %2256 = vmatprep.subr.mxu0 0.0
    %2257 = vmatpush1.msra.mxu0 0.0
    %2258 = vmatprep.subr.mxu0 0.0
    %2259 = vmatpush1.msra.mxu0 0.0
    %2260 = vmatprep.subr.mxu0 0.0
    %2261 = vmatpush1.msra.mxu0 0.0
    %2262 = vmatprep.subr.mxu0 0.0
    %2263 = vmatpush1.msra.mxu0 0.0
    %2264 = vmatprep.subr.mxu0 0.0
    %2265 = vmatpush1.msra.mxu0 0.0
    %2266 = vmatprep.subr.mxu0 0.0
    %2267 = vmatpush1.msra.mxu0 0.0
    %2268 = vmatprep.subr.mxu0 0.0
    %2269 = vmatpush1.msra.mxu0 0.0
    %2270 = vmatprep.subr.mxu0 0.0
    %2271 = vmatpush1.msra.mxu0 0.0
    %2272 = vmatprep.subr.mxu0 0.0
    %2273 = vmatpush1.msra.mxu0 0.0
    %2274 = vmatprep.subr.mxu0 0.0
    %2275 = vmatpush1.msra.mxu0 0.0
    %2276 = vmatprep.subr.mxu0 0.0
    %2277 = vmatpush1.msra.mxu0 0.0
    %2278 = vmatprep.subr.mxu0 0.0
    %2279 = vmatpush1.msra.mxu0 0.0
    %2280 = vmatprep.subr.mxu0 0.0
    %2281 = vmatpush1.msra.mxu0 0.0
    %2282 = vmatprep.subr.mxu0 0.0
    %2283 = vmatpush1.msra.mxu0 0.0
    %2284 = vmatprep.subr.mxu0 0.0
    %2285 = vmatpush1.msra.mxu0 0.0
    %2286 = vmatprep.subr.mxu0 0.0
    %2287 = vmatpush1.msra.mxu0 0.0
    %2288 = vmatprep.subr.mxu0 0.0
    %2289 = vmatpush1.msra.mxu0 0.0
    %2290 = vmatprep.subr.mxu0 0.0
    %2291 = vmatpush1.msra.mxu0 0.0
    %2292 = vmatprep.subr.mxu0 0.0
    %2293 = vmatpush1.msra.mxu0 0.0
    %2294 = vmatprep.subr.mxu0 0.0
    %2295 = vmatpush1.msra.mxu0 0.0
    %2296 = vmatprep.subr.mxu0 0.0
    %2297 = vmatpush1.msra.mxu0 0.0
    %2298 = vmatprep.subr.mxu0 0.0
    %2299 = vmatpush1.msra.mxu0 0.0
    %2300 = vmatprep.subr.mxu0 0.0
    %2301 = vmatpush1.msra.mxu0 0.0
    %2302 = vmatprep.subr.mxu0 0.0
    %2303 = vmatpush1.msra.mxu0 0.0
    %2304 = vmatprep.subr.mxu0 0.0
    %2305 = vmatpush1.msra.mxu0 0.0
    %2306 = vmatprep.mubr.f32.mxu0 0.0
    %2307 = vmatmul.mubr.f32.gmra.mrb[0].mxu0 %v2240
    %v2308 = vpop.f32.mrb[0].mxu0
    %v2309 = vadd.f32 %v233, %v2308
    %v2310 = vpop.f32.mrb[0].mxu0
    %2311 = vdwg.mxu0
    %2312 = vmatprep.subr.mxu0 0.0
    %2313 = vmatpush1.msra.mxu0 %v136
    %2314 = vmatprep.subr.mxu0 0.0
    %2315 = vmatpush1.msra.mxu0 %v137
    %2316 = vmatprep.subr.mxu0 0.0
    %2317 = vmatpush1.msra.mxu0 %v138
    %2318 = vmatprep.subr.mxu0 0.0
    %2319 = vmatpush1.msra.mxu0 %v139
    %2320 = vmatprep.subr.mxu0 0.0
    %2321 = vmatpush1.msra.mxu0 0.0
    %2322 = vmatprep.subr.mxu0 0.0
    %2323 = vmatpush1.msra.mxu0 0.0
    %2324 = vmatprep.subr.mxu0 0.0
    %2325 = vmatpush1.msra.mxu0 0.0
    %2326 = vmatprep.subr.mxu0 0.0
    %2327 = vmatpush1.msra.mxu0 0.0
    %2328 = vmatprep.subr.mxu0 0.0
    %2329 = vmatpush1.msra.mxu0 0.0
    %2330 = vmatprep.subr.mxu0 0.0
    %2331 = vmatpush1.msra.mxu0 0.0
    %2332 = vmatprep.subr.mxu0 0.0
    %2333 = vmatpush1.msra.mxu0 0.0
    %2334 = vmatprep.subr.mxu0 0.0
    %2335 = vmatpush1.msra.mxu0 0.0
    %2336 = vmatprep.subr.mxu0 0.0
    %2337 = vmatpush1.msra.mxu0 0.0
    %2338 = vmatprep.subr.mxu0 0.0
    %2339 = vmatpush1.msra.mxu0 0.0
    %2340 = vmatprep.subr.mxu0 0.0
    %2341 = vmatpush1.msra.mxu0 0.0
    %2342 = vmatprep.subr.mxu0 0.0
    %2343 = vmatpush1.msra.mxu0 0.0
    %2344 = vmatprep.subr.mxu0 0.0
    %2345 = vmatpush1.msra.mxu0 0.0
    %2346 = vmatprep.subr.mxu0 0.0
    %2347 = vmatpush1.msra.mxu0 0.0
    %2348 = vmatprep.subr.mxu0 0.0
    %2349 = vmatpush1.msra.mxu0 0.0
    %2350 = vmatprep.subr.mxu0 0.0
    %2351 = vmatpush1.msra.mxu0 0.0
    %2352 = vmatprep.subr.mxu0 0.0
    %2353 = vmatpush1.msra.mxu0 0.0
    %2354 = vmatprep.subr.mxu0 0.0
    %2355 = vmatpush1.msra.mxu0 0.0
    %2356 = vmatprep.subr.mxu0 0.0
    %2357 = vmatpush1.msra.mxu0 0.0
    %2358 = vmatprep.subr.mxu0 0.0
    %2359 = vmatpush1.msra.mxu0 0.0
    %2360 = vmatprep.subr.mxu0 0.0
    %2361 = vmatpush1.msra.mxu0 0.0
    %2362 = vmatprep.subr.mxu0 0.0
    %2363 = vmatpush1.msra.mxu0 0.0
    %2364 = vmatprep.subr.mxu0 0.0
    %2365 = vmatpush1.msra.mxu0 0.0
    %2366 = vmatprep.subr.mxu0 0.0
    %2367 = vmatpush1.msra.mxu0 0.0
    %2368 = vmatprep.subr.mxu0 0.0
    %2369 = vmatpush1.msra.mxu0 0.0
    %2370 = vmatprep.subr.mxu0 0.0
    %2371 = vmatpush1.msra.mxu0 0.0
    %2372 = vmatprep.subr.mxu0 0.0
    %2373 = vmatpush1.msra.mxu0 0.0
    %2374 = vmatprep.subr.mxu0 0.0
    %2375 = vmatpush1.msra.mxu0 0.0
    %2376 = vmatprep.mubr.f32.mxu0 0.0
    %2377 = vmatmul.mubr.f32.gmra.mrb[0].mxu0 %v2080
    %v2378 = vpop.f32.mrb[0].mxu0
    %v2379 = vadd.f32 %v313, %v2378
    %v2380 = vpop.f32.mrb[0].mxu0
    %2381 = vdwg.mxu0
    %v2382 = vadd.f32 %v2309, %v2379
    %v2383 = vxor.u32 %v2382, 2147483648
    %v2384 = vmul.f32 %v2383, 1.442695
    %v2385 = vpow.pop %v2384
    %v2386 = vadd.f32 %v2385, 1.0
    %v2387 = vrcp.pop %v2386
    %v2388 = vmul.f32 1.0, %v2387
    %2390 = vrot.lane.b32.xlu0 %v2379, 64
    %v2391 = vpop.permute.xlu0 %2390
    %v2393 = vmul.f32 %v2388, %v2391
    %2395 = vrot.lane.b32.xlu0 %v2393, 64
    %v2396 = vpop.permute.xlu0 %2395
    %v2398 = vadd.f32 %v2309, %v2396
    %v2399 = vtanh.pop %v2398
    %v2400 = vsub.f32 1.0, %v2388
    %2402 = vrot.lane.b32.xlu0 %v2399, 96
    %v2403 = vpop.permute.xlu0 %2402
    %v2405 = vmul.f32 %v2400, %v2403
    %v2406 = vmul.f32 %v2388, %v2076
    %v2407 = vadd.f32 %v2405, %v2406
    %2409 = vrot.lane.b32.xlu0 %v2407, 96
    %v2410 = vpop.permute.xlu0 %2409
    %v2411 = vsel %vm235, %v2410, 0
    %2413 = vmatprep.subr.mxu0 0.0
    %2414 = vmatpush1.msra.mxu0 %v141
    %2415 = vmatprep.subr.mxu0 0.0
    %2416 = vmatpush1.msra.mxu0 %v142
    %2417 = vmatprep.subr.mxu0 0.0
    %2418 = vmatpush1.msra.mxu0 %v143
    %2419 = vmatprep.subr.mxu0 0.0
    %2420 = vmatpush1.msra.mxu0 %v144
    %2421 = vmatprep.subr.mxu0 0.0
    %2422 = vmatpush1.msra.mxu0 0.0
    %2423 = vmatprep.subr.mxu0 0.0
    %2424 = vmatpush1.msra.mxu0 0.0
    %2425 = vmatprep.subr.mxu0 0.0
    %2426 = vmatpush1.msra.mxu0 0.0
    %2427 = vmatprep.subr.mxu0 0.0
    %2428 = vmatpush1.msra.mxu0 0.0
    %2429 = vmatprep.subr.mxu0 0.0
    %2430 = vmatpush1.msra.mxu0 0.0
    %2431 = vmatprep.subr.mxu0 0.0
    %2432 = vmatpush1.msra.mxu0 0.0
    %2433 = vmatprep.subr.mxu0 0.0
    %2434 = vmatpush1.msra.mxu0 0.0
    %2435 = vmatprep.subr.mxu0 0.0
    %2436 = vmatpush1.msra.mxu0 0.0
    %2437 = vmatprep.subr.mxu0 0.0
    %2438 = vmatpush1.msra.mxu0 0.0
    %2439 = vmatprep.subr.mxu0 0.0
    %2440 = vmatpush1.msra.mxu0 0.0
    %2441 = vmatprep.subr.mxu0 0.0
    %2442 = vmatpush1.msra.mxu0 0.0
    %2443 = vmatprep.subr.mxu0 0.0
    %2444 = vmatpush1.msra.mxu0 0.0
    %2445 = vmatprep.subr.mxu0 0.0
    %2446 = vmatpush1.msra.mxu0 0.0
    %2447 = vmatprep.subr.mxu0 0.0
    %2448 = vmatpush1.msra.mxu0 0.0
    %2449 = vmatprep.subr.mxu0 0.0
    %2450 = vmatpush1.msra.mxu0 0.0
    %2451 = vmatprep.subr.mxu0 0.0
    %2452 = vmatpush1.msra.mxu0 0.0
    %2453 = vmatprep.subr.mxu0 0.0
    %2454 = vmatpush1.msra.mxu0 0.0
    %2455 = vmatprep.subr.mxu0 0.0
    %2456 = vmatpush1.msra.mxu0 0.0
    %2457 = vmatprep.subr.mxu0 0.0
    %2458 = vmatpush1.msra.mxu0 0.0
    %2459 = vmatprep.subr.mxu0 0.0
    %2460 = vmatpush1.msra.mxu0 0.0
    %2461 = vmatprep.subr.mxu0 0.0
    %2462 = vmatpush1.msra.mxu0 0.0
    %2463 = vmatprep.subr.mxu0 0.0
    %2464 = vmatpush1.msra.mxu0 0.0
    %2465 = vmatprep.subr.mxu0 0.0
    %2466 = vmatpush1.msra.mxu0 0.0
    %2467 = vmatprep.subr.mxu0 0.0
    %2468 = vmatpush1.msra.mxu0 0.0
    %2469 = vmatprep.subr.mxu0 0.0
    %2470 = vmatpush1.msra.mxu0 0.0
    %2471 = vmatprep.subr.mxu0 0.0
    %2472 = vmatpush1.msra.mxu0 0.0
    %2473 = vmatprep.subr.mxu0 0.0
    %2474 = vmatpush1.msra.mxu0 0.0
    %2475 = vmatprep.subr.mxu0 0.0
    %2476 = vmatpush1.msra.mxu0 0.0
    %2477 = vmatprep.mubr.f32.mxu0 0.0
    %2478 = vmatmul.mubr.f32.gmra.mrb[0].mxu0 %v2411
    %v2479 = vpop.f32.mrb[0].mxu0
    %v2480 = vadd.f32 %v421, %v2479
    %v2481 = vpop.f32.mrb[0].mxu0
    %2482 = vdwg.mxu0
    %2483 = vmax.xlane.f32.xlu0 %v2480
    %v2484 = vpop.xlane.xlu0 %2483
    %v2485 = vsub.f32 %v2480, %v2484
    %v2486 = vmul.f32 %v2485, 1.442695
    %v2487 = vpow.pop %v2486
    %2488 = vadd.xlane.f32.xlu0 %v2487
    %v2489 = vpop.xlane.xlu0 %2488
    %v2490 = vrcp.pop %v2489
    %v2491 = vmul.f32 %v2487, %v2490
    %s2492 = scalar_lea.vmem [#allocation14], 48
    %2493 = vst [vmem:[%s2492] sm:$0xff] %v2491
    %s2494 = scalar_lea.vmem [#allocation2], 56
    %v2495 = vld [vmem:[%s2494] sm:$0xff]
    %v2497 = vsel %vm154, %v2495, 0
    %2499 = vmatprep.subr.mxu0 0.0
    %2500 = vmatpush1.msra.mxu0 %v128
    %2501 = vmatprep.subr.mxu0 0.0
    %2502 = vmatpush1.msra.mxu0 %v129
    %2503 = vmatprep.subr.mxu0 0.0
    %2504 = vmatpush1.msra.mxu0 0.0
    %2505 = vmatprep.subr.mxu0 0.0
    %2506 = vmatpush1.msra.mxu0 0.0
    %2507 = vmatprep.subr.mxu0 0.0
    %2508 = vmatpush1.msra.mxu0 0.0
    %2509 = vmatprep.subr.mxu0 0.0
    %2510 = vmatpush1.msra.mxu0 0.0
    %2511 = vmatprep.subr.mxu0 0.0
    %2512 = vmatpush1.msra.mxu0 0.0
    %2513 = vmatprep.subr.mxu0 0.0
    %2514 = vmatpush1.msra.mxu0 0.0
    %2515 = vmatprep.subr.mxu0 0.0
    %2516 = vmatpush1.msra.mxu0 0.0
    %2517 = vmatprep.subr.mxu0 0.0
    %2518 = vmatpush1.msra.mxu0 0.0
    %2519 = vmatprep.subr.mxu0 0.0
    %2520 = vmatpush1.msra.mxu0 0.0
    %2521 = vmatprep.subr.mxu0 0.0
    %2522 = vmatpush1.msra.mxu0 0.0
    %2523 = vmatprep.subr.mxu0 0.0
    %2524 = vmatpush1.msra.mxu0 0.0
    %2525 = vmatprep.subr.mxu0 0.0
    %2526 = vmatpush1.msra.mxu0 0.0
    %2527 = vmatprep.subr.mxu0 0.0
    %2528 = vmatpush1.msra.mxu0 0.0
    %2529 = vmatprep.subr.mxu0 0.0
    %2530 = vmatpush1.msra.mxu0 0.0
    %2531 = vmatprep.subr.mxu0 0.0
    %2532 = vmatpush1.msra.mxu0 0.0
    %2533 = vmatprep.subr.mxu0 0.0
    %2534 = vmatpush1.msra.mxu0 0.0
    %2535 = vmatprep.subr.mxu0 0.0
    %2536 = vmatpush1.msra.mxu0 0.0
    %2537 = vmatprep.subr.mxu0 0.0
    %2538 = vmatpush1.msra.mxu0 0.0
    %2539 = vmatprep.subr.mxu0 0.0
    %2540 = vmatpush1.msra.mxu0 0.0
    %2541 = vmatprep.subr.mxu0 0.0
    %2542 = vmatpush1.msra.mxu0 0.0
    %2543 = vmatprep.subr.mxu0 0.0
    %2544 = vmatpush1.msra.mxu0 0.0
    %2545 = vmatprep.subr.mxu0 0.0
    %2546 = vmatpush1.msra.mxu0 0.0
    %2547 = vmatprep.subr.mxu0 0.0
    %2548 = vmatpush1.msra.mxu0 0.0
    %2549 = vmatprep.subr.mxu0 0.0
    %2550 = vmatpush1.msra.mxu0 0.0
    %2551 = vmatprep.subr.mxu0 0.0
    %2552 = vmatpush1.msra.mxu0 0.0
    %2553 = vmatprep.subr.mxu0 0.0
    %2554 = vmatpush1.msra.mxu0 0.0
    %2555 = vmatprep.subr.mxu0 0.0
    %2556 = vmatpush1.msra.mxu0 0.0
    %2557 = vmatprep.subr.mxu0 0.0
    %2558 = vmatpush1.msra.mxu0 0.0
    %2559 = vmatprep.subr.mxu0 0.0
    %2560 = vmatpush1.msra.mxu0 0.0
    %2561 = vmatprep.subr.mxu0 0.0
    %2562 = vmatpush1.msra.mxu0 0.0
    %2563 = vmatprep.mubr.f32.mxu0 0.0
    %2564 = vmatmul.mubr.f32.gmra.mrb[0].mxu0 %v2497
    %v2565 = vpop.f32.mrb[0].mxu0
    %v2566 = vadd.f32 %v152, %v2565
    %v2567 = vpop.f32.mrb[0].mxu0
    %2568 = vdwg.mxu0
    %v2569 = vmax.f32 %v2566, 0.0
    %v2571 = vsel %vm235, %v2569, 0
    %2573 = vmatprep.subr.mxu0 0.0
    %2574 = vmatpush1.msra.mxu0 %v131
    %2575 = vmatprep.subr.mxu0 0.0
    %2576 = vmatpush1.msra.mxu0 %v132
    %2577 = vmatprep.subr.mxu0 0.0
    %2578 = vmatpush1.msra.mxu0 %v133
    %2579 = vmatprep.subr.mxu0 0.0
    %2580 = vmatpush1.msra.mxu0 %v134
    %2581 = vmatprep.subr.mxu0 0.0
    %2582 = vmatpush1.msra.mxu0 0.0
    %2583 = vmatprep.subr.mxu0 0.0
    %2584 = vmatpush1.msra.mxu0 0.0
    %2585 = vmatprep.subr.mxu0 0.0
    %2586 = vmatpush1.msra.mxu0 0.0
    %2587 = vmatprep.subr.mxu0 0.0
    %2588 = vmatpush1.msra.mxu0 0.0
    %2589 = vmatprep.subr.mxu0 0.0
    %2590 = vmatpush1.msra.mxu0 0.0
    %2591 = vmatprep.subr.mxu0 0.0
    %2592 = vmatpush1.msra.mxu0 0.0
    %2593 = vmatprep.subr.mxu0 0.0
    %2594 = vmatpush1.msra.mxu0 0.0
    %2595 = vmatprep.subr.mxu0 0.0
    %2596 = vmatpush1.msra.mxu0 0.0
    %2597 = vmatprep.subr.mxu0 0.0
    %2598 = vmatpush1.msra.mxu0 0.0
    %2599 = vmatprep.subr.mxu0 0.0
    %2600 = vmatpush1.msra.mxu0 0.0
    %2601 = vmatprep.subr.mxu0 0.0
    %2602 = vmatpush1.msra.mxu0 0.0
    %2603 = vmatprep.subr.mxu0 0.0
    %2604 = vmatpush1.msra.mxu0 0.0
    %2605 = vmatprep.subr.mxu0 0.0
    %2606 = vmatpush1.msra.mxu0 0.0
    %2607 = vmatprep.subr.mxu0 0.0
    %2608 = vmatpush1.msra.mxu0 0.0
    %2609 = vmatprep.subr.mxu0 0.0
    %2610 = vmatpush1.msra.mxu0 0.0
    %2611 = vmatprep.subr.mxu0 0.0
    %2612 = vmatpush1.msra.mxu0 0.0
    %2613 = vmatprep.subr.mxu0 0.0
    %2614 = vmatpush1.msra.mxu0 0.0
    %2615 = vmatprep.subr.mxu0 0.0
    %2616 = vmatpush1.msra.mxu0 0.0
    %2617 = vmatprep.subr.mxu0 0.0
    %2618 = vmatpush1.msra.mxu0 0.0
    %2619 = vmatprep.subr.mxu0 0.0
    %2620 = vmatpush1.msra.mxu0 0.0
    %2621 = vmatprep.subr.mxu0 0.0
    %2622 = vmatpush1.msra.mxu0 0.0
    %2623 = vmatprep.subr.mxu0 0.0
    %2624 = vmatpush1.msra.mxu0 0.0
    %2625 = vmatprep.subr.mxu0 0.0
    %2626 = vmatpush1.msra.mxu0 0.0
    %2627 = vmatprep.subr.mxu0 0.0
    %2628 = vmatpush1.msra.mxu0 0.0
    %2629 = vmatprep.subr.mxu0 0.0
    %2630 = vmatpush1.msra.mxu0 0.0
    %2631 = vmatprep.subr.mxu0 0.0
    %2632 = vmatpush1.msra.mxu0 0.0
    %2633 = vmatprep.subr.mxu0 0.0
    %2634 = vmatpush1.msra.mxu0 0.0
    %2635 = vmatprep.subr.mxu0 0.0
    %2636 = vmatpush1.msra.mxu0 0.0
    %2637 = vmatprep.mubr.f32.mxu0 0.0
    %2638 = vmatmul.mubr.f32.gmra.mrb[0].mxu0 %v2571
    %v2639 = vpop.f32.mrb[0].mxu0
    %v2640 = vadd.f32 %v233, %v2639
    %v2641 = vpop.f32.mrb[0].mxu0
    %2642 = vdwg.mxu0
    %2643 = vmatprep.subr.mxu0 0.0
    %2644 = vmatpush1.msra.mxu0 %v136
    %2645 = vmatprep.subr.mxu0 0.0
    %2646 = vmatpush1.msra.mxu0 %v137
    %2647 = vmatprep.subr.mxu0 0.0
    %2648 = vmatpush1.msra.mxu0 %v138
    %2649 = vmatprep.subr.mxu0 0.0
    %2650 = vmatpush1.msra.mxu0 %v139
    %2651 = vmatprep.subr.mxu0 0.0
    %2652 = vmatpush1.msra.mxu0 0.0
    %2653 = vmatprep.subr.mxu0 0.0
    %2654 = vmatpush1.msra.mxu0 0.0
    %2655 = vmatprep.subr.mxu0 0.0
    %2656 = vmatpush1.msra.mxu0 0.0
    %2657 = vmatprep.subr.mxu0 0.0
    %2658 = vmatpush1.msra.mxu0 0.0
    %2659 = vmatprep.subr.mxu0 0.0
    %2660 = vmatpush1.msra.mxu0 0.0
    %2661 = vmatprep.subr.mxu0 0.0
    %2662 = vmatpush1.msra.mxu0 0.0
    %2663 = vmatprep.subr.mxu0 0.0
    %2664 = vmatpush1.msra.mxu0 0.0
    %2665 = vmatprep.subr.mxu0 0.0
    %2666 = vmatpush1.msra.mxu0 0.0
    %2667 = vmatprep.subr.mxu0 0.0
    %2668 = vmatpush1.msra.mxu0 0.0
    %2669 = vmatprep.subr.mxu0 0.0
    %2670 = vmatpush1.msra.mxu0 0.0
    %2671 = vmatprep.subr.mxu0 0.0
    %2672 = vmatpush1.msra.mxu0 0.0
    %2673 = vmatprep.subr.mxu0 0.0
    %2674 = vmatpush1.msra.mxu0 0.0
    %2675 = vmatprep.subr.mxu0 0.0
    %2676 = vmatpush1.msra.mxu0 0.0
    %2677 = vmatprep.subr.mxu0 0.0
    %2678 = vmatpush1.msra.mxu0 0.0
    %2679 = vmatprep.subr.mxu0 0.0
    %2680 = vmatpush1.msra.mxu0 0.0
    %2681 = vmatprep.subr.mxu0 0.0
    %2682 = vmatpush1.msra.mxu0 0.0
    %2683 = vmatprep.subr.mxu0 0.0
    %2684 = vmatpush1.msra.mxu0 0.0
    %2685 = vmatprep.subr.mxu0 0.0
    %2686 = vmatpush1.msra.mxu0 0.0
    %2687 = vmatprep.subr.mxu0 0.0
    %2688 = vmatpush1.msra.mxu0 0.0
    %2689 = vmatprep.subr.mxu0 0.0
    %2690 = vmatpush1.msra.mxu0 0.0
    %2691 = vmatprep.subr.mxu0 0.0
    %2692 = vmatpush1.msra.mxu0 0.0
    %2693 = vmatprep.subr.mxu0 0.0
    %2694 = vmatpush1.msra.mxu0 0.0
    %2695 = vmatprep.subr.mxu0 0.0
    %2696 = vmatpush1.msra.mxu0 0.0
    %2697 = vmatprep.subr.mxu0 0.0
    %2698 = vmatpush1.msra.mxu0 0.0
    %2699 = vmatprep.subr.mxu0 0.0
    %2700 = vmatpush1.msra.mxu0 0.0
    %2701 = vmatprep.subr.mxu0 0.0
    %2702 = vmatpush1.msra.mxu0 0.0
    %2703 = vmatprep.subr.mxu0 0.0
    %2704 = vmatpush1.msra.mxu0 0.0
    %2705 = vmatprep.subr.mxu0 0.0
    %2706 = vmatpush1.msra.mxu0 0.0
    %2707 = vmatprep.mubr.f32.mxu0 0.0
    %2708 = vmatmul.mubr.f32.gmra.mrb[0].mxu0 %v2411
    %v2709 = vpop.f32.mrb[0].mxu0
    %v2710 = vadd.f32 %v313, %v2709
    %v2711 = vpop.f32.mrb[0].mxu0
    %2712 = vdwg.mxu0
    %v2713 = vadd.f32 %v2640, %v2710
    %v2714 = vxor.u32 %v2713, 2147483648
    %v2715 = vmul.f32 %v2714, 1.442695
    %v2716 = vpow.pop %v2715
    %v2717 = vadd.f32 %v2716, 1.0
    %v2718 = vrcp.pop %v2717
    %v2719 = vmul.f32 1.0, %v2718
    %2721 = vrot.lane.b32.xlu0 %v2710, 64
    %v2722 = vpop.permute.xlu0 %2721
    %v2724 = vmul.f32 %v2719, %v2722
    %2726 = vrot.lane.b32.xlu0 %v2724, 64
    %v2727 = vpop.permute.xlu0 %2726
    %v2729 = vadd.f32 %v2640, %v2727
    %v2730 = vtanh.pop %v2729
    %v2731 = vsub.f32 1.0, %v2719
    %2733 = vrot.lane.b32.xlu0 %v2730, 96
    %v2734 = vpop.permute.xlu0 %2733
    %v2736 = vmul.f32 %v2731, %v2734
    %v2737 = vmul.f32 %v2719, %v2407
    %v2738 = vadd.f32 %v2736, %v2737
    %2740 = vrot.lane.b32.xlu0 %v2738, 96
    %v2741 = vpop.permute.xlu0 %2740
    %v2742 = vsel %vm235, %v2741, 0
    %2744 = vmatprep.subr.mxu0 0.0
    %2745 = vmatpush1.msra.mxu0 %v141
    %2746 = vmatprep.subr.mxu0 0.0
    %2747 = vmatpush1.msra.mxu0 %v142
    %2748 = vmatprep.subr.mxu0 0.0
    %2749 = vmatpush1.msra.mxu0 %v143
    %2750 = vmatprep.subr.mxu0 0.0
    %2751 = vmatpush1.msra.mxu0 %v144
    %2752 = vmatprep.subr.mxu0 0.0
    %2753 = vmatpush1.msra.mxu0 0.0
    %2754 = vmatprep.subr.mxu0 0.0
    %2755 = vmatpush1.msra.mxu0 0.0
    %2756 = vmatprep.subr.mxu0 0.0
    %2757 = vmatpush1.msra.mxu0 0.0
    %2758 = vmatprep.subr.mxu0 0.0
    %2759 = vmatpush1.msra.mxu0 0.0
    %2760 = vmatprep.subr.mxu0 0.0
    %2761 = vmatpush1.msra.mxu0 0.0
    %2762 = vmatprep.subr.mxu0 0.0
    %2763 = vmatpush1.msra.mxu0 0.0
    %2764 = vmatprep.subr.mxu0 0.0
    %2765 = vmatpush1.msra.mxu0 0.0
    %2766 = vmatprep.subr.mxu0 0.0
    %2767 = vmatpush1.msra.mxu0 0.0
    %2768 = vmatprep.subr.mxu0 0.0
    %2769 = vmatpush1.msra.mxu0 0.0
    %2770 = vmatprep.subr.mxu0 0.0
    %2771 = vmatpush1.msra.mxu0 0.0
    %2772 = vmatprep.subr.mxu0 0.0
    %2773 = vmatpush1.msra.mxu0 0.0
    %2774 = vmatprep.subr.mxu0 0.0
    %2775 = vmatpush1.msra.mxu0 0.0
    %2776 = vmatprep.subr.mxu0 0.0
    %2777 = vmatpush1.msra.mxu0 0.0
    %2778 = vmatprep.subr.mxu0 0.0
    %2779 = vmatpush1.msra.mxu0 0.0
    %2780 = vmatprep.subr.mxu0 0.0
    %2781 = vmatpush1.msra.mxu0 0.0
    %2782 = vmatprep.subr.mxu0 0.0
    %2783 = vmatpush1.msra.mxu0 0.0
    %2784 = vmatprep.subr.mxu0 0.0
    %2785 = vmatpush1.msra.mxu0 0.0
    %2786 = vmatprep.subr.mxu0 0.0
    %2787 = vmatpush1.msra.mxu0 0.0
    %2788 = vmatprep.subr.mxu0 0.0
    %2789 = vmatpush1.msra.mxu0 0.0
    %2790 = vmatprep.subr.mxu0 0.0
    %2791 = vmatpush1.msra.mxu0 0.0
    %2792 = vmatprep.subr.mxu0 0.0
    %2793 = vmatpush1.msra.mxu0 0.0
    %2794 = vmatprep.subr.mxu0 0.0
    %2795 = vmatpush1.msra.mxu0 0.0
    %2796 = vmatprep.subr.mxu0 0.0
    %2797 = vmatpush1.msra.mxu0 0.0
    %2798 = vmatprep.subr.mxu0 0.0
    %2799 = vmatpush1.msra.mxu0 0.0
    %2800 = vmatprep.subr.mxu0 0.0
    %2801 = vmatpush1.msra.mxu0 0.0
    %2802 = vmatprep.subr.mxu0 0.0
    %2803 = vmatpush1.msra.mxu0 0.0
    %2804 = vmatprep.subr.mxu0 0.0
    %2805 = vmatpush1.msra.mxu0 0.0
    %2806 = vmatprep.subr.mxu0 0.0
    %2807 = vmatpush1.msra.mxu0 0.0
    %2808 = vmatprep.mubr.f32.mxu0 0.0
    %2809 = vmatmul.mubr.f32.gmra.mrb[0].mxu0 %v2742
    %v2810 = vpop.f32.mrb[0].mxu0
    %v2811 = vadd.f32 %v421, %v2810
    %v2812 = vpop.f32.mrb[0].mxu0
    %2813 = vdwg.mxu0
    %2814 = vmax.xlane.f32.xlu0 %v2811
    %v2815 = vpop.xlane.xlu0 %2814
    %v2816 = vsub.f32 %v2811, %v2815
    %v2817 = vmul.f32 %v2816, 1.442695
    %v2818 = vpow.pop %v2817
    %2819 = vadd.xlane.f32.xlu0 %v2818
    %v2820 = vpop.xlane.xlu0 %2819
    %v2821 = vrcp.pop %v2820
    %v2822 = vmul.f32 %v2818, %v2821
    %s2823 = scalar_lea.vmem [#allocation14], 56
    %2824 = vst [vmem:[%s2823] sm:$0xff] %v2822
    %2826 = vst.msk [vmem:[#allocation15] sm:$0xff] %vm235, %v2741
    // Predicated region
    $region70: #{actor_rnn_forward_seq.1} parent=1 // pred_check
      _
    $region71: #{actor_rnn_forward_seq.1} parent=1 // pred_check_branch
      %2828 = sbr.rel (0) target = $region73
    $region72: #{actor_rnn_forward_seq.1} parent=1 // pred_region
      %s2830 = ssub.s32 1024, 1024
      %2831 = vsyncadd [#allocation4], %s2830
      %s2832 = sshll.u32 [#allocation14], 4
      %s2833 = int_to_ptr.vmem [resolvable:$true] %s2832
      %2838 = dma.vmem_to_hbm [thread:$0]  %s2833, 1024, %s10, [#allocation4], 128, 128, 8
    $region73: #{actor_rnn_forward_seq.1} parent=1 // pred_fallthru
      _
    // Predicated region
    $region74: #{actor_rnn_forward_seq.1} parent=1 // pred_check
      _
    $region75: #{actor_rnn_forward_seq.1} parent=1 // pred_check_branch
      %2840 = sbr.rel (0) target = $region77
    $region76: #{actor_rnn_forward_seq.1} parent=1 // pred_region
      %s2842 = ssub.s32 128, 128
      %2843 = vsyncadd [#allocation16], %s2842
      %s2845 = sshll.u32 [#allocation15], 4
      %s2846 = int_to_ptr.vmem [resolvable:$true] %s2845
      %2848 = dma.vmem_to_hbm [thread:$0]  %s2846, 128, %s11, [#allocation16]
    $region77: #{actor_rnn_forward_seq.1} parent=1 // pred_fallthru
      _
    // Predicated region
    $region78: #{actor_rnn_forward_seq.1} parent=1 // pred_check
      _
    $region79: #{actor_rnn_forward_seq.1} parent=1 // pred_check_branch
      %2850 = sbr.rel (0) target = $region81
    $region80: #{actor_rnn_forward_seq.1} parent=1 // pred_region
      %2851 = dma.done [#allocation4], 1024
    $region81: #{actor_rnn_forward_seq.1} parent=1 // pred_fallthru
      _
    // Predicated region
    $region82: #{actor_rnn_forward_seq.1} parent=1 // pred_check
      _
    $region83: #{actor_rnn_forward_seq.1} parent=1 // pred_check_branch
      %2853 = sbr.rel (0) target = $region85
    $region84: #{actor_rnn_forward_seq.1} parent=1 // pred_region
      %2854 = dma.done [#allocation16], 128
    $region85: #{actor_rnn_forward_seq.1} parent=1 // pred_fallthru
      _
    %2855 = vsyncpa [#allocation3], 1
    %2856 = vsyncpa [#allocation6], 1
    %2857 = vsyncpa [#allocation9], 1
    %2858 = vsyncpa [#allocation12], 1
    %2859 = vsyncpa [#allocation4], 1
    %2860 = vsyncpa [#allocation16], 1

</llo_original>
